<compile_context>
chip_gen: v5e
topology: v5e:2x2
jax: 0.10.0
libtpu: 0.0.40
codegen_flags: <defaults>
</compile_context>

<pallas_src>
import functools

import jax
import jax.numpy as jnp
from jax.experimental import pallas as pl
from jax.experimental.pallas import tpu as pltpu

# Safe on all generations (v5e default scoped limit is only 16 MiB; v7x physical
# VMEM is 64 MiB).  Raise (with a budget check) if tiles are enlarged further.
_VMEM_LIMIT_BYTES = 32 * 1024 * 1024


# ----------------------------------------------------------------------------
# Fused "half" kernel:
#   (optional BN-with-given-stats) + ReLU
#   -> zero spatial padding built in VMEM (padding applied after the activation)
#   -> depthwise KxK conv (VPU broadcast-MACs, f32 accumulation)
#   -> pointwise 1x1 conv (MXU matmul, f32)
#   -> per-image partial BN statistics (sum, sum of squares)
# One grid step == one batch element; the depthwise output never touches HBM.
# ----------------------------------------------------------------------------
def _half_kernel(x_ref, dw_ref, pw_ref, stats_ref, y_ref, ps_ref, zbuf, *,
                 K, stride, padding, has_prologue):
    _, H_in, W_in, C = x_ref.shape
    _, H_out, W_out, C_out = y_ref.shape

    x = x_ref[0]                                    # (H_in, W_in, C)

    if has_prologue:
        mean = stats_ref[0, :]
        invstd = stats_ref[1, :]
        a = jnp.maximum((x - mean) * invstd, 0.0)   # pseudoBN + ReLU
    else:
        a = jnp.maximum(x, 0.0)                     # plain ReLU (first half)

    # Spatial zero-padding ring built in VMEM (conv pads the *activated* input).
    zbuf[...] = jnp.zeros_like(zbuf)
    zbuf[padding:padding + H_in, padding:padding + W_in, :] = a
    z = zbuf[...]                                   # (H_in+2p, W_in+2p, C)

    # Depthwise KxK conv: K^2 broadcast MACs, f32 accumulation.
    w = dw_ref[...]
    acc = jnp.zeros((H_out, W_out, C), jnp.float32)
    for ki in range(K):
        for kj in range(K):
            patch = z[ki: ki + (H_out - 1) * stride + 1: stride,
                      kj: kj + (W_out - 1) * stride + 1: stride, :]
            acc = acc + patch * w[ki, kj, :]

    # Pointwise 1x1 conv on the MXU (M = H_out*W_out rows).
    y2d = jnp.dot(acc.reshape(H_out * W_out, C), pw_ref[...],
                  preferred_element_type=jnp.float32)

    y_ref[...] = y2d.reshape(1, H_out, W_out, C_out)
    # Single-pass partial BN statistics for this image.
    ps_ref[0, 0:1, :] = jnp.sum(y2d, axis=0, keepdims=True)
    ps_ref[0, 1:2, :] = jnp.sum(y2d * y2d, axis=0, keepdims=True)


def _fused_half(x, dw, pw, stats, *, K, stride, padding, has_prologue):
    """x: (N, H, W, C) true-channel NHWC activations (pre-activation values)."""
    N, H, W, C = x.shape
    C_out = pw.shape[1]
    Hp, Wp = H + 2 * padding, W + 2 * padding
    H_out = (Hp - K) // stride + 1
    W_out = (Wp - K) // stride + 1

    kernel = functools.partial(_half_kernel, K=K, stride=stride,
                               padding=padding, has_prologue=has_prologue)

    flops = N * H_out * W_out * C * 2 * (K * K + C_out)
    bytes_accessed = 4 * (N * H * W * C + N * H_out * W_out * C_out
                          + N * 2 * C_out + K * K * C + C * C_out + 2 * C)

    y, ps = pl.pallas_call(
        kernel,
        out_shape=(jax.ShapeDtypeStruct((N, H_out, W_out, C_out), jnp.float32),
                   jax.ShapeDtypeStruct((N, 2, C_out), jnp.float32)),
        grid=(N,),
        in_specs=[
            pl.BlockSpec((1, H, W, C), lambda n: (n, 0, 0, 0)),   # activations
            pl.BlockSpec((K, K, C), lambda n: (0, 0, 0)),         # depthwise weights
            pl.BlockSpec((C, C_out), lambda n: (0, 0)),           # pointwise weights
            pl.BlockSpec((2, C), lambda n: (0, 0)),               # prologue mean/invstd
        ],
        out_specs=(
            pl.BlockSpec((1, H_out, W_out, C_out), lambda n: (n, 0, 0, 0)),
            pl.BlockSpec((1, 2, C_out), lambda n: (n, 0, 0)),
        ),
        scratch_shapes=[pltpu.VMEM((Hp, Wp, C), jnp.float32)],
        compiler_params=pltpu.CompilerParams(
            dimension_semantics=("parallel",),
            vmem_limit_bytes=_VMEM_LIMIT_BYTES),
        cost_estimate=pl.CostEstimate(flops=flops, transcendentals=0,
                                      bytes_accessed=bytes_accessed),
    )(x, dw, pw, stats)
    return y, ps


# ----------------------------------------------------------------------------
# Final pseudoBatchNorm normalize (in place via input/output aliasing).
# ----------------------------------------------------------------------------
def _bn_kernel(y_ref, stats_ref, o_ref):
    mean = stats_ref[0, :]
    invstd = stats_ref[1, :]
    o_ref[...] = (y_ref[...] - mean) * invstd


def _apply_bn(y, stats):
    N, H, W, C = y.shape
    return pl.pallas_call(
        _bn_kernel,
        out_shape=jax.ShapeDtypeStruct((N, H, W, C), jnp.float32),
        grid=(N,),
        in_specs=[pl.BlockSpec((1, H, W, C), lambda n: (n, 0, 0, 0)),
                  pl.BlockSpec((2, C), lambda n: (0, 0))],
        out_specs=pl.BlockSpec((1, H, W, C), lambda n: (n, 0, 0, 0)),
        input_output_aliases={0: 0},
        compiler_params=pltpu.CompilerParams(
            dimension_semantics=("parallel",),
            vmem_limit_bytes=_VMEM_LIMIT_BYTES),
        cost_estimate=pl.CostEstimate(flops=2 * N * H * W * C, transcendentals=0,
                                      bytes_accessed=8 * N * H * W * C + 8 * C),
    )(y, stats)


def _finalize_stats(ps, count, eps):
    """ps: (N, 2, C) per-image [sum, sumsq] -> (2, C) [mean, invstd]."""
    s = jnp.sum(ps[:, 0, :], axis=0)
    sq = jnp.sum(ps[:, 1, :], axis=0)
    mean = s / count
    var = jnp.maximum(sq / count - mean * mean, 0.0)   # biased variance
    invstd = jax.lax.rsqrt(var + eps)
    return jnp.stack([mean, invstd], axis=0)


# ----------------------------------------------------------------------------
# SepConv forward
# ----------------------------------------------------------------------------
def sep_conv_forward(x_nchw, params, *, kernel_size, stride, padding, eps=1e-5):
    dw1, pw1, dw2, pw2 = params
    K = kernel_size
    N, C_in, H, W = x_nchw.shape

    # NCHW -> NHWC at true channel count (no 128-lane padding of HBM tensors).
    x = jnp.transpose(x_nchw, (0, 2, 3, 1)).astype(jnp.float32)

    # Placeholder stats for the first half (prologue statically disabled).
    ident = jnp.stack([jnp.zeros((C_in,), jnp.float32),
                       jnp.ones((C_in,), jnp.float32)], axis=0)

    # ---- half 1: ReLU -> depthwise conv (stride) -> 1x1 conv -> BN stats ----
    y1, ps1 = _fused_half(x, dw1, pw1, ident, K=K, stride=stride,
                          padding=padding, has_prologue=False)
    N1, H1, W1, _ = y1.shape
    stats1 = _finalize_stats(ps1, N1 * H1 * W1, eps)

    # ---- half 2: BN + ReLU (fused prologue) -> depthwise (stride 1) -> 1x1 -> stats
    y2, ps2 = _fused_half(y1, dw2, pw2, stats1, K=K, stride=1,
                          padding=padding, has_prologue=True)
    N2, H2, W2, _ = y2.shape
    stats2 = _finalize_stats(ps2, N2 * H2 * W2, eps)

    out = _apply_bn(y2, stats2)                 # NHWC, already true C_out
    return jnp.transpose(out, (0, 3, 1, 2))     # NHWC -> NCHW


def init_params(key, C_in, C_out, kernel_size):
    k1, k2, k3, k4 = jax.random.split(key, 4)
    scale = 0.1
    # depthwise weights: PyTorch (C, 1, K, K) -> stored here as (K, K, C)
    dw1 = scale * jax.random.normal(k1, (kernel_size, kernel_size, C_in), jnp.float32)
    dw2 = scale * jax.random.normal(k3, (kernel_size, kernel_size, C_in), jnp.float32)
    # pointwise weights: PyTorch (C_out, C_in, 1, 1) -> stored here as (C_in, C_out)
    pw1 = scale * jax.random.normal(k2, (C_in, C_in), jnp.float32)
    pw2 = scale * jax.random.normal(k4, (C_in, C_out), jnp.float32)
    return dw1, pw1, dw2, pw2


# ----------------------------------------------------------------------------
# Pure-JAX reference (for in-script correctness check).
# ----------------------------------------------------------------------------
def _reference(x_nchw, params, K, stride, padding, eps=1e-5):
    dw1, pw1, dw2, pw2 = params
    hp = jax.lax.Precision.HIGHEST

    def dw_conv(z, w, s):
        return jax.lax.conv_general_dilated(
            z, w.reshape(K, K, 1, -1), window_strides=(s, s),
            padding=[(padding, padding), (padding, padding)],
            dimension_numbers=("NHWC", "HWIO", "NHWC"),
            feature_group_count=z.shape[-1], precision=hp)

    def pw_conv(z, w):
        return jnp.einsum("nhwc,cd->nhwd", z, w, precision=hp)

    def bn(z):
        m = jnp.mean(z, axis=(0, 1, 2), keepdims=True)
        v = jnp.mean((z - m) ** 2, axis=(0, 1, 2), keepdims=True)
        return (z - m) * jax.lax.rsqrt(v + eps)

    z = jnp.transpose(x_nchw, (0, 2, 3, 1))
    z = jnp.maximum(z, 0.0)
    z = bn(pw_conv(dw_conv(z, dw1, stride), pw1))
    z = jnp.maximum(z, 0.0)
    z = bn(pw_conv(dw_conv(z, dw2, 1), pw2))
    return jnp.transpose(z, (0, 3, 1, 2))


if __name__ == "__main__":
    N, C_in, C_out, H, W = 2, 8, 8, 16, 16
    kernel_size, stride, padding = 3, 1, 1

    key = jax.random.PRNGKey(0)
    kx, kp = jax.random.split(key)
    x = jax.random.normal(kx, (N, C_in, H, W), jnp.float32)   # NCHW, PyTorch convention
    params = init_params(kp, C_in, C_out, kernel_size)

    fwd = jax.jit(functools.partial(
        sep_conv_forward, kernel_size=kernel_size, stride=stride, padding=padding))
    out = fwd(x, params)
    jax.block_until_ready(out)

    H1 = (H + 2 * padding - kernel_size) // stride + 1
    W1 = (W + 2 * padding - kernel_size) // stride + 1
    H2 = H1 + 2 * padding - kernel_size + 1
    W2 = W1 + 2 * padding - kernel_size + 1
    assert out.shape == (N, C_out, H2, W2), out.shape
    assert bool(jnp.all(jnp.isfinite(out)))

    ref = _reference(x, params, kernel_size, stride, padding)
    err = float(jnp.max(jnp.abs(out - ref)))
    assert err < 1e-2, f"max abs error vs reference: {err}"
    print("KERNEL_OK")
</pallas_src>

<mosaic_0001>
module attributes {stable_mosaic.version = 11 : i64} {
  func.func @_half_kernel(%arg0: i32, %arg1: memref<1x16x16x8xf32, #tpu.memory_space<vmem>>, %arg2: memref<3x3x8xf32, #tpu.memory_space<vmem>>, %arg3: memref<8x8xf32, #tpu.memory_space<vmem>>, %arg4: memref<2x8xf32, #tpu.memory_space<vmem>>, %arg5: memref<1x16x16x8xf32, #tpu.memory_space<vmem>>, %arg6: memref<1x2x8xf32, #tpu.memory_space<vmem>>, %arg7: memref<18x18x8xf32, #tpu.memory_space<vmem>>) attributes {dimension_semantics = [#tpu.dimension_semantics<parallel>], iteration_bounds = array<i64: 2>, scalar_prefetch = 0 : i64, scratch_operands = 1 : i64, tpu.core_type = #tpu.core_type<tc>, window_params = [{transform_indices = @transform_0, window_bounds = array<i64: 1, 16, 16, 8>}, {pipeline_mode = #tpu.pipeline_mode<synchronous>, transform_indices = @transform_1, window_bounds = array<i64: 3, 3, 8>}, {pipeline_mode = #tpu.pipeline_mode<synchronous>, transform_indices = @transform_2, window_bounds = array<i64: 8, 8>}, {pipeline_mode = #tpu.pipeline_mode<synchronous>, transform_indices = @transform_3, window_bounds = array<i64: 2, 8>}, {transform_indices = @transform_4, window_bounds = array<i64: 1, 16, 16, 8>}, {transform_indices = @transform_5, window_bounds = array<i64: 1, 2, 8>}]} {
    %c0 = arith.constant 0 : index
    %c0_0 = arith.constant 0 : index
    %c0_1 = arith.constant 0 : index
    %c0_2 = arith.constant 0 : index
    %0 = vector.load %arg1[%c0, %c0_0, %c0_1, %c0_2] : memref<1x16x16x8xf32, #tpu.memory_space<vmem>>, vector<1x16x16x8xf32>
    %1 = vector.shape_cast %0 : vector<1x16x16x8xf32> to vector<16x16x8xf32>
    %cst = arith.constant 0.000000e+00 : f32
    %2 = vector.broadcast %cst : f32 to vector<16x16x8xf32>
    %3 = arith.maximumf %1, %2 : vector<16x16x8xf32>
    %cst_3 = arith.constant 0.000000e+00 : f32
    %4 = vector.broadcast %cst_3 : f32 to vector<18x18x8xf32>
    %c0_4 = arith.constant 0 : index
    %c0_5 = arith.constant 0 : index
    %c0_6 = arith.constant 0 : index
    %5 = vector.load %arg7[%c0_4, %c0_5, %c0_6] : memref<18x18x8xf32, #tpu.memory_space<vmem>>, vector<18x18x8xf32>
    tpu.vector_store %arg7[%c0_4, %c0_5, %c0_6], %4 {strides = array<i32>} : memref<18x18x8xf32, #tpu.memory_space<vmem>>, vector<18x18x8xf32>,
    %c1 = arith.constant 1 : index
    %c1_7 = arith.constant 1 : index
    %c0_8 = arith.constant 0 : index
    %6 = vector.load %arg7[%c1, %c1_7, %c0_8] : memref<18x18x8xf32, #tpu.memory_space<vmem>>, vector<16x16x8xf32>
    tpu.vector_store %arg7[%c1, %c1_7, %c0_8], %3 {strides = array<i32>} : memref<18x18x8xf32, #tpu.memory_space<vmem>>, vector<16x16x8xf32>,
    %c0_9 = arith.constant 0 : index
    %c0_10 = arith.constant 0 : index
    %c0_11 = arith.constant 0 : index
    %7 = vector.load %arg7[%c0_9, %c0_10, %c0_11] : memref<18x18x8xf32, #tpu.memory_space<vmem>>, vector<18x18x8xf32>
    %c0_12 = arith.constant 0 : index
    %c0_13 = arith.constant 0 : index
    %c0_14 = arith.constant 0 : index
    %8 = vector.load %arg2[%c0_12, %c0_13, %c0_14] : memref<3x3x8xf32, #tpu.memory_space<vmem>>, vector<3x3x8xf32>
    %cst_15 = arith.constant 0.000000e+00 : f32
    %9 = vector.broadcast %cst_15 : f32 to vector<16x16x8xf32>
    %10 = vector.extract_strided_slice %7 {offsets = [0, 0, 0], sizes = [16, 16, 8], strides = [1, 1, 1]} : vector<18x18x8xf32> to vector<16x16x8xf32>
    %11 = vector.extract_strided_slice %8 {offsets = [0, 0, 0], sizes = [1, 1, 8], strides = [1, 1, 1]} : vector<3x3x8xf32> to vector<1x1x8xf32>
    %12 = vector.shape_cast %11 : vector<1x1x8xf32> to vector<8xf32>
    %13 = vector.shape_cast %12 : vector<8xf32> to vector<1x1x8xf32>
    %14 = vector.broadcast %13 : vector<1x1x8xf32> to vector<16x16x8xf32>
    %15 = arith.mulf %10, %14 : vector<16x16x8xf32>
    %16 = arith.addf %9, %15 : vector<16x16x8xf32>
    %17 = vector.extract_strided_slice %7 {offsets = [0, 1, 0], sizes = [16, 16, 8], strides = [1, 1, 1]} : vector<18x18x8xf32> to vector<16x16x8xf32>
    %18 = vector.extract_strided_slice %8 {offsets = [0, 1, 0], sizes = [1, 1, 8], strides = [1, 1, 1]} : vector<3x3x8xf32> to vector<1x1x8xf32>
    %19 = vector.shape_cast %18 : vector<1x1x8xf32> to vector<8xf32>
    %20 = vector.shape_cast %19 : vector<8xf32> to vector<1x1x8xf32>
    %21 = vector.broadcast %20 : vector<1x1x8xf32> to vector<16x16x8xf32>
    %22 = arith.mulf %17, %21 : vector<16x16x8xf32>
    %23 = arith.addf %16, %22 : vector<16x16x8xf32>
    %24 = vector.extract_strided_slice %7 {offsets = [0, 2, 0], sizes = [16, 16, 8], strides = [1, 1, 1]} : vector<18x18x8xf32> to vector<16x16x8xf32>
    %25 = vector.extract_strided_slice %8 {offsets = [0, 2, 0], sizes = [1, 1, 8], strides = [1, 1, 1]} : vector<3x3x8xf32> to vector<1x1x8xf32>
    %26 = vector.shape_cast %25 : vector<1x1x8xf32> to vector<8xf32>
    %27 = vector.shape_cast %26 : vector<8xf32> to vector<1x1x8xf32>
    %28 = vector.broadcast %27 : vector<1x1x8xf32> to vector<16x16x8xf32>
    %29 = arith.mulf %24, %28 : vector<16x16x8xf32>
    %30 = arith.addf %23, %29 : vector<16x16x8xf32>
    %31 = vector.extract_strided_slice %7 {offsets = [1, 0, 0], sizes = [16, 16, 8], strides = [1, 1, 1]} : vector<18x18x8xf32> to vector<16x16x8xf32>
    %32 = vector.extract_strided_slice %8 {offsets = [1, 0, 0], sizes = [1, 1, 8], strides = [1, 1, 1]} : vector<3x3x8xf32> to vector<1x1x8xf32>
    %33 = vector.shape_cast %32 : vector<1x1x8xf32> to vector<8xf32>
    %34 = vector.shape_cast %33 : vector<8xf32> to vector<1x1x8xf32>
    %35 = vector.broadcast %34 : vector<1x1x8xf32> to vector<16x16x8xf32>
    %36 = arith.mulf %31, %35 : vector<16x16x8xf32>
    %37 = arith.addf %30, %36 : vector<16x16x8xf32>
    %38 = vector.extract_strided_slice %7 {offsets = [1, 1, 0], sizes = [16, 16, 8], strides = [1, 1, 1]} : vector<18x18x8xf32> to vector<16x16x8xf32>
    %39 = vector.extract_strided_slice %8 {offsets = [1, 1, 0], sizes = [1, 1, 8], strides = [1, 1, 1]} : vector<3x3x8xf32> to vector<1x1x8xf32>
    %40 = vector.shape_cast %39 : vector<1x1x8xf32> to vector<8xf32>
    %41 = vector.shape_cast %40 : vector<8xf32> to vector<1x1x8xf32>
    %42 = vector.broadcast %41 : vector<1x1x8xf32> to vector<16x16x8xf32>
    %43 = arith.mulf %38, %42 : vector<16x16x8xf32>
    %44 = arith.addf %37, %43 : vector<16x16x8xf32>
    %45 = vector.extract_strided_slice %7 {offsets = [1, 2, 0], sizes = [16, 16, 8], strides = [1, 1, 1]} : vector<18x18x8xf32> to vector<16x16x8xf32>
    %46 = vector.extract_strided_slice %8 {offsets = [1, 2, 0], sizes = [1, 1, 8], strides = [1, 1, 1]} : vector<3x3x8xf32> to vector<1x1x8xf32>
    %47 = vector.shape_cast %46 : vector<1x1x8xf32> to vector<8xf32>
    %48 = vector.shape_cast %47 : vector<8xf32> to vector<1x1x8xf32>
    %49 = vector.broadcast %48 : vector<1x1x8xf32> to vector<16x16x8xf32>
    %50 = arith.mulf %45, %49 : vector<16x16x8xf32>
    %51 = arith.addf %44, %50 : vector<16x16x8xf32>
    %52 = vector.extract_strided_slice %7 {offsets = [2, 0, 0], sizes = [16, 16, 8], strides = [1, 1, 1]} : vector<18x18x8xf32> to vector<16x16x8xf32>
    %53 = vector.extract_strided_slice %8 {offsets = [2, 0, 0], sizes = [1, 1, 8], strides = [1, 1, 1]} : vector<3x3x8xf32> to vector<1x1x8xf32>
    %54 = vector.shape_cast %53 : vector<1x1x8xf32> to vector<8xf32>
    %55 = vector.shape_cast %54 : vector<8xf32> to vector<1x1x8xf32>
    %56 = vector.broadcast %55 : vector<1x1x8xf32> to vector<16x16x8xf32>
    %57 = arith.mulf %52, %56 : vector<16x16x8xf32>
    %58 = arith.addf %51, %57 : vector<16x16x8xf32>
    %59 = vector.extract_strided_slice %7 {offsets = [2, 1, 0], sizes = [16, 16, 8], strides = [1, 1, 1]} : vector<18x18x8xf32> to vector<16x16x8xf32>
    %60 = vector.extract_strided_slice %8 {offsets = [2, 1, 0], sizes = [1, 1, 8], strides = [1, 1, 1]} : vector<3x3x8xf32> to vector<1x1x8xf32>
    %61 = vector.shape_cast %60 : vector<1x1x8xf32> to vector<8xf32>
    %62 = vector.shape_cast %61 : vector<8xf32> to vector<1x1x8xf32>
    %63 = vector.broadcast %62 : vector<1x1x8xf32> to vector<16x16x8xf32>
    %64 = arith.mulf %59, %63 : vector<16x16x8xf32>
    %65 = arith.addf %58, %64 : vector<16x16x8xf32>
    %66 = vector.extract_strided_slice %7 {offsets = [2, 2, 0], sizes = [16, 16, 8], strides = [1, 1, 1]} : vector<18x18x8xf32> to vector<16x16x8xf32>
    %67 = vector.extract_strided_slice %8 {offsets = [2, 2, 0], sizes = [1, 1, 8], strides = [1, 1, 1]} : vector<3x3x8xf32> to vector<1x1x8xf32>
    %68 = vector.shape_cast %67 : vector<1x1x8xf32> to vector<8xf32>
    %69 = vector.shape_cast %68 : vector<8xf32> to vector<1x1x8xf32>
    %70 = vector.broadcast %69 : vector<1x1x8xf32> to vector<16x16x8xf32>
    %71 = arith.mulf %66, %70 : vector<16x16x8xf32>
    %72 = arith.addf %65, %71 : vector<16x16x8xf32>
    %73 = vector.shape_cast %72 : vector<16x16x8xf32> to vector<256x8xf32>
    %c0_16 = arith.constant 0 : index
    %c0_17 = arith.constant 0 : index
    %74 = vector.load %arg3[%c0_16, %c0_17] : memref<8x8xf32, #tpu.memory_space<vmem>>, vector<8x8xf32>
    %cst_18 = arith.constant dense<0.000000e+00> : vector<256x8xf32>
    %75 = tpu.matmul %73, %74, %cst_18 {dimension_numbers = #tpu.dot_dimension_numbers<[1], [0], [0], [1], [0, 0, 1, 1], [], []>} : vector<256x8xf32>, vector<8x8xf32>, vector<256x8xf32> -> vector<256x8xf32>
    %76 = vector.shape_cast %75 : vector<256x8xf32> to vector<1x16x16x8xf32>
    %c0_19 = arith.constant 0 : index
    %c0_20 = arith.constant 0 : index
    %c0_21 = arith.constant 0 : index
    %c0_22 = arith.constant 0 : index
    %77 = vector.load %arg5[%c0_19, %c0_20, %c0_21, %c0_22] : memref<1x16x16x8xf32, #tpu.memory_space<vmem>>, vector<1x16x16x8xf32>
    tpu.vector_store %arg5[%c0_19, %c0_20, %c0_21, %c0_22], %76 {strides = array<i32>} : memref<1x16x16x8xf32, #tpu.memory_space<vmem>>, vector<1x16x16x8xf32>,
    %cst_23 = arith.constant dense<0.000000e+00> : vector<8xf32>
    %78 = vector.multi_reduction <add>, %75, %cst_23 [0] : vector<256x8xf32> to vector<8xf32>
    %79 = vector.shape_cast %78 : vector<8xf32> to vector<1x8xf32>
    %c0_24 = arith.constant 0 : index
    %c0_25 = arith.constant 0 : index
    %c0_26 = arith.constant 0 : index
    %80 = vector.load %arg6[%c0_24, %c0_25, %c0_26] : memref<1x2x8xf32, #tpu.memory_space<vmem>>, vector<1x1x8xf32>
    %81 = vector.shape_cast %80 : vector<1x1x8xf32> to vector<1x8xf32>
    %82 = vector.shape_cast %79 : vector<1x8xf32> to vector<1x1x8xf32>
    tpu.vector_store %arg6[%c0_24, %c0_25, %c0_26], %82 {strides = array<i32>} : memref<1x2x8xf32, #tpu.memory_space<vmem>>, vector<1x1x8xf32>,
    %83 = arith.mulf %75, %75 : vector<256x8xf32>
    %cst_27 = arith.constant dense<0.000000e+00> : vector<8xf32>
    %84 = vector.multi_reduction <add>, %83, %cst_27 [0] : vector<256x8xf32> to vector<8xf32>
    %85 = vector.shape_cast %84 : vector<8xf32> to vector<1x8xf32>
    %c0_28 = arith.constant 0 : index
    %c1_29 = arith.constant 1 : index
    %c0_30 = arith.constant 0 : index
    %86 = vector.load %arg6[%c0_28, %c1_29, %c0_30] : memref<1x2x8xf32, #tpu.memory_space<vmem>>, vector<1x1x8xf32>
    %87 = vector.shape_cast %86 : vector<1x1x8xf32> to vector<1x8xf32>
    %88 = vector.shape_cast %85 : vector<1x8xf32> to vector<1x1x8xf32>
    tpu.vector_store %arg6[%c0_28, %c1_29, %c0_30], %88 {strides = array<i32>} : memref<1x2x8xf32, #tpu.memory_space<vmem>>, vector<1x1x8xf32>,
    return
  }
  func.func @transform_0(%arg0: i32) -> (i32, i32, i32, i32) {
    %c0_i32 = arith.constant 0 : i32
    %c0_i32_0 = arith.constant 0 : i32
    %c0_i32_1 = arith.constant 0 : i32
    %c0_i32_2 = arith.constant 0 : i32
    return %arg0, %c0_i32, %c0_i32_0, %c0_i32_1 : i32, i32, i32, i32
  }
  func.func @transform_1(%arg0: i32) -> (i32, i32, i32) {
    %c0_i32 = arith.constant 0 : i32
    %c0_i32_0 = arith.constant 0 : i32
    %c0_i32_1 = arith.constant 0 : i32
    %c0_i32_2 = arith.constant 0 : i32
    return %c0_i32, %c0_i32_0, %c0_i32_1 : i32, i32, i32
  }
  func.func @transform_2(%arg0: i32) -> (i32, i32) {
    %c0_i32 = arith.constant 0 : i32
    %c0_i32_0 = arith.constant 0 : i32
    %c0_i32_1 = arith.constant 0 : i32
    return %c0_i32, %c0_i32_0 : i32, i32
  }
  func.func @transform_3(%arg0: i32) -> (i32, i32) {
    %c0_i32 = arith.constant 0 : i32
    %c0_i32_0 = arith.constant 0 : i32
    %c0_i32_1 = arith.constant 0 : i32
    return %c0_i32, %c0_i32_0 : i32, i32
  }
  func.func @transform_4(%arg0: i32) -> (i32, i32, i32, i32) {
    %c0_i32 = arith.constant 0 : i32
    %c0_i32_0 = arith.constant 0 : i32
    %c0_i32_1 = arith.constant 0 : i32
    %c0_i32_2 = arith.constant 0 : i32
    return %arg0, %c0_i32, %c0_i32_0, %c0_i32_1 : i32, i32, i32, i32
  }
  func.func @transform_5(%arg0: i32) -> (i32, i32, i32) {
    %c0_i32 = arith.constant 0 : i32
    %c0_i32_0 = arith.constant 0 : i32
    %c0_i32_1 = arith.constant 0 : i32
    return %arg0, %c0_i32, %c0_i32_0 : i32, i32, i32
  }
}

module attributes {stable_mosaic.version = 11 : i64} {
  func.func @_bn_kernel(%arg0: i32, %arg1: memref<1x16x16x8xf32, #tpu.memory_space<vmem>>, %arg2: memref<2x8xf32, #tpu.memory_space<vmem>>, %arg3: memref<1x16x16x8xf32, #tpu.memory_space<vmem>>) attributes {dimension_semantics = [#tpu.dimension_semantics<parallel>], iteration_bounds = array<i64: 2>, scalar_prefetch = 0 : i64, scratch_operands = 0 : i64, tpu.core_type = #tpu.core_type<tc>, window_params = [{transform_indices = @transform_0, window_bounds = array<i64: 1, 16, 16, 8>}, {pipeline_mode = #tpu.pipeline_mode<synchronous>, transform_indices = @transform_1, window_bounds = array<i64: 2, 8>}, {transform_indices = @transform_2, window_bounds = array<i64: 1, 16, 16, 8>}]} {
    %c0 = arith.constant 0 : index
    %c0_0 = arith.constant 0 : index
    %0 = vector.load %arg2[%c0, %c0_0] : memref<2x8xf32, #tpu.memory_space<vmem>>, vector<1x8xf32>
    %1 = vector.shape_cast %0 : vector<1x8xf32> to vector<8xf32>
    %c1 = arith.constant 1 : index
    %c0_1 = arith.constant 0 : index
    %2 = vector.load %arg2[%c1, %c0_1] : memref<2x8xf32, #tpu.memory_space<vmem>>, vector<1x8xf32>
    %3 = vector.shape_cast %2 : vector<1x8xf32> to vector<8xf32>
    %c0_2 = arith.constant 0 : index
    %c0_3 = arith.constant 0 : index
    %c0_4 = arith.constant 0 : index
    %c0_5 = arith.constant 0 : index
    %4 = vector.load %arg1[%c0_2, %c0_3, %c0_4, %c0_5] : memref<1x16x16x8xf32, #tpu.memory_space<vmem>>, vector<1x16x16x8xf32>
    %5 = vector.shape_cast %1 : vector<8xf32> to vector<1x1x1x8xf32>
    %6 = vector.broadcast %5 : vector<1x1x1x8xf32> to vector<1x16x16x8xf32>
    %7 = arith.subf %4, %6 : vector<1x16x16x8xf32>
    %8 = vector.shape_cast %3 : vector<8xf32> to vector<1x1x1x8xf32>
    %9 = vector.broadcast %8 : vector<1x1x1x8xf32> to vector<1x16x16x8xf32>
    %10 = arith.mulf %7, %9 : vector<1x16x16x8xf32>
    %c0_6 = arith.constant 0 : index
    %c0_7 = arith.constant 0 : index
    %c0_8 = arith.constant 0 : index
    %c0_9 = arith.constant 0 : index
    %11 = vector.load %arg3[%c0_6, %c0_7, %c0_8, %c0_9] : memref<1x16x16x8xf32, #tpu.memory_space<vmem>>, vector<1x16x16x8xf32>
    tpu.vector_store %arg3[%c0_6, %c0_7, %c0_8, %c0_9], %10 {strides = array<i32>} : memref<1x16x16x8xf32, #tpu.memory_space<vmem>>, vector<1x16x16x8xf32>,
    return
  }
  func.func @transform_0(%arg0: i32) -> (i32, i32, i32, i32) {
    %c0_i32 = arith.constant 0 : i32
    %c0_i32_0 = arith.constant 0 : i32
    %c0_i32_1 = arith.constant 0 : i32
    %c0_i32_2 = arith.constant 0 : i32
    return %arg0, %c0_i32, %c0_i32_0, %c0_i32_1 : i32, i32, i32, i32
  }
  func.func @transform_1(%arg0: i32) -> (i32, i32) {
    %c0_i32 = arith.constant 0 : i32
    %c0_i32_0 = arith.constant 0 : i32
    %c0_i32_1 = arith.constant 0 : i32
    return %c0_i32, %c0_i32_0 : i32, i32
  }
  func.func @transform_2(%arg0: i32) -> (i32, i32, i32, i32) {
    %c0_i32 = arith.constant 0 : i32
    %c0_i32_0 = arith.constant 0 : i32
    %c0_i32_1 = arith.constant 0 : i32
    %c0_i32_2 = arith.constant 0 : i32
    return %arg0, %c0_i32, %c0_i32_0, %c0_i32_1 : i32, i32, i32, i32
  }
}

module attributes {stable_mosaic.version = 11 : i64} {
  func.func @_half_kernel(%arg0: i32, %arg1: memref<1x16x16x8xf32, #tpu.memory_space<vmem>>, %arg2: memref<3x3x8xf32, #tpu.memory_space<vmem>>, %arg3: memref<8x8xf32, #tpu.memory_space<vmem>>, %arg4: memref<2x8xf32, #tpu.memory_space<vmem>>, %arg5: memref<1x16x16x8xf32, #tpu.memory_space<vmem>>, %arg6: memref<1x2x8xf32, #tpu.memory_space<vmem>>, %arg7: memref<18x18x8xf32, #tpu.memory_space<vmem>>) attributes {dimension_semantics = [#tpu.dimension_semantics<parallel>], iteration_bounds = array<i64: 2>, scalar_prefetch = 0 : i64, scratch_operands = 1 : i64, tpu.core_type = #tpu.core_type<tc>, window_params = [{transform_indices = @transform_0, window_bounds = array<i64: 1, 16, 16, 8>}, {pipeline_mode = #tpu.pipeline_mode<synchronous>, transform_indices = @transform_1, window_bounds = array<i64: 3, 3, 8>}, {pipeline_mode = #tpu.pipeline_mode<synchronous>, transform_indices = @transform_2, window_bounds = array<i64: 8, 8>}, {pipeline_mode = #tpu.pipeline_mode<synchronous>, transform_indices = @transform_3, window_bounds = array<i64: 2, 8>}, {transform_indices = @transform_4, window_bounds = array<i64: 1, 16, 16, 8>}, {transform_indices = @transform_5, window_bounds = array<i64: 1, 2, 8>}]} {
    %c0 = arith.constant 0 : index
    %c0_0 = arith.constant 0 : index
    %c0_1 = arith.constant 0 : index
    %c0_2 = arith.constant 0 : index
    %0 = vector.load %arg1[%c0, %c0_0, %c0_1, %c0_2] : memref<1x16x16x8xf32, #tpu.memory_space<vmem>>, vector<1x16x16x8xf32>
    %1 = vector.shape_cast %0 : vector<1x16x16x8xf32> to vector<16x16x8xf32>
    %c0_3 = arith.constant 0 : index
    %c0_4 = arith.constant 0 : index
    %2 = vector.load %arg4[%c0_3, %c0_4] : memref<2x8xf32, #tpu.memory_space<vmem>>, vector<1x8xf32>
    %3 = vector.shape_cast %2 : vector<1x8xf32> to vector<8xf32>
    %c1 = arith.constant 1 : index
    %c0_5 = arith.constant 0 : index
    %4 = vector.load %arg4[%c1, %c0_5] : memref<2x8xf32, #tpu.memory_space<vmem>>, vector<1x8xf32>
    %5 = vector.shape_cast %4 : vector<1x8xf32> to vector<8xf32>
    %6 = vector.shape_cast %3 : vector<8xf32> to vector<1x1x8xf32>
    %7 = vector.broadcast %6 : vector<1x1x8xf32> to vector<16x16x8xf32>
    %8 = arith.subf %1, %7 : vector<16x16x8xf32>
    %9 = vector.shape_cast %5 : vector<8xf32> to vector<1x1x8xf32>
    %10 = vector.broadcast %9 : vector<1x1x8xf32> to vector<16x16x8xf32>
    %11 = arith.mulf %8, %10 : vector<16x16x8xf32>
    %cst = arith.constant 0.000000e+00 : f32
    %12 = vector.broadcast %cst : f32 to vector<16x16x8xf32>
    %13 = arith.maximumf %11, %12 : vector<16x16x8xf32>
    %cst_6 = arith.constant 0.000000e+00 : f32
    %14 = vector.broadcast %cst_6 : f32 to vector<18x18x8xf32>
    %c0_7 = arith.constant 0 : index
    %c0_8 = arith.constant 0 : index
    %c0_9 = arith.constant 0 : index
    %15 = vector.load %arg7[%c0_7, %c0_8, %c0_9] : memref<18x18x8xf32, #tpu.memory_space<vmem>>, vector<18x18x8xf32>
    tpu.vector_store %arg7[%c0_7, %c0_8, %c0_9], %14 {strides = array<i32>} : memref<18x18x8xf32, #tpu.memory_space<vmem>>, vector<18x18x8xf32>,
    %c1_10 = arith.constant 1 : index
    %c1_11 = arith.constant 1 : index
    %c0_12 = arith.constant 0 : index
    %16 = vector.load %arg7[%c1_10, %c1_11, %c0_12] : memref<18x18x8xf32, #tpu.memory_space<vmem>>, vector<16x16x8xf32>
    tpu.vector_store %arg7[%c1_10, %c1_11, %c0_12], %13 {strides = array<i32>} : memref<18x18x8xf32, #tpu.memory_space<vmem>>, vector<16x16x8xf32>,
    %c0_13 = arith.constant 0 : index
    %c0_14 = arith.constant 0 : index
    %c0_15 = arith.constant 0 : index
    %17 = vector.load %arg7[%c0_13, %c0_14, %c0_15] : memref<18x18x8xf32, #tpu.memory_space<vmem>>, vector<18x18x8xf32>
    %c0_16 = arith.constant 0 : index
    %c0_17 = arith.constant 0 : index
    %c0_18 = arith.constant 0 : index
    %18 = vector.load %arg2[%c0_16, %c0_17, %c0_18] : memref<3x3x8xf32, #tpu.memory_space<vmem>>, vector<3x3x8xf32>
    %cst_19 = arith.constant 0.000000e+00 : f32
    %19 = vector.broadcast %cst_19 : f32 to vector<16x16x8xf32>
    %20 = vector.extract_strided_slice %17 {offsets = [0, 0, 0], sizes = [16, 16, 8], strides = [1, 1, 1]} : vector<18x18x8xf32> to vector<16x16x8xf32>
    %21 = vector.extract_strided_slice %18 {offsets = [0, 0, 0], sizes = [1, 1, 8], strides = [1, 1, 1]} : vector<3x3x8xf32> to vector<1x1x8xf32>
    %22 = vector.shape_cast %21 : vector<1x1x8xf32> to vector<8xf32>
    %23 = vector.shape_cast %22 : vector<8xf32> to vector<1x1x8xf32>
    %24 = vector.broadcast %23 : vector<1x1x8xf32> to vector<16x16x8xf32>
    %25 = arith.mulf %20, %24 : vector<16x16x8xf32>
    %26 = arith.addf %19, %25 : vector<16x16x8xf32>
    %27 = vector.extract_strided_slice %17 {offsets = [0, 1, 0], sizes = [16, 16, 8], strides = [1, 1, 1]} : vector<18x18x8xf32> to vector<16x16x8xf32>
    %28 = vector.extract_strided_slice %18 {offsets = [0, 1, 0], sizes = [1, 1, 8], strides = [1, 1, 1]} : vector<3x3x8xf32> to vector<1x1x8xf32>
    %29 = vector.shape_cast %28 : vector<1x1x8xf32> to vector<8xf32>
    %30 = vector.shape_cast %29 : vector<8xf32> to vector<1x1x8xf32>
    %31 = vector.broadcast %30 : vector<1x1x8xf32> to vector<16x16x8xf32>
    %32 = arith.mulf %27, %31 : vector<16x16x8xf32>
    %33 = arith.addf %26, %32 : vector<16x16x8xf32>
    %34 = vector.extract_strided_slice %17 {offsets = [0, 2, 0], sizes = [16, 16, 8], strides = [1, 1, 1]} : vector<18x18x8xf32> to vector<16x16x8xf32>
    %35 = vector.extract_strided_slice %18 {offsets = [0, 2, 0], sizes = [1, 1, 8], strides = [1, 1, 1]} : vector<3x3x8xf32> to vector<1x1x8xf32>
    %36 = vector.shape_cast %35 : vector<1x1x8xf32> to vector<8xf32>
    %37 = vector.shape_cast %36 : vector<8xf32> to vector<1x1x8xf32>
    %38 = vector.broadcast %37 : vector<1x1x8xf32> to vector<16x16x8xf32>
    %39 = arith.mulf %34, %38 : vector<16x16x8xf32>
    %40 = arith.addf %33, %39 : vector<16x16x8xf32>
    %41 = vector.extract_strided_slice %17 {offsets = [1, 0, 0], sizes = [16, 16, 8], strides = [1, 1, 1]} : vector<18x18x8xf32> to vector<16x16x8xf32>
    %42 = vector.extract_strided_slice %18 {offsets = [1, 0, 0], sizes = [1, 1, 8], strides = [1, 1, 1]} : vector<3x3x8xf32> to vector<1x1x8xf32>
    %43 = vector.shape_cast %42 : vector<1x1x8xf32> to vector<8xf32>
    %44 = vector.shape_cast %43 : vector<8xf32> to vector<1x1x8xf32>
    %45 = vector.broadcast %44 : vector<1x1x8xf32> to vector<16x16x8xf32>
    %46 = arith.mulf %41, %45 : vector<16x16x8xf32>
    %47 = arith.addf %40, %46 : vector<16x16x8xf32>
    %48 = vector.extract_strided_slice %17 {offsets = [1, 1, 0], sizes = [16, 16, 8], strides = [1, 1, 1]} : vector<18x18x8xf32> to vector<16x16x8xf32>
    %49 = vector.extract_strided_slice %18 {offsets = [1, 1, 0], sizes = [1, 1, 8], strides = [1, 1, 1]} : vector<3x3x8xf32> to vector<1x1x8xf32>
    %50 = vector.shape_cast %49 : vector<1x1x8xf32> to vector<8xf32>
    %51 = vector.shape_cast %50 : vector<8xf32> to vector<1x1x8xf32>
    %52 = vector.broadcast %51 : vector<1x1x8xf32> to vector<16x16x8xf32>
    %53 = arith.mulf %48, %52 : vector<16x16x8xf32>
    %54 = arith.addf %47, %53 : vector<16x16x8xf32>
    %55 = vector.extract_strided_slice %17 {offsets = [1, 2, 0], sizes = [16, 16, 8], strides = [1, 1, 1]} : vector<18x18x8xf32> to vector<16x16x8xf32>
    %56 = vector.extract_strided_slice %18 {offsets = [1, 2, 0], sizes = [1, 1, 8], strides = [1, 1, 1]} : vector<3x3x8xf32> to vector<1x1x8xf32>
    %57 = vector.shape_cast %56 : vector<1x1x8xf32> to vector<8xf32>
    %58 = vector.shape_cast %57 : vector<8xf32> to vector<1x1x8xf32>
    %59 = vector.broadcast %58 : vector<1x1x8xf32> to vector<16x16x8xf32>
    %60 = arith.mulf %55, %59 : vector<16x16x8xf32>
    %61 = arith.addf %54, %60 : vector<16x16x8xf32>
    %62 = vector.extract_strided_slice %17 {offsets = [2, 0, 0], sizes = [16, 16, 8], strides = [1, 1, 1]} : vector<18x18x8xf32> to vector<16x16x8xf32>
    %63 = vector.extract_strided_slice %18 {offsets = [2, 0, 0], sizes = [1, 1, 8], strides = [1, 1, 1]} : vector<3x3x8xf32> to vector<1x1x8xf32>
    %64 = vector.shape_cast %63 : vector<1x1x8xf32> to vector<8xf32>
    %65 = vector.shape_cast %64 : vector<8xf32> to vector<1x1x8xf32>
    %66 = vector.broadcast %65 : vector<1x1x8xf32> to vector<16x16x8xf32>
    %67 = arith.mulf %62, %66 : vector<16x16x8xf32>
    %68 = arith.addf %61, %67 : vector<16x16x8xf32>
    %69 = vector.extract_strided_slice %17 {offsets = [2, 1, 0], sizes = [16, 16, 8], strides = [1, 1, 1]} : vector<18x18x8xf32> to vector<16x16x8xf32>
    %70 = vector.extract_strided_slice %18 {offsets = [2, 1, 0], sizes = [1, 1, 8], strides = [1, 1, 1]} : vector<3x3x8xf32> to vector<1x1x8xf32>
    %71 = vector.shape_cast %70 : vector<1x1x8xf32> to vector<8xf32>
    %72 = vector.shape_cast %71 : vector<8xf32> to vector<1x1x8xf32>
    %73 = vector.broadcast %72 : vector<1x1x8xf32> to vector<16x16x8xf32>
    %74 = arith.mulf %69, %73 : vector<16x16x8xf32>
    %75 = arith.addf %68, %74 : vector<16x16x8xf32>
    %76 = vector.extract_strided_slice %17 {offsets = [2, 2, 0], sizes = [16, 16, 8], strides = [1, 1, 1]} : vector<18x18x8xf32> to vector<16x16x8xf32>
    %77 = vector.extract_strided_slice %18 {offsets = [2, 2, 0], sizes = [1, 1, 8], strides = [1, 1, 1]} : vector<3x3x8xf32> to vector<1x1x8xf32>
    %78 = vector.shape_cast %77 : vector<1x1x8xf32> to vector<8xf32>
    %79 = vector.shape_cast %78 : vector<8xf32> to vector<1x1x8xf32>
    %80 = vector.broadcast %79 : vector<1x1x8xf32> to vector<16x16x8xf32>
    %81 = arith.mulf %76, %80 : vector<16x16x8xf32>
    %82 = arith.addf %75, %81 : vector<16x16x8xf32>
    %83 = vector.shape_cast %82 : vector<16x16x8xf32> to vector<256x8xf32>
    %c0_20 = arith.constant 0 : index
    %c0_21 = arith.constant 0 : index
    %84 = vector.load %arg3[%c0_20, %c0_21] : memref<8x8xf32, #tpu.memory_space<vmem>>, vector<8x8xf32>
    %cst_22 = arith.constant dense<0.000000e+00> : vector<256x8xf32>
    %85 = tpu.matmul %83, %84, %cst_22 {dimension_numbers = #tpu.dot_dimension_numbers<[1], [0], [0], [1], [0, 0, 1, 1], [], []>} : vector<256x8xf32>, vector<8x8xf32>, vector<256x8xf32> -> vector<256x8xf32>
    %86 = vector.shape_cast %85 : vector<256x8xf32> to vector<1x16x16x8xf32>
    %c0_23 = arith.constant 0 : index
    %c0_24 = arith.constant 0 : index
    %c0_25 = arith.constant 0 : index
    %c0_26 = arith.constant 0 : index
    %87 = vector.load %arg5[%c0_23, %c0_24, %c0_25, %c0_26] : memref<1x16x16x8xf32, #tpu.memory_space<vmem>>, vector<1x16x16x8xf32>
    tpu.vector_store %arg5[%c0_23, %c0_24, %c0_25, %c0_26], %86 {strides = array<i32>} : memref<1x16x16x8xf32, #tpu.memory_space<vmem>>, vector<1x16x16x8xf32>,
    %cst_27 = arith.constant dense<0.000000e+00> : vector<8xf32>
    %88 = vector.multi_reduction <add>, %85, %cst_27 [0] : vector<256x8xf32> to vector<8xf32>
    %89 = vector.shape_cast %88 : vector<8xf32> to vector<1x8xf32>
    %c0_28 = arith.constant 0 : index
    %c0_29 = arith.constant 0 : index
    %c0_30 = arith.constant 0 : index
    %90 = vector.load %arg6[%c0_28, %c0_29, %c0_30] : memref<1x2x8xf32, #tpu.memory_space<vmem>>, vector<1x1x8xf32>
    %91 = vector.shape_cast %90 : vector<1x1x8xf32> to vector<1x8xf32>
    %92 = vector.shape_cast %89 : vector<1x8xf32> to vector<1x1x8xf32>
    tpu.vector_store %arg6[%c0_28, %c0_29, %c0_30], %92 {strides = array<i32>} : memref<1x2x8xf32, #tpu.memory_space<vmem>>, vector<1x1x8xf32>,
    %93 = arith.mulf %85, %85 : vector<256x8xf32>
    %cst_31 = arith.constant dense<0.000000e+00> : vector<8xf32>
    %94 = vector.multi_reduction <add>, %93, %cst_31 [0] : vector<256x8xf32> to vector<8xf32>
    %95 = vector.shape_cast %94 : vector<8xf32> to vector<1x8xf32>
    %c0_32 = arith.constant 0 : index
    %c1_33 = arith.constant 1 : index
    %c0_34 = arith.constant 0 : index
    %96 = vector.load %arg6[%c0_32, %c1_33, %c0_34] : memref<1x2x8xf32, #tpu.memory_space<vmem>>, vector<1x1x8xf32>
    %97 = vector.shape_cast %96 : vector<1x1x8xf32> to vector<1x8xf32>
    %98 = vector.shape_cast %95 : vector<1x8xf32> to vector<1x1x8xf32>
    tpu.vector_store %arg6[%c0_32, %c1_33, %c0_34], %98 {strides = array<i32>} : memref<1x2x8xf32, #tpu.memory_space<vmem>>, vector<1x1x8xf32>,
    return
  }
  func.func @transform_0(%arg0: i32) -> (i32, i32, i32, i32) {
    %c0_i32 = arith.constant 0 : i32
    %c0_i32_0 = arith.constant 0 : i32
    %c0_i32_1 = arith.constant 0 : i32
    %c0_i32_2 = arith.constant 0 : i32
    return %arg0, %c0_i32, %c0_i32_0, %c0_i32_1 : i32, i32, i32, i32
  }
  func.func @transform_1(%arg0: i32) -> (i32, i32, i32) {
    %c0_i32 = arith.constant 0 : i32
    %c0_i32_0 = arith.constant 0 : i32
    %c0_i32_1 = arith.constant 0 : i32
    %c0_i32_2 = arith.constant 0 : i32
    return %c0_i32, %c0_i32_0, %c0_i32_1 : i32, i32, i32
  }
  func.func @transform_2(%arg0: i32) -> (i32, i32) {
    %c0_i32 = arith.constant 0 : i32
    %c0_i32_0 = arith.constant 0 : i32
    %c0_i32_1 = arith.constant 0 : i32
    return %c0_i32, %c0_i32_0 : i32, i32
  }
  func.func @transform_3(%arg0: i32) -> (i32, i32) {
    %c0_i32 = arith.constant 0 : i32
    %c0_i32_0 = arith.constant 0 : i32
    %c0_i32_1 = arith.constant 0 : i32
    return %c0_i32, %c0_i32_0 : i32, i32
  }
  func.func @transform_4(%arg0: i32) -> (i32, i32, i32, i32) {
    %c0_i32 = arith.constant 0 : i32
    %c0_i32_0 = arith.constant 0 : i32
    %c0_i32_1 = arith.constant 0 : i32
    %c0_i32_2 = arith.constant 0 : i32
    return %arg0, %c0_i32, %c0_i32_0, %c0_i32_1 : i32, i32, i32, i32
  }
  func.func @transform_5(%arg0: i32) -> (i32, i32, i32) {
    %c0_i32 = arith.constant 0 : i32
    %c0_i32_0 = arith.constant 0 : i32
    %c0_i32_1 = arith.constant 0 : i32
    return %arg0, %c0_i32, %c0_i32_0 : i32, i32, i32
  }
}

</mosaic_0001>

<llo_original>
// kernel: sep_conv_forward.5
$region0: #{sep_conv_forward.5}
  #allocation0 [shape = 'u32[]', space=smem, size = 0x4, offset = 0x4, fixed_abs, tag = 'smem constant byte address 0x4 - core index']
  #allocation1 [shape = 'u32[72,128]{1,0:T(1,128)}', space=vmem, size = 0x9000, scoped, tag = 'internal scratch']
  %s0 = inlined_call_operand.vmem [shape: f32[2,16,16,8], index: 0, kind: input, shape index: {}, may-alias: {0,2}]
  %s1 = inlined_call_operand.vmem [shape: f32[2,8], index: 1, kind: input, shape index: {}]
  %s2 = inlined_call_operand.vmem [shape: f32[2,16,16,8], index: 2, kind: output, shape index: {}, may-alias: {0,2}]
  %s3 = sld [smem:[#allocation0]]
  $region41: #{sep_conv_forward.5} parent=0
    _
  %s5 = ssub.s32 1, %s3
  %s6 = scalar_select 0, %s5, %s3
  loop: start=0, step=1, limit=4
  $region2: #{sep_conv_forward.5} parent=0 // loop_pre_header
    _
  $region3: #{sep_conv_forward.5} parent=0 // loop_header
    %s8 = sphi 0, %s12
    %p9 = scmp.ge.s32.totalorder %s8, 4
    %s18 = sphi 0, %s20
    %s21 = sphi 0, %s18
    %s22 = sphi 0, %s21
    %s38 = sphi 0, %s22
    %s42 = sphi 0, %s42
    %s44 = sphi 0, %s42
    %s45 = sphi 0, %s44
    %s59 = sphi 0, %s45
    %s65 = sphi 0, %s67
    %s68 = sphi 0, %s65
    %s69 = sphi 0, %s68
    %s85 = sphi 0, %s69
  $region4: #{sep_conv_forward.5} parent=0 // loop_header_branch
    %11 = sbr.rel (%p9) target = $region8
  $region5: #{sep_conv_forward.5} parent=0 // loop_body
    %s13 = ssub.s32 %s8, 1
    %s14 = ssub.s32 %s8, 2
    %s15 = sadd.s32 %s8, 1
    %s16 = ssub.s32 %s8, %s15
    %p17 = scmp.eq.s32.totalorder %s16, 0
    %s19 = sadd.s32 %s18, 1
    %s20 = scalar_select %p17, %s18, %s19
    %p23 = pneg %p17
    %p24 = scmp.eq.s32.totalorder %s8, 1
    %p25 = por %p23, %p24
    %p26 = scmp.ne.s32.totalorder %s18, %s21
    %p27 = scmp.eq.s32.totalorder %s8, 0
    %p28 = por %p26, %p27
    %p29 = scmp.ne.s32.totalorder %s18, %s21
    %p30 = scmp.eq.s32.totalorder %s13, 1
    %p31 = por %p29, %p30
    %p32 = scmp.ne.s32.totalorder %s21, %s22
    %p33 = scmp.eq.s32.totalorder %s13, 0
    %p34 = por %p32, %p33
    %p35 = scmp.ne.s32.totalorder %s21, %s22
    %p36 = scmp.eq.s32.totalorder %s14, 1
    %p37 = por %p35, %p36
    %p39 = scmp.ne.s32.totalorder %s22, %s38
    %p40 = scmp.eq.s32.totalorder %s14, 0
    %p41 = por %p39, %p40
    %s43 = sadd.s32 %s42, 1
    %p46 = scmp.eq.s32.totalorder %s8, 1
    %p47 = scmp.ne.s32.totalorder %s42, %s44
    %p48 = scmp.eq.s32.totalorder %s8, 0
    %p49 = por %p47, %p48
    %p50 = scmp.ne.s32.totalorder %s42, %s44
    %p51 = scmp.eq.s32.totalorder %s13, 1
    %p52 = por %p50, %p51
    %p53 = scmp.ne.s32.totalorder %s44, %s45
    %p54 = scmp.eq.s32.totalorder %s13, 0
    %p55 = por %p53, %p54
    %p56 = scmp.ne.s32.totalorder %s44, %s45
    %p57 = scmp.eq.s32.totalorder %s14, 1
    %p58 = por %p56, %p57
    %p60 = scmp.ne.s32.totalorder %s45, %s59
    %p61 = scmp.eq.s32.totalorder %s14, 0
    %p62 = por %p60, %p61
    %s63 = ssub.s32 %s8, %s15
    %p64 = scmp.eq.s32.totalorder %s63, 0
    %s66 = sadd.s32 %s65, 1
    %s67 = scalar_select %p64, %s65, %s66
    %p70 = pneg %p64
    %p71 = scmp.eq.s32.totalorder %s8, 1
    %p72 = por %p70, %p71
    %p73 = scmp.ne.s32.totalorder %s65, %s68
    %p74 = scmp.eq.s32.totalorder %s8, 0
    %p75 = por %p73, %p74
    %p76 = scmp.ne.s32.totalorder %s65, %s68
    %p77 = scmp.eq.s32.totalorder %s13, 1
    %p78 = por %p76, %p77
    %p79 = scmp.ne.s32.totalorder %s68, %s69
    %p80 = scmp.eq.s32.totalorder %s13, 0
    %p81 = por %p79, %p80
    %p82 = scmp.ne.s32.totalorder %s68, %s69
    %p83 = scmp.eq.s32.totalorder %s14, 1
    %p84 = por %p82, %p83
    %p86 = scmp.ne.s32.totalorder %s69, %s85
    %p87 = scmp.eq.s32.totalorder %s14, 0
    %p88 = por %p86, %p87
    %p89 = scmp.le.s32.totalorder 1, %s8
    %p90 = scmp.lt.s32.totalorder %s8, 3
    %p91 = pnand %p89, %p90
    %p92 = pneg %p91
    // Predicated region
    $region9: #{sep_conv_forward.5} parent=5 // pred_check
      _
    $region10: #{sep_conv_forward.5} parent=5 // pred_check_branch
      %94 = sbr.rel (%p91) target = $region12
    $region11: #{sep_conv_forward.5} parent=5 // pred_region
      %s95 = ssub.s32 %s8, 1
      // Predicated region
      $region13: #{sep_conv_forward.5} parent=11 // pred_check
        %p96 = pneg %p55
      $region14: #{sep_conv_forward.5} parent=11 // pred_check_branch
        %98 = sbr.rel (%p96) target = $region16
      $region15: #{sep_conv_forward.5} parent=11 // pred_region
        _
      $region16: #{sep_conv_forward.5} parent=11 // pred_fallthru
        _
    $region12: #{sep_conv_forward.5} parent=5 // pred_fallthru
      _
    %p99 = scmp.lt.s32.totalorder %s8, 2
    // Predicated region
    $region17: #{sep_conv_forward.5} parent=5 // pred_check
      %p100 = pneg %p99
    $region18: #{sep_conv_forward.5} parent=5 // pred_check_branch
      %102 = sbr.rel (%p100) target = $region20
    $region19: #{sep_conv_forward.5} parent=5 // pred_region
      // Predicated region
      $region21: #{sep_conv_forward.5} parent=19 // pred_check
        %p103 = pneg %p28
      $region22: #{sep_conv_forward.5} parent=19 // pred_check_branch
        %105 = sbr.rel (%p103) target = $region24
      $region23: #{sep_conv_forward.5} parent=19 // pred_region
        %p106 = scmp.lt.s32.totalorder %s8, 1
        %s107 = scalar_select %p106, %s8, 1
        %s108 = smul.addr %s107, 32
        %s109 = smul.addr %s108, 8
        %s110 = scalar_lea.vmem %s0, %s109
      $region24: #{sep_conv_forward.5} parent=19 // pred_fallthru
        _
    $region20: #{sep_conv_forward.5} parent=5 // pred_fallthru
      _
    %p111 = scmp.le.s32.totalorder 1, %s8
    %p112 = scmp.lt.s32.totalorder %s8, 3
    %p113 = pnand %p111, %p112
    %p114 = pneg %p113
    // Predicated region
    $region25: #{sep_conv_forward.5} parent=5 // pred_check
      _
    $region26: #{sep_conv_forward.5} parent=5 // pred_check_branch
      %116 = sbr.rel (%p113) target = $region28
    $region27: #{sep_conv_forward.5} parent=5 // pred_region
      %s117 = ssub.s32 %s8, 1
      %p118 = scmp.lt.s32.totalorder %s13, 1
      %s119 = scalar_select %p118, %s13, 1
      %s120 = smul.addr %s119, 32
      %s121 = smul.addr %s120, 8
      %s122 = scalar_lea.vmem %s0, %s121
      %p123 = pneg %p34
      %p124 = pneg %p31
      %p125 = pneg %p55
      %p126 = pneg %p52
      %p127 = pneg %p81
      %p128 = pneg %p78
      %p129 = scmp.lt.s32.totalorder %s13, 1
      %s130 = scalar_select %p129, %s13, 1
      %s131 = smul.addr %s130, 32
      %s132 = smul.addr %s131, 8
      %s133 = scalar_lea.vmem %s2, %s132
      %p134 = scmp.lt.s32.totalorder %s13, 1
      %s135 = scalar_select %p134, %s13, 1
      %s136 = smul.addr %s135, 32
      %s137 = smul.addr %s136, 8
      %s138 = scalar_lea.vmem %s0, %s137
      %p139 = scmp.lt.s32.totalorder %s13, 1
      %s140 = scalar_select %p139, %s13, 1
      %s141 = smul.addr %s140, 32
      %s142 = smul.addr %s141, 8
      %s143 = scalar_lea.vmem %s2, %s142
      %v144 = vld [vmem:[%s1] sm:$0x1]
      %v145 = vld [vmem:[%s1 + $0x1] sm:$0x1]
      %v146 = vld [vmem:[%s138] sm:$0xff]
      %v147 = vld [vmem:[%s138 + $0x8] sm:$0xff]
      %v148 = vld [vmem:[%s138 + $0x10] sm:$0xff]
      %v149 = vld [vmem:[%s138 + $0x18] sm:$0xff]
      %v150 = vld [vmem:[%s138 + $0x20] sm:$0xff]
      %v151 = vld [vmem:[%s138 + $0x28] sm:$0xff]
      %v152 = vld [vmem:[%s138 + $0x30] sm:$0xff]
      %v153 = vld [vmem:[%s138 + $0x38] sm:$0xff]
      %v154 = vld [vmem:[%s138 + $0x40] sm:$0xff]
      %v155 = vld [vmem:[%s138 + $0x48] sm:$0xff]
      %v156 = vld [vmem:[%s138 + $0x50] sm:$0xff]
      %v157 = vld [vmem:[%s138 + $0x58] sm:$0xff]
      %v158 = vld [vmem:[%s138 + $0x60] sm:$0xff]
      %v159 = vld [vmem:[%s138 + $0x68] sm:$0xff]
      %v160 = vld [vmem:[%s138 + $0x70] sm:$0xff]
      %v161 = vld [vmem:[%s138 + $0x78] sm:$0xff]
      %v162 = vld [vmem:[%s138 + $0x80] sm:$0xff]
      %v163 = vld [vmem:[%s138 + $0x88] sm:$0xff]
      %v164 = vld [vmem:[%s138 + $0x90] sm:$0xff]
      %v165 = vld [vmem:[%s138 + $0x98] sm:$0xff]
      %v166 = vld [vmem:[%s138 + $0xa0] sm:$0xff]
      %v167 = vld [vmem:[%s138 + $0xa8] sm:$0xff]
      %v168 = vld [vmem:[%s138 + $0xb0] sm:$0xff]
      %v169 = vld [vmem:[%s138 + $0xb8] sm:$0xff]
      %v170 = vld [vmem:[%s138 + $0xc0] sm:$0xff]
      %v171 = vld [vmem:[%s138 + $0xc8] sm:$0xff]
      %v172 = vld [vmem:[%s138 + $0xd0] sm:$0xff]
      %v173 = vld [vmem:[%s138 + $0xd8] sm:$0xff]
      %v174 = vld [vmem:[%s138 + $0xe0] sm:$0xff]
      %v175 = vld [vmem:[%s138 + $0xe8] sm:$0xff]
      %v176 = vld [vmem:[%s138 + $0xf0] sm:$0xff]
      %v177 = vld [vmem:[%s138 + $0xf8] sm:$0xff]
      %v178 = vperm.slane %v144, 0
      %v179 = vsub.f32 %v146, %v178
      %v180 = vsub.f32 %v147, %v178
      %v181 = vsub.f32 %v148, %v178
      %v182 = vsub.f32 %v149, %v178
      %v183 = vsub.f32 %v150, %v178
      %v184 = vsub.f32 %v151, %v178
      %v185 = vsub.f32 %v152, %v178
      %v186 = vsub.f32 %v153, %v178
      %v187 = vsub.f32 %v154, %v178
      %v188 = vsub.f32 %v155, %v178
      %v189 = vsub.f32 %v156, %v178
      %v190 = vsub.f32 %v157, %v178
      %v191 = vsub.f32 %v158, %v178
      %v192 = vsub.f32 %v159, %v178
      %v193 = vsub.f32 %v160, %v178
      %v194 = vsub.f32 %v161, %v178
      %v195 = vsub.f32 %v162, %v178
      %v196 = vsub.f32 %v163, %v178
      %v197 = vsub.f32 %v164, %v178
      %v198 = vsub.f32 %v165, %v178
      %v199 = vsub.f32 %v166, %v178
      %v200 = vsub.f32 %v167, %v178
      %v201 = vsub.f32 %v168, %v178
      %v202 = vsub.f32 %v169, %v178
      %v203 = vsub.f32 %v170, %v178
      %v204 = vsub.f32 %v171, %v178
      %v205 = vsub.f32 %v172, %v178
      %v206 = vsub.f32 %v173, %v178
      %v207 = vsub.f32 %v174, %v178
      %v208 = vsub.f32 %v175, %v178
      %v209 = vsub.f32 %v176, %v178
      %v210 = vsub.f32 %v177, %v178
      %v211 = vperm.slane %v145, 0
      %v212 = vmul.f32 %v179, %v211
      %v213 = vmul.f32 %v180, %v211
      %v214 = vmul.f32 %v181, %v211
      %v215 = vmul.f32 %v182, %v211
      %v216 = vmul.f32 %v183, %v211
      %v217 = vmul.f32 %v184, %v211
      %v218 = vmul.f32 %v185, %v211
      %v219 = vmul.f32 %v186, %v211
      %v220 = vmul.f32 %v187, %v211
      %v221 = vmul.f32 %v188, %v211
      %v222 = vmul.f32 %v189, %v211
      %v223 = vmul.f32 %v190, %v211
      %v224 = vmul.f32 %v191, %v211
      %v225 = vmul.f32 %v192, %v211
      %v226 = vmul.f32 %v193, %v211
      %v227 = vmul.f32 %v194, %v211
      %v228 = vmul.f32 %v195, %v211
      %v229 = vmul.f32 %v196, %v211
      %v230 = vmul.f32 %v197, %v211
      %v231 = vmul.f32 %v198, %v211
      %v232 = vmul.f32 %v199, %v211
      %v233 = vmul.f32 %v200, %v211
      %v234 = vmul.f32 %v201, %v211
      %v235 = vmul.f32 %v202, %v211
      %v236 = vmul.f32 %v203, %v211
      %v237 = vmul.f32 %v204, %v211
      %v238 = vmul.f32 %v205, %v211
      %v239 = vmul.f32 %v206, %v211
      %v240 = vmul.f32 %v207, %v211
      %v241 = vmul.f32 %v208, %v211
      %v242 = vmul.f32 %v209, %v211
      %v243 = vmul.f32 %v210, %v211
      %vm244 = vcmask 64512
      %245 = vst.msk [vmem:[%s143] sm:$0xff] %vm244, %v212
      %246 = vst.msk [vmem:[%s143 + $0x8] sm:$0xff] %vm244, %v213
      %247 = vst.msk [vmem:[%s143 + $0x10] sm:$0xff] %vm244, %v214
      %248 = vst.msk [vmem:[%s143 + $0x18] sm:$0xff] %vm244, %v215
      %249 = vst.msk [vmem:[%s143 + $0x20] sm:$0xff] %vm244, %v216
      %250 = vst.msk [vmem:[%s143 + $0x28] sm:$0xff] %vm244, %v217
      %251 = vst.msk [vmem:[%s143 + $0x30] sm:$0xff] %vm244, %v218
      %252 = vst.msk [vmem:[%s143 + $0x38] sm:$0xff] %vm244, %v219
      %253 = vst.msk [vmem:[%s143 + $0x40] sm:$0xff] %vm244, %v220
      %254 = vst.msk [vmem:[%s143 + $0x48] sm:$0xff] %vm244, %v221
      %255 = vst.msk [vmem:[%s143 + $0x50] sm:$0xff] %vm244, %v222
      %256 = vst.msk [vmem:[%s143 + $0x58] sm:$0xff] %vm244, %v223
      %257 = vst.msk [vmem:[%s143 + $0x60] sm:$0xff] %vm244, %v224
      %258 = vst.msk [vmem:[%s143 + $0x68] sm:$0xff] %vm244, %v225
      %259 = vst.msk [vmem:[%s143 + $0x70] sm:$0xff] %vm244, %v226
      %260 = vst.msk [vmem:[%s143 + $0x78] sm:$0xff] %vm244, %v227
      %261 = vst.msk [vmem:[%s143 + $0x80] sm:$0xff] %vm244, %v228
      %262 = vst.msk [vmem:[%s143 + $0x88] sm:$0xff] %vm244, %v229
      %263 = vst.msk [vmem:[%s143 + $0x90] sm:$0xff] %vm244, %v230
      %264 = vst.msk [vmem:[%s143 + $0x98] sm:$0xff] %vm244, %v231
      %265 = vst.msk [vmem:[%s143 + $0xa0] sm:$0xff] %vm244, %v232
      %266 = vst.msk [vmem:[%s143 + $0xa8] sm:$0xff] %vm244, %v233
      %267 = vst.msk [vmem:[%s143 + $0xb0] sm:$0xff] %vm244, %v234
      %268 = vst.msk [vmem:[%s143 + $0xb8] sm:$0xff] %vm244, %v235
      %269 = vst.msk [vmem:[%s143 + $0xc0] sm:$0xff] %vm244, %v236
      %270 = vst.msk [vmem:[%s143 + $0xc8] sm:$0xff] %vm244, %v237
      %271 = vst.msk [vmem:[%s143 + $0xd0] sm:$0xff] %vm244, %v238
      %272 = vst.msk [vmem:[%s143 + $0xd8] sm:$0xff] %vm244, %v239
      %273 = vst.msk [vmem:[%s143 + $0xe0] sm:$0xff] %vm244, %v240
      %274 = vst.msk [vmem:[%s143 + $0xe8] sm:$0xff] %vm244, %v241
      %275 = vst.msk [vmem:[%s143 + $0xf0] sm:$0xff] %vm244, %v242
      %276 = vst.msk [vmem:[%s143 + $0xf8] sm:$0xff] %vm244, %v243
      %p277 = scmp.lt.s32.totalorder %s13, 1
      %s278 = scalar_select %p277, %s13, 1
      %s279 = smul.addr %s278, 32
      %s280 = smul.addr %s279, 8
      %s281 = scalar_lea.vmem %s2, %s280
      // Predicated region
      $region29: #{sep_conv_forward.5} parent=27 // pred_check
        %p282 = pneg %p78
      $region30: #{sep_conv_forward.5} parent=27 // pred_check_branch
        %284 = sbr.rel (%p282) target = $region32
      $region31: #{sep_conv_forward.5} parent=27 // pred_region
        _
      $region32: #{sep_conv_forward.5} parent=27 // pred_fallthru
        _
    $region28: #{sep_conv_forward.5} parent=5 // pred_fallthru
      _
    %p285 = scmp.le.s32.totalorder 2, %s8
    // Predicated region
    $region33: #{sep_conv_forward.5} parent=5 // pred_check
      %p286 = pneg %p285
    $region34: #{sep_conv_forward.5} parent=5 // pred_check_branch
      %288 = sbr.rel (%p286) target = $region36
    $region35: #{sep_conv_forward.5} parent=5 // pred_region
      %s289 = ssub.s32 %s8, 2
      // Predicated region
      $region37: #{sep_conv_forward.5} parent=35 // pred_check
        %p290 = pneg %p84
      $region38: #{sep_conv_forward.5} parent=35 // pred_check_branch
        %292 = sbr.rel (%p290) target = $region40
      $region39: #{sep_conv_forward.5} parent=35 // pred_region
        %p293 = scmp.lt.s32.totalorder %s14, 1
        %s294 = scalar_select %p293, %s14, 1
        %s295 = smul.addr %s294, 32
        %s296 = smul.addr %s295, 8
        %s297 = scalar_lea.vmem %s2, %s296
      $region40: #{sep_conv_forward.5} parent=35 // pred_fallthru
        _
    $region36: #{sep_conv_forward.5} parent=5 // pred_fallthru
      _
  $region6: #{sep_conv_forward.5} parent=0 // loop_footer
    %s12 = sadd.s32 1, %s8
  $region7: #{sep_conv_forward.5} parent=0 // loop_footer_branch
    %7 = sbr.rel target = $region3
  $region8: #{sep_conv_forward.5} parent=0 // loop_exit
    _

// kernel: sep_conv_forward.3
$region0: #{sep_conv_forward.3}
  #allocation0 [shape = 'u32[]', space=smem, size = 0x4, offset = 0x4, fixed_abs, tag = 'smem constant byte address 0x4 - core index']
  #allocation1 [shape = 'u32[72,128]{1,0:T(1,128)}', space=vmem, size = 0x9000, scoped, tag = 'internal scratch']
  #allocation2 [shape = 'f32[18,18,8]{2,1,0:T(8,128)}', space=vmem, size = 0x36000, scoped, tag = 'scratch operand']
  %s0 = inlined_call_operand.vmem [shape: f32[2,16,16,8], index: 0, kind: input, shape index: {}]
  %s1 = inlined_call_operand.vmem [shape: f32[3,3,8], index: 1, kind: input, shape index: {}]
  %s2 = inlined_call_operand.vmem [shape: f32[8,8], index: 2, kind: input, shape index: {}]
  %s3 = inlined_call_operand.vmem [shape: f32[2,8], index: 3, kind: input, shape index: {}]
  %s4 = inlined_call_operand.vmem [shape: f32[2,16,16,8], index: 4, kind: output, shape index: {0}]
  %s5 = inlined_call_operand.vmem [shape: f32[2,2,8], index: 5, kind: output, shape index: {1}]
  %6 = xla_tuple %s4, %s5
  %s7 = sld [smem:[#allocation0]]
  $region57: #{sep_conv_forward.3} parent=0
    _
  %s9 = ssub.s32 1, %s7
  %s10 = scalar_select 0, %s9, %s7
  loop: start=0, step=1, limit=4
  $region2: #{sep_conv_forward.3} parent=0 // loop_pre_header
    _
  $region3: #{sep_conv_forward.3} parent=0 // loop_header
    %s12 = sphi 0, %s16
    %p13 = scmp.ge.s32.totalorder %s12, 4
    %s22 = sphi 0, %s24
    %s25 = sphi 0, %s22
    %s26 = sphi 0, %s25
    %s42 = sphi 0, %s26
    %s46 = sphi 0, %s46
    %s48 = sphi 0, %s46
    %s49 = sphi 0, %s48
    %s63 = sphi 0, %s49
    %s67 = sphi 0, %s67
    %s69 = sphi 0, %s67
    %s70 = sphi 0, %s69
    %s84 = sphi 0, %s70
    %s88 = sphi 0, %s88
    %s90 = sphi 0, %s88
    %s91 = sphi 0, %s90
    %s105 = sphi 0, %s91
    %s111 = sphi 0, %s113
    %s114 = sphi 0, %s111
    %s115 = sphi 0, %s114
    %s131 = sphi 0, %s115
    %s137 = sphi 0, %s139
    %s140 = sphi 0, %s137
    %s141 = sphi 0, %s140
    %s157 = sphi 0, %s141
  $region4: #{sep_conv_forward.3} parent=0 // loop_header_branch
    %15 = sbr.rel (%p13) target = $region8
  $region5: #{sep_conv_forward.3} parent=0 // loop_body
    %s17 = ssub.s32 %s12, 1
    %s18 = ssub.s32 %s12, 2
    %s19 = sadd.s32 %s12, 1
    %s20 = ssub.s32 %s12, %s19
    %p21 = scmp.eq.s32.totalorder %s20, 0
    %s23 = sadd.s32 %s22, 1
    %s24 = scalar_select %p21, %s22, %s23
    %p27 = pneg %p21
    %p28 = scmp.eq.s32.totalorder %s12, 1
    %p29 = por %p27, %p28
    %p30 = scmp.ne.s32.totalorder %s22, %s25
    %p31 = scmp.eq.s32.totalorder %s12, 0
    %p32 = por %p30, %p31
    %p33 = scmp.ne.s32.totalorder %s22, %s25
    %p34 = scmp.eq.s32.totalorder %s17, 1
    %p35 = por %p33, %p34
    %p36 = scmp.ne.s32.totalorder %s25, %s26
    %p37 = scmp.eq.s32.totalorder %s17, 0
    %p38 = por %p36, %p37
    %p39 = scmp.ne.s32.totalorder %s25, %s26
    %p40 = scmp.eq.s32.totalorder %s18, 1
    %p41 = por %p39, %p40
    %p43 = scmp.ne.s32.totalorder %s26, %s42
    %p44 = scmp.eq.s32.totalorder %s18, 0
    %p45 = por %p43, %p44
    %s47 = sadd.s32 %s46, 1
    %p50 = scmp.eq.s32.totalorder %s12, 1
    %p51 = scmp.ne.s32.totalorder %s46, %s48
    %p52 = scmp.eq.s32.totalorder %s12, 0
    %p53 = por %p51, %p52
    %p54 = scmp.ne.s32.totalorder %s46, %s48
    %p55 = scmp.eq.s32.totalorder %s17, 1
    %p56 = por %p54, %p55
    %p57 = scmp.ne.s32.totalorder %s48, %s49
    %p58 = scmp.eq.s32.totalorder %s17, 0
    %p59 = por %p57, %p58
    %p60 = scmp.ne.s32.totalorder %s48, %s49
    %p61 = scmp.eq.s32.totalorder %s18, 1
    %p62 = por %p60, %p61
    %p64 = scmp.ne.s32.totalorder %s49, %s63
    %p65 = scmp.eq.s32.totalorder %s18, 0
    %p66 = por %p64, %p65
    %s68 = sadd.s32 %s67, 1
    %p71 = scmp.eq.s32.totalorder %s12, 1
    %p72 = scmp.ne.s32.totalorder %s67, %s69
    %p73 = scmp.eq.s32.totalorder %s12, 0
    %p74 = por %p72, %p73
    %p75 = scmp.ne.s32.totalorder %s67, %s69
    %p76 = scmp.eq.s32.totalorder %s17, 1
    %p77 = por %p75, %p76
    %p78 = scmp.ne.s32.totalorder %s69, %s70
    %p79 = scmp.eq.s32.totalorder %s17, 0
    %p80 = por %p78, %p79
    %p81 = scmp.ne.s32.totalorder %s69, %s70
    %p82 = scmp.eq.s32.totalorder %s18, 1
    %p83 = por %p81, %p82
    %p85 = scmp.ne.s32.totalorder %s70, %s84
    %p86 = scmp.eq.s32.totalorder %s18, 0
    %p87 = por %p85, %p86
    %s89 = sadd.s32 %s88, 1
    %p92 = scmp.eq.s32.totalorder %s12, 1
    %p93 = scmp.ne.s32.totalorder %s88, %s90
    %p94 = scmp.eq.s32.totalorder %s12, 0
    %p95 = por %p93, %p94
    %p96 = scmp.ne.s32.totalorder %s88, %s90
    %p97 = scmp.eq.s32.totalorder %s17, 1
    %p98 = por %p96, %p97
    %p99 = scmp.ne.s32.totalorder %s90, %s91
    %p100 = scmp.eq.s32.totalorder %s17, 0
    %p101 = por %p99, %p100
    %p102 = scmp.ne.s32.totalorder %s90, %s91
    %p103 = scmp.eq.s32.totalorder %s18, 1
    %p104 = por %p102, %p103
    %p106 = scmp.ne.s32.totalorder %s91, %s105
    %p107 = scmp.eq.s32.totalorder %s18, 0
    %p108 = por %p106, %p107
    %s109 = ssub.s32 %s12, %s19
    %p110 = scmp.eq.s32.totalorder %s109, 0
    %s112 = sadd.s32 %s111, 1
    %s113 = scalar_select %p110, %s111, %s112
    %p116 = pneg %p110
    %p117 = scmp.eq.s32.totalorder %s12, 1
    %p118 = por %p116, %p117
    %p119 = scmp.ne.s32.totalorder %s111, %s114
    %p120 = scmp.eq.s32.totalorder %s12, 0
    %p121 = por %p119, %p120
    %p122 = scmp.ne.s32.totalorder %s111, %s114
    %p123 = scmp.eq.s32.totalorder %s17, 1
    %p124 = por %p122, %p123
    %p125 = scmp.ne.s32.totalorder %s114, %s115
    %p126 = scmp.eq.s32.totalorder %s17, 0
    %p127 = por %p125, %p126
    %p128 = scmp.ne.s32.totalorder %s114, %s115
    %p129 = scmp.eq.s32.totalorder %s18, 1
    %p130 = por %p128, %p129
    %p132 = scmp.ne.s32.totalorder %s115, %s131
    %p133 = scmp.eq.s32.totalorder %s18, 0
    %p134 = por %p132, %p133
    %s135 = ssub.s32 %s12, %s19
    %p136 = scmp.eq.s32.totalorder %s135, 0
    %s138 = sadd.s32 %s137, 1
    %s139 = scalar_select %p136, %s137, %s138
    %p142 = pneg %p136
    %p143 = scmp.eq.s32.totalorder %s12, 1
    %p144 = por %p142, %p143
    %p145 = scmp.ne.s32.totalorder %s137, %s140
    %p146 = scmp.eq.s32.totalorder %s12, 0
    %p147 = por %p145, %p146
    %p148 = scmp.ne.s32.totalorder %s137, %s140
    %p149 = scmp.eq.s32.totalorder %s17, 1
    %p150 = por %p148, %p149
    %p151 = scmp.ne.s32.totalorder %s140, %s141
    %p152 = scmp.eq.s32.totalorder %s17, 0
    %p153 = por %p151, %p152
    %p154 = scmp.ne.s32.totalorder %s140, %s141
    %p155 = scmp.eq.s32.totalorder %s18, 1
    %p156 = por %p154, %p155
    %p158 = scmp.ne.s32.totalorder %s141, %s157
    %p159 = scmp.eq.s32.totalorder %s18, 0
    %p160 = por %p158, %p159
    %p161 = scmp.le.s32.totalorder 1, %s12
    %p162 = scmp.lt.s32.totalorder %s12, 3
    %p163 = pnand %p161, %p162
    %p164 = pneg %p163
    // Predicated region
    $region9: #{sep_conv_forward.3} parent=5 // pred_check
      _
    $region10: #{sep_conv_forward.3} parent=5 // pred_check_branch
      %166 = sbr.rel (%p163) target = $region12
    $region11: #{sep_conv_forward.3} parent=5 // pred_region
      %s167 = ssub.s32 %s12, 1
      // Predicated region
      $region13: #{sep_conv_forward.3} parent=11 // pred_check
        %p168 = pneg %p59
      $region14: #{sep_conv_forward.3} parent=11 // pred_check_branch
        %170 = sbr.rel (%p168) target = $region16
      $region15: #{sep_conv_forward.3} parent=11 // pred_region
        _
      $region16: #{sep_conv_forward.3} parent=11 // pred_fallthru
        _
      // Predicated region
      $region17: #{sep_conv_forward.3} parent=11 // pred_check
        %p171 = pneg %p80
      $region18: #{sep_conv_forward.3} parent=11 // pred_check_branch
        %173 = sbr.rel (%p171) target = $region20
      $region19: #{sep_conv_forward.3} parent=11 // pred_region
        _
      $region20: #{sep_conv_forward.3} parent=11 // pred_fallthru
        _
      // Predicated region
      $region21: #{sep_conv_forward.3} parent=11 // pred_check
        %p174 = pneg %p101
      $region22: #{sep_conv_forward.3} parent=11 // pred_check_branch
        %176 = sbr.rel (%p174) target = $region24
      $region23: #{sep_conv_forward.3} parent=11 // pred_region
        _
      $region24: #{sep_conv_forward.3} parent=11 // pred_fallthru
        _
    $region12: #{sep_conv_forward.3} parent=5 // pred_fallthru
      _
    %p177 = scmp.lt.s32.totalorder %s12, 2
    // Predicated region
    $region25: #{sep_conv_forward.3} parent=5 // pred_check
      %p178 = pneg %p177
    $region26: #{sep_conv_forward.3} parent=5 // pred_check_branch
      %180 = sbr.rel (%p178) target = $region28
    $region27: #{sep_conv_forward.3} parent=5 // pred_region
      // Predicated region
      $region29: #{sep_conv_forward.3} parent=27 // pred_check
        %p181 = pneg %p32
      $region30: #{sep_conv_forward.3} parent=27 // pred_check_branch
        %183 = sbr.rel (%p181) target = $region32
      $region31: #{sep_conv_forward.3} parent=27 // pred_region
        %p184 = scmp.lt.s32.totalorder %s12, 1
        %s185 = scalar_select %p184, %s12, 1
        %s186 = smul.addr %s185, 32
        %s187 = smul.addr %s186, 8
        %s188 = scalar_lea.vmem %s0, %s187
      $region32: #{sep_conv_forward.3} parent=27 // pred_fallthru
        _
    $region28: #{sep_conv_forward.3} parent=5 // pred_fallthru
      _
    %p189 = scmp.le.s32.totalorder 1, %s12
    %p190 = scmp.lt.s32.totalorder %s12, 3
    %p191 = pnand %p189, %p190
    %p192 = pneg %p191
    // Predicated region
    $region33: #{sep_conv_forward.3} parent=5 // pred_check
      _
    $region34: #{sep_conv_forward.3} parent=5 // pred_check_branch
      %194 = sbr.rel (%p191) target = $region36
    $region35: #{sep_conv_forward.3} parent=5 // pred_region
      %s195 = ssub.s32 %s12, 1
      %p196 = scmp.lt.s32.totalorder %s17, 1
      %s197 = scalar_select %p196, %s17, 1
      %s198 = smul.addr %s197, 32
      %s199 = smul.addr %s198, 8
      %s200 = scalar_lea.vmem %s0, %s199
      %p201 = pneg %p38
      %p202 = pneg %p35
      %p203 = pneg %p59
      %p204 = pneg %p56
      %p205 = pneg %p80
      %p206 = pneg %p77
      %p207 = pneg %p101
      %p208 = pneg %p98
      %p209 = pneg %p127
      %p210 = pneg %p124
      %p211 = scmp.lt.s32.totalorder %s17, 1
      %s212 = scalar_select %p211, %s17, 1
      %s213 = smul.addr %s212, 32
      %s214 = smul.addr %s213, 8
      %s215 = scalar_lea.vmem %s4, %s214
      %p216 = pneg %p153
      %p217 = pneg %p150
      %p218 = scmp.lt.s32.totalorder %s17, 1
      %s219 = scalar_select %p218, %s17, 1
      %s220 = smul.addr %s219, 2
      %s221 = scalar_lea.vmem %s5, %s220
      %p222 = scmp.lt.s32.totalorder %s17, 1
      %s223 = scalar_select %p222, %s17, 1
      %s224 = smul.addr %s223, 32
      %s225 = smul.addr %s224, 8
      %s226 = scalar_lea.vmem %s0, %s225
      %p227 = scmp.lt.s32.totalorder %s17, 1
      %s228 = scalar_select %p227, %s17, 1
      %s229 = smul.addr %s228, 32
      %s230 = smul.addr %s229, 8
      %s231 = scalar_lea.vmem %s4, %s230
      %p232 = scmp.lt.s32.totalorder %s17, 1
      %s233 = scalar_select %p232, %s17, 1
      %s234 = smul.addr %s233, 2
      %s235 = scalar_lea.vmem %s5, %s234
      %v236 = vld [vmem:[%s226] sm:$0xff]
      %v237 = vld [vmem:[%s226 + $0x8] sm:$0xff]
      %v238 = vld [vmem:[%s226 + $0x10] sm:$0xff]
      %v239 = vld [vmem:[%s226 + $0x18] sm:$0xff]
      %v240 = vld [vmem:[%s226 + $0x20] sm:$0xff]
      %v241 = vld [vmem:[%s226 + $0x28] sm:$0xff]
      %v242 = vld [vmem:[%s226 + $0x30] sm:$0xff]
      %v243 = vld [vmem:[%s226 + $0x38] sm:$0xff]
      %v244 = vld [vmem:[%s226 + $0x40] sm:$0xff]
      %v245 = vld [vmem:[%s226 + $0x48] sm:$0xff]
      %v246 = vld [vmem:[%s226 + $0x50] sm:$0xff]
      %v247 = vld [vmem:[%s226 + $0x58] sm:$0xff]
      %v248 = vld [vmem:[%s226 + $0x60] sm:$0xff]
      %v249 = vld [vmem:[%s226 + $0x68] sm:$0xff]
      %v250 = vld [vmem:[%s226 + $0x70] sm:$0xff]
      %v251 = vld [vmem:[%s226 + $0x78] sm:$0xff]
      %v252 = vld [vmem:[%s226 + $0x80] sm:$0xff]
      %v253 = vld [vmem:[%s226 + $0x88] sm:$0xff]
      %v254 = vld [vmem:[%s226 + $0x90] sm:$0xff]
      %v255 = vld [vmem:[%s226 + $0x98] sm:$0xff]
      %v256 = vld [vmem:[%s226 + $0xa0] sm:$0xff]
      %v257 = vld [vmem:[%s226 + $0xa8] sm:$0xff]
      %v258 = vld [vmem:[%s226 + $0xb0] sm:$0xff]
      %v259 = vld [vmem:[%s226 + $0xb8] sm:$0xff]
      %v260 = vld [vmem:[%s226 + $0xc0] sm:$0xff]
      %v261 = vld [vmem:[%s226 + $0xc8] sm:$0xff]
      %v262 = vld [vmem:[%s226 + $0xd0] sm:$0xff]
      %v263 = vld [vmem:[%s226 + $0xd8] sm:$0xff]
      %v264 = vld [vmem:[%s226 + $0xe0] sm:$0xff]
      %v265 = vld [vmem:[%s226 + $0xe8] sm:$0xff]
      %v266 = vld [vmem:[%s226 + $0xf0] sm:$0xff]
      %v267 = vld [vmem:[%s226 + $0xf8] sm:$0xff]
      %v268 = vmax.f32 %v236, 0.0
      %v269 = vmax.f32 %v237, 0.0
      %v270 = vmax.f32 %v238, 0.0
      %v271 = vmax.f32 %v239, 0.0
      %v272 = vmax.f32 %v240, 0.0
      %v273 = vmax.f32 %v241, 0.0
      %v274 = vmax.f32 %v242, 0.0
      %v275 = vmax.f32 %v243, 0.0
      %v276 = vmax.f32 %v244, 0.0
      %v277 = vmax.f32 %v245, 0.0
      %v278 = vmax.f32 %v246, 0.0
      %v279 = vmax.f32 %v247, 0.0
      %v280 = vmax.f32 %v248, 0.0
      %v281 = vmax.f32 %v249, 0.0
      %v282 = vmax.f32 %v250, 0.0
      %v283 = vmax.f32 %v251, 0.0
      %v284 = vmax.f32 %v252, 0.0
      %v285 = vmax.f32 %v253, 0.0
      %v286 = vmax.f32 %v254, 0.0
      %v287 = vmax.f32 %v255, 0.0
      %v288 = vmax.f32 %v256, 0.0
      %v289 = vmax.f32 %v257, 0.0
      %v290 = vmax.f32 %v258, 0.0
      %v291 = vmax.f32 %v259, 0.0
      %v292 = vmax.f32 %v260, 0.0
      %v293 = vmax.f32 %v261, 0.0
      %v294 = vmax.f32 %v262, 0.0
      %v295 = vmax.f32 %v263, 0.0
      %v296 = vmax.f32 %v264, 0.0
      %v297 = vmax.f32 %v265, 0.0
      %v298 = vmax.f32 %v266, 0.0
      %v299 = vmax.f32 %v267, 0.0
      %vm300 = vcmask 64512
      %301 = vst.msk [vmem:[#allocation2] sm:$0xff] %vm300, 0.0
      %302 = vst.msk [vmem:[#allocation2 + $0x8] sm:$0xff] %vm300, 0.0
      %vm303 = vcmask 58368
      %304 = vst.msk [vmem:[#allocation2 + $0x10] sm:$0x3] %vm303, 0.0
      %305 = vst.msk [vmem:[#allocation2 + $0x18] sm:$0xff] %vm300, 0.0
      %306 = vst.msk [vmem:[#allocation2 + $0x20] sm:$0xff] %vm300, 0.0
      %307 = vst.msk [vmem:[#allocation2 + $0x28] sm:$0x3] %vm303, 0.0
      %308 = vst.msk [vmem:[#allocation2 + $0x30] sm:$0xff] %vm300, 0.0
      %309 = vst.msk [vmem:[#allocation2 + $0x38] sm:$0xff] %vm300, 0.0
      %310 = vst.msk [vmem:[#allocation2 + $0x40] sm:$0x3] %vm303, 0.0
      %311 = vst.msk [vmem:[#allocation2 + $0x48] sm:$0xff] %vm300, 0.0
      %312 = vst.msk [vmem:[#allocation2 + $0x50] sm:$0xff] %vm300, 0.0
      %313 = vst.msk [vmem:[#allocation2 + $0x58] sm:$0x3] %vm303, 0.0
      %314 = vst.msk [vmem:[#allocation2 + $0x60] sm:$0xff] %vm300, 0.0
      %315 = vst.msk [vmem:[#allocation2 + $0x68] sm:$0xff] %vm300, 0.0
      %316 = vst.msk [vmem:[#allocation2 + $0x70] sm:$0x3] %vm303, 0.0
      %317 = vst.msk [vmem:[#allocation2 + $0x78] sm:$0xff] %vm300, 0.0
      %318 = vst.msk [vmem:[#allocation2 + $0x80] sm:$0xff] %vm300, 0.0
      %319 = vst.msk [vmem:[#allocation2 + $0x88] sm:$0x3] %vm303, 0.0
      %320 = vst.msk [vmem:[#allocation2 + $0x90] sm:$0xff] %vm300, 0.0
      %321 = vst.msk [vmem:[#allocation2 + $0x98] sm:$0xff] %vm300, 0.0
      %322 = vst.msk [vmem:[#allocation2 + $0xa0] sm:$0x3] %vm303, 0.0
      %323 = vst.msk [vmem:[#allocation2 + $0xa8] sm:$0xff] %vm300, 0.0
      %324 = vst.msk [vmem:[#allocation2 + $0xb0] sm:$0xff] %vm300, 0.0
      %325 = vst.msk [vmem:[#allocation2 + $0xb8] sm:$0x3] %vm303, 0.0
      %326 = vst.msk [vmem:[#allocation2 + $0xc0] sm:$0xff] %vm300, 0.0
      %327 = vst.msk [vmem:[#allocation2 + $0xc8] sm:$0xff] %vm300, 0.0
      %328 = vst.msk [vmem:[#allocation2 + $0xd0] sm:$0x3] %vm303, 0.0
      %329 = vst.msk [vmem:[#allocation2 + $0xd8] sm:$0xff] %vm300, 0.0
      %330 = vst.msk [vmem:[#allocation2 + $0xe0] sm:$0xff] %vm300, 0.0
      %331 = vst.msk [vmem:[#allocation2 + $0xe8] sm:$0x3] %vm303, 0.0
      %332 = vst.msk [vmem:[#allocation2 + $0xf0] sm:$0xff] %vm300, 0.0
      %333 = vst.msk [vmem:[#allocation2 + $0xf8] sm:$0xff] %vm300, 0.0
      %334 = vst.msk [vmem:[#allocation2 + $0x100] sm:$0x3] %vm303, 0.0
      %335 = vst.msk [vmem:[#allocation2 + $0x108] sm:$0xff] %vm300, 0.0
      %336 = vst.msk [vmem:[#allocation2 + $0x110] sm:$0xff] %vm300, 0.0
      %337 = vst.msk [vmem:[#allocation2 + $0x118] sm:$0x3] %vm303, 0.0
      %338 = vst.msk [vmem:[#allocation2 + $0x120] sm:$0xff] %vm300, 0.0
      %339 = vst.msk [vmem:[#allocation2 + $0x128] sm:$0xff] %vm300, 0.0
      %340 = vst.msk [vmem:[#allocation2 + $0x130] sm:$0x3] %vm303, 0.0
      %341 = vst.msk [vmem:[#allocation2 + $0x138] sm:$0xff] %vm300, 0.0
      %342 = vst.msk [vmem:[#allocation2 + $0x140] sm:$0xff] %vm300, 0.0
      %343 = vst.msk [vmem:[#allocation2 + $0x148] sm:$0x3] %vm303, 0.0
      %344 = vst.msk [vmem:[#allocation2 + $0x150] sm:$0xff] %vm300, 0.0
      %345 = vst.msk [vmem:[#allocation2 + $0x158] sm:$0xff] %vm300, 0.0
      %346 = vst.msk [vmem:[#allocation2 + $0x160] sm:$0x3] %vm303, 0.0
      %347 = vst.msk [vmem:[#allocation2 + $0x168] sm:$0xff] %vm300, 0.0
      %348 = vst.msk [vmem:[#allocation2 + $0x170] sm:$0xff] %vm300, 0.0
      %349 = vst.msk [vmem:[#allocation2 + $0x178] sm:$0x3] %vm303, 0.0
      %350 = vst.msk [vmem:[#allocation2 + $0x180] sm:$0xff] %vm300, 0.0
      %351 = vst.msk [vmem:[#allocation2 + $0x188] sm:$0xff] %vm300, 0.0
      %352 = vst.msk [vmem:[#allocation2 + $0x190] sm:$0x3] %vm303, 0.0
      %353 = vst.msk [vmem:[#allocation2 + $0x198] sm:$0xff] %vm300, 0.0
      %354 = vst.msk [vmem:[#allocation2 + $0x1a0] sm:$0xff] %vm300, 0.0
      %355 = vst.msk [vmem:[#allocation2 + $0x1a8] sm:$0x3] %vm303, 0.0
      %s356 = scalar_lea.vmem [#allocation2], 24
      %357 = vst.msk [vmem:[%s356 + $0x1] sm:$0xff] %vm300, %v268
      %358 = vst.msk [vmem:[%s356 + $0x9] sm:$0xff] %vm300, %v269
      %359 = vst.msk [vmem:[%s356 + $0x19] sm:$0xff] %vm300, %v270
      %360 = vst.msk [vmem:[%s356 + $0x21] sm:$0xff] %vm300, %v271
      %361 = vst.msk [vmem:[%s356 + $0x31] sm:$0xff] %vm300, %v272
      %362 = vst.msk [vmem:[%s356 + $0x39] sm:$0xff] %vm300, %v273
      %363 = vst.msk [vmem:[%s356 + $0x49] sm:$0xff] %vm300, %v274
      %364 = vst.msk [vmem:[%s356 + $0x51] sm:$0xff] %vm300, %v275
      %365 = vst.msk [vmem:[%s356 + $0x61] sm:$0xff] %vm300, %v276
      %366 = vst.msk [vmem:[%s356 + $0x69] sm:$0xff] %vm300, %v277
      %367 = vst.msk [vmem:[%s356 + $0x79] sm:$0xff] %vm300, %v278
      %368 = vst.msk [vmem:[%s356 + $0x81] sm:$0xff] %vm300, %v279
      %369 = vst.msk [vmem:[%s356 + $0x91] sm:$0xff] %vm300, %v280
      %370 = vst.msk [vmem:[%s356 + $0x99] sm:$0xff] %vm300, %v281
      %371 = vst.msk [vmem:[%s356 + $0xa9] sm:$0xff] %vm300, %v282
      %372 = vst.msk [vmem:[%s356 + $0xb1] sm:$0xff] %vm300, %v283
      %373 = vst.msk [vmem:[%s356 + $0xc1] sm:$0xff] %vm300, %v284
      %374 = vst.msk [vmem:[%s356 + $0xc9] sm:$0xff] %vm300, %v285
      %375 = vst.msk [vmem:[%s356 + $0xd9] sm:$0xff] %vm300, %v286
      %376 = vst.msk [vmem:[%s356 + $0xe1] sm:$0xff] %vm300, %v287
      %377 = vst.msk [vmem:[%s356 + $0xf1] sm:$0xff] %vm300, %v288
      %378 = vst.msk [vmem:[%s356 + $0xf9] sm:$0xff] %vm300, %v289
      %379 = vst.msk [vmem:[%s356 + $0x109] sm:$0xff] %vm300, %v290
      %380 = vst.msk [vmem:[%s356 + $0x111] sm:$0xff] %vm300, %v291
      %381 = vst.msk [vmem:[%s356 + $0x121] sm:$0xff] %vm300, %v292
      %382 = vst.msk [vmem:[%s356 + $0x129] sm:$0xff] %vm300, %v293
      %383 = vst.msk [vmem:[%s356 + $0x139] sm:$0xff] %vm300, %v294
      %384 = vst.msk [vmem:[%s356 + $0x141] sm:$0xff] %vm300, %v295
      %385 = vst.msk [vmem:[%s356 + $0x151] sm:$0xff] %vm300, %v296
      %386 = vst.msk [vmem:[%s356 + $0x159] sm:$0xff] %vm300, %v297
      %387 = vst.msk [vmem:[%s356 + $0x169] sm:$0xff] %vm300, %v298
      %388 = vst.msk [vmem:[%s356 + $0x171] sm:$0xff] %vm300, %v299
      %v389 = vld [vmem:[#allocation2] sm:$0xff]
      %v390 = vld [vmem:[#allocation2 + $0x8] sm:$0xff]
      %v391 = vld [vmem:[#allocation2 + $0x10] sm:$0x3]
      %v392 = vld [vmem:[#allocation2 + $0x18] sm:$0xff]
      %v393 = vld [vmem:[#allocation2 + $0x20] sm:$0xff]
      %v394 = vld [vmem:[#allocation2 + $0x28] sm:$0x3]
      %v395 = vld [vmem:[#allocation2 + $0x30] sm:$0xff]
      %v396 = vld [vmem:[#allocation2 + $0x38] sm:$0xff]
      %v397 = vld [vmem:[#allocation2 + $0x40] sm:$0x3]
      %v398 = vld [vmem:[#allocation2 + $0x48] sm:$0xff]
      %v399 = vld [vmem:[#allocation2 + $0x50] sm:$0xff]
      %v400 = vld [vmem:[#allocation2 + $0x58] sm:$0x3]
      %v401 = vld [vmem:[#allocation2 + $0x60] sm:$0xff]
      %v402 = vld [vmem:[#allocation2 + $0x68] sm:$0xff]
      %v403 = vld [vmem:[#allocation2 + $0x70] sm:$0x3]
      %v404 = vld [vmem:[#allocation2 + $0x78] sm:$0xff]
      %v405 = vld [vmem:[#allocation2 + $0x80] sm:$0xff]
      %v406 = vld [vmem:[#allocation2 + $0x88] sm:$0x3]
      %v407 = vld [vmem:[#allocation2 + $0x90] sm:$0xff]
      %v408 = vld [vmem:[#allocation2 + $0x98] sm:$0xff]
      %v409 = vld [vmem:[#allocation2 + $0xa0] sm:$0x3]
      %v410 = vld [vmem:[#allocation2 + $0xa8] sm:$0xff]
      %v411 = vld [vmem:[#allocation2 + $0xb0] sm:$0xff]
      %v412 = vld [vmem:[#allocation2 + $0xb8] sm:$0x3]
      %v413 = vld [vmem:[#allocation2 + $0xc0] sm:$0xff]
      %v414 = vld [vmem:[#allocation2 + $0xc8] sm:$0xff]
      %v415 = vld [vmem:[#allocation2 + $0xd0] sm:$0x3]
      %v416 = vld [vmem:[#allocation2 + $0xd8] sm:$0xff]
      %v417 = vld [vmem:[#allocation2 + $0xe0] sm:$0xff]
      %v418 = vld [vmem:[#allocation2 + $0xe8] sm:$0x3]
      %v419 = vld [vmem:[#allocation2 + $0xf0] sm:$0xff]
      %v420 = vld [vmem:[#allocation2 + $0xf8] sm:$0xff]
      %v421 = vld [vmem:[#allocation2 + $0x100] sm:$0x3]
      %v422 = vld [vmem:[#allocation2 + $0x108] sm:$0xff]
      %v423 = vld [vmem:[#allocation2 + $0x110] sm:$0xff]
      %v424 = vld [vmem:[#allocation2 + $0x118] sm:$0x3]
      %v425 = vld [vmem:[#allocation2 + $0x120] sm:$0xff]
      %v426 = vld [vmem:[#allocation2 + $0x128] sm:$0xff]
      %v427 = vld [vmem:[#allocation2 + $0x130] sm:$0x3]
      %v428 = vld [vmem:[#allocation2 + $0x138] sm:$0xff]
      %v429 = vld [vmem:[#allocation2 + $0x140] sm:$0xff]
      %v430 = vld [vmem:[#allocation2 + $0x148] sm:$0x3]
      %v431 = vld [vmem:[#allocation2 + $0x150] sm:$0xff]
      %v432 = vld [vmem:[#allocation2 + $0x158] sm:$0xff]
      %v433 = vld [vmem:[#allocation2 + $0x160] sm:$0x3]
      %v434 = vld [vmem:[#allocation2 + $0x168] sm:$0xff]
      %v435 = vld [vmem:[#allocation2 + $0x170] sm:$0xff]
      %v436 = vld [vmem:[#allocation2 + $0x178] sm:$0x3]
      %v437 = vld [vmem:[#allocation2 + $0x180] sm:$0xff]
      %v438 = vld [vmem:[#allocation2 + $0x188] sm:$0xff]
      %v439 = vld [vmem:[#allocation2 + $0x190] sm:$0x3]
      %v440 = vld [vmem:[#allocation2 + $0x198] sm:$0xff]
      %v441 = vld [vmem:[#allocation2 + $0x1a0] sm:$0xff]
      %v442 = vld [vmem:[#allocation2 + $0x1a8] sm:$0x3]
      %v443 = vld [vmem:[%s1] sm:$0x7]
      %v444 = vld [vmem:[%s1 + $0x4] sm:$0x7]
      %v445 = vld [vmem:[%s1 + $0x8] sm:$0x7]
      %v446 = vperm.slane %v443, 0
      %v447 = vmul.f32 %v389, %v446
      %v448 = vmul.f32 %v390, %v446
      %v449 = vmul.f32 %v392, %v446
      %v450 = vmul.f32 %v393, %v446
      %v451 = vmul.f32 %v395, %v446
      %v452 = vmul.f32 %v396, %v446
      %v453 = vmul.f32 %v398, %v446
      %v454 = vmul.f32 %v399, %v446
      %v455 = vmul.f32 %v401, %v446
      %v456 = vmul.f32 %v402, %v446
      %v457 = vmul.f32 %v404, %v446
      %v458 = vmul.f32 %v405, %v446
      %v459 = vmul.f32 %v407, %v446
      %v460 = vmul.f32 %v408, %v446
      %v461 = vmul.f32 %v410, %v446
      %v462 = vmul.f32 %v411, %v446
      %v463 = vmul.f32 %v413, %v446
      %v464 = vmul.f32 %v414, %v446
      %v465 = vmul.f32 %v416, %v446
      %v466 = vmul.f32 %v417, %v446
      %v467 = vmul.f32 %v419, %v446
      %v468 = vmul.f32 %v420, %v446
      %v469 = vmul.f32 %v422, %v446
      %v470 = vmul.f32 %v423, %v446
      %v471 = vmul.f32 %v425, %v446
      %v472 = vmul.f32 %v426, %v446
      %v473 = vmul.f32 %v428, %v446
      %v474 = vmul.f32 %v429, %v446
      %v475 = vmul.f32 %v431, %v446
      %v476 = vmul.f32 %v432, %v446
      %v477 = vmul.f32 %v434, %v446
      %v478 = vmul.f32 %v435, %v446
      %v479 = vadd.f32 %v447, 0.0
      %v480 = vadd.f32 %v448, 0.0
      %v481 = vadd.f32 %v449, 0.0
      %v482 = vadd.f32 %v450, 0.0
      %v483 = vadd.f32 %v451, 0.0
      %v484 = vadd.f32 %v452, 0.0
      %v485 = vadd.f32 %v453, 0.0
      %v486 = vadd.f32 %v454, 0.0
      %v487 = vadd.f32 %v455, 0.0
      %v488 = vadd.f32 %v456, 0.0
      %v489 = vadd.f32 %v457, 0.0
      %v490 = vadd.f32 %v458, 0.0
      %v491 = vadd.f32 %v459, 0.0
      %v492 = vadd.f32 %v460, 0.0
      %v493 = vadd.f32 %v461, 0.0
      %v494 = vadd.f32 %v462, 0.0
      %v495 = vadd.f32 %v463, 0.0
      %v496 = vadd.f32 %v464, 0.0
      %v497 = vadd.f32 %v465, 0.0
      %v498 = vadd.f32 %v466, 0.0
      %v499 = vadd.f32 %v467, 0.0
      %v500 = vadd.f32 %v468, 0.0
      %v501 = vadd.f32 %v469, 0.0
      %v502 = vadd.f32 %v470, 0.0
      %v503 = vadd.f32 %v471, 0.0
      %v504 = vadd.f32 %v472, 0.0
      %v505 = vadd.f32 %v473, 0.0
      %v506 = vadd.f32 %v474, 0.0
      %v507 = vadd.f32 %v475, 0.0
      %v508 = vadd.f32 %v476, 0.0
      %v509 = vadd.f32 %v477, 0.0
      %v510 = vadd.f32 %v478, 0.0
      %v511 = vperm.slane %v443, 1
      %v512 = vmul.f32 %v389, %v511
      %v513 = vmul.f32 %v390, %v511
      %v514 = vmul.f32 %v391, %v511
      %v515 = vmul.f32 %v392, %v511
      %v516 = vmul.f32 %v393, %v511
      %v517 = vmul.f32 %v394, %v511
      %v518 = vmul.f32 %v395, %v511
      %v519 = vmul.f32 %v396, %v511
      %v520 = vmul.f32 %v397, %v511
      %v521 = vmul.f32 %v398, %v511
      %v522 = vmul.f32 %v399, %v511
      %v523 = vmul.f32 %v400, %v511
      %v524 = vmul.f32 %v401, %v511
      %v525 = vmul.f32 %v402, %v511
      %v526 = vmul.f32 %v403, %v511
      %v527 = vmul.f32 %v404, %v511
      %v528 = vmul.f32 %v405, %v511
      %v529 = vmul.f32 %v406, %v511
      %v530 = vmul.f32 %v407, %v511
      %v531 = vmul.f32 %v408, %v511
      %v532 = vmul.f32 %v409, %v511
      %v533 = vmul.f32 %v410, %v511
      %v534 = vmul.f32 %v411, %v511
      %v535 = vmul.f32 %v412, %v511
      %v536 = vmul.f32 %v413, %v511
      %v537 = vmul.f32 %v414, %v511
      %v538 = vmul.f32 %v415, %v511
      %v539 = vmul.f32 %v416, %v511
      %v540 = vmul.f32 %v417, %v511
      %v541 = vmul.f32 %v418, %v511
      %v542 = vmul.f32 %v419, %v511
      %v543 = vmul.f32 %v420, %v511
      %v544 = vmul.f32 %v421, %v511
      %v545 = vmul.f32 %v422, %v511
      %v546 = vmul.f32 %v423, %v511
      %v547 = vmul.f32 %v424, %v511
      %v548 = vmul.f32 %v425, %v511
      %v549 = vmul.f32 %v426, %v511
      %v550 = vmul.f32 %v427, %v511
      %v551 = vmul.f32 %v428, %v511
      %v552 = vmul.f32 %v429, %v511
      %v553 = vmul.f32 %v430, %v511
      %v554 = vmul.f32 %v431, %v511
      %v555 = vmul.f32 %v432, %v511
      %v556 = vmul.f32 %v433, %v511
      %v557 = vmul.f32 %v434, %v511
      %v558 = vmul.f32 %v435, %v511
      %v559 = vmul.f32 %v436, %v511
      %vm608 = vcmask 1046528
      %v609 = vrot.slane %v512, 1
      %v610 = vrot.slane %v513, 1
      %v611 = vsel %vm608, %v609, %v610
      %v612 = vrot.slane %v514, 1
      %v613 = vsel %vm608, %v610, %v612
      %v614 = vrot.slane %v515, 1
      %v615 = vrot.slane %v516, 1
      %v616 = vsel %vm608, %v614, %v615
      %v617 = vrot.slane %v517, 1
      %v618 = vsel %vm608, %v615, %v617
      %v619 = vrot.slane %v518, 1
      %v620 = vrot.slane %v519, 1
      %v621 = vsel %vm608, %v619, %v620
      %v622 = vrot.slane %v520, 1
      %v623 = vsel %vm608, %v620, %v622
      %v624 = vrot.slane %v521, 1
      %v625 = vrot.slane %v522, 1
      %v626 = vsel %vm608, %v624, %v625
      %v627 = vrot.slane %v523, 1
      %v628 = vsel %vm608, %v625, %v627
      %v629 = vrot.slane %v524, 1
      %v630 = vrot.slane %v525, 1
      %v631 = vsel %vm608, %v629, %v630
      %v632 = vrot.slane %v526, 1
      %v633 = vsel %vm608, %v630, %v632
      %v634 = vrot.slane %v527, 1
      %v635 = vrot.slane %v528, 1
      %v636 = vsel %vm608, %v634, %v635
      %v637 = vrot.slane %v529, 1
      %v638 = vsel %vm608, %v635, %v637
      %v639 = vrot.slane %v530, 1
      %v640 = vrot.slane %v531, 1
      %v641 = vsel %vm608, %v639, %v640
      %v642 = vrot.slane %v532, 1
      %v643 = vsel %vm608, %v640, %v642
      %v644 = vrot.slane %v533, 1
      %v645 = vrot.slane %v534, 1
      %v646 = vsel %vm608, %v644, %v645
      %v647 = vrot.slane %v535, 1
      %v648 = vsel %vm608, %v645, %v647
      %v649 = vrot.slane %v536, 1
      %v650 = vrot.slane %v537, 1
      %v651 = vsel %vm608, %v649, %v650
      %v652 = vrot.slane %v538, 1
      %v653 = vsel %vm608, %v650, %v652
      %v654 = vrot.slane %v539, 1
      %v655 = vrot.slane %v540, 1
      %v656 = vsel %vm608, %v654, %v655
      %v657 = vrot.slane %v541, 1
      %v658 = vsel %vm608, %v655, %v657
      %v659 = vrot.slane %v542, 1
      %v660 = vrot.slane %v543, 1
      %v661 = vsel %vm608, %v659, %v660
      %v662 = vrot.slane %v544, 1
      %v663 = vsel %vm608, %v660, %v662
      %v664 = vrot.slane %v545, 1
      %v665 = vrot.slane %v546, 1
      %v666 = vsel %vm608, %v664, %v665
      %v667 = vrot.slane %v547, 1
      %v668 = vsel %vm608, %v665, %v667
      %v669 = vrot.slane %v548, 1
      %v670 = vrot.slane %v549, 1
      %v671 = vsel %vm608, %v669, %v670
      %v672 = vrot.slane %v550, 1
      %v673 = vsel %vm608, %v670, %v672
      %v674 = vrot.slane %v551, 1
      %v675 = vrot.slane %v552, 1
      %v676 = vsel %vm608, %v674, %v675
      %v677 = vrot.slane %v553, 1
      %v678 = vsel %vm608, %v675, %v677
      %v679 = vrot.slane %v554, 1
      %v680 = vrot.slane %v555, 1
      %v681 = vsel %vm608, %v679, %v680
      %v682 = vrot.slane %v556, 1
      %v683 = vsel %vm608, %v680, %v682
      %v684 = vrot.slane %v557, 1
      %v685 = vrot.slane %v558, 1
      %v686 = vsel %vm608, %v684, %v685
      %v687 = vrot.slane %v559, 1
      %v688 = vsel %vm608, %v685, %v687
      %v721 = vadd.f32 %v479, %v611
      %v722 = vadd.f32 %v480, %v613
      %v723 = vadd.f32 %v481, %v616
      %v724 = vadd.f32 %v482, %v618
      %v725 = vadd.f32 %v483, %v621
      %v726 = vadd.f32 %v484, %v623
      %v727 = vadd.f32 %v485, %v626
      %v728 = vadd.f32 %v486, %v628
      %v729 = vadd.f32 %v487, %v631
      %v730 = vadd.f32 %v488, %v633
      %v731 = vadd.f32 %v489, %v636
      %v732 = vadd.f32 %v490, %v638
      %v733 = vadd.f32 %v491, %v641
      %v734 = vadd.f32 %v492, %v643
      %v735 = vadd.f32 %v493, %v646
      %v736 = vadd.f32 %v494, %v648
      %v737 = vadd.f32 %v495, %v651
      %v738 = vadd.f32 %v496, %v653
      %v739 = vadd.f32 %v497, %v656
      %v740 = vadd.f32 %v498, %v658
      %v741 = vadd.f32 %v499, %v661
      %v742 = vadd.f32 %v500, %v663
      %v743 = vadd.f32 %v501, %v666
      %v744 = vadd.f32 %v502, %v668
      %v745 = vadd.f32 %v503, %v671
      %v746 = vadd.f32 %v504, %v673
      %v747 = vadd.f32 %v505, %v676
      %v748 = vadd.f32 %v506, %v678
      %v749 = vadd.f32 %v507, %v681
      %v750 = vadd.f32 %v508, %v683
      %v751 = vadd.f32 %v509, %v686
      %v752 = vadd.f32 %v510, %v688
      %v753 = vperm.slane %v443, 2
      %v754 = vmul.f32 %v389, %v753
      %v755 = vmul.f32 %v390, %v753
      %v756 = vmul.f32 %v391, %v753
      %v757 = vmul.f32 %v392, %v753
      %v758 = vmul.f32 %v393, %v753
      %v759 = vmul.f32 %v394, %v753
      %v760 = vmul.f32 %v395, %v753
      %v761 = vmul.f32 %v396, %v753
      %v762 = vmul.f32 %v397, %v753
      %v763 = vmul.f32 %v398, %v753
      %v764 = vmul.f32 %v399, %v753
      %v765 = vmul.f32 %v400, %v753
      %v766 = vmul.f32 %v401, %v753
      %v767 = vmul.f32 %v402, %v753
      %v768 = vmul.f32 %v403, %v753
      %v769 = vmul.f32 %v404, %v753
      %v770 = vmul.f32 %v405, %v753
      %v771 = vmul.f32 %v406, %v753
      %v772 = vmul.f32 %v407, %v753
      %v773 = vmul.f32 %v408, %v753
      %v774 = vmul.f32 %v409, %v753
      %v775 = vmul.f32 %v410, %v753
      %v776 = vmul.f32 %v411, %v753
      %v777 = vmul.f32 %v412, %v753
      %v778 = vmul.f32 %v413, %v753
      %v779 = vmul.f32 %v414, %v753
      %v780 = vmul.f32 %v415, %v753
      %v781 = vmul.f32 %v416, %v753
      %v782 = vmul.f32 %v417, %v753
      %v783 = vmul.f32 %v418, %v753
      %v784 = vmul.f32 %v419, %v753
      %v785 = vmul.f32 %v420, %v753
      %v786 = vmul.f32 %v421, %v753
      %v787 = vmul.f32 %v422, %v753
      %v788 = vmul.f32 %v423, %v753
      %v789 = vmul.f32 %v424, %v753
      %v790 = vmul.f32 %v425, %v753
      %v791 = vmul.f32 %v426, %v753
      %v792 = vmul.f32 %v427, %v753
      %v793 = vmul.f32 %v428, %v753
      %v794 = vmul.f32 %v429, %v753
      %v795 = vmul.f32 %v430, %v753
      %v796 = vmul.f32 %v431, %v753
      %v797 = vmul.f32 %v432, %v753
      %v798 = vmul.f32 %v433, %v753
      %v799 = vmul.f32 %v434, %v753
      %v800 = vmul.f32 %v435, %v753
      %v801 = vmul.f32 %v436, %v753
      %vm850 = vcmask 1045504
      %v851 = vrot.slane %v754, 2
      %v852 = vrot.slane %v755, 2
      %v853 = vsel %vm850, %v851, %v852
      %v854 = vrot.slane %v756, 2
      %v855 = vsel %vm850, %v852, %v854
      %v856 = vrot.slane %v757, 2
      %v857 = vrot.slane %v758, 2
      %v858 = vsel %vm850, %v856, %v857
      %v859 = vrot.slane %v759, 2
      %v860 = vsel %vm850, %v857, %v859
      %v861 = vrot.slane %v760, 2
      %v862 = vrot.slane %v761, 2
      %v863 = vsel %vm850, %v861, %v862
      %v864 = vrot.slane %v762, 2
      %v865 = vsel %vm850, %v862, %v864
      %v866 = vrot.slane %v763, 2
      %v867 = vrot.slane %v764, 2
      %v868 = vsel %vm850, %v866, %v867
      %v869 = vrot.slane %v765, 2
      %v870 = vsel %vm850, %v867, %v869
      %v871 = vrot.slane %v766, 2
      %v872 = vrot.slane %v767, 2
      %v873 = vsel %vm850, %v871, %v872
      %v874 = vrot.slane %v768, 2
      %v875 = vsel %vm850, %v872, %v874
      %v876 = vrot.slane %v769, 2
      %v877 = vrot.slane %v770, 2
      %v878 = vsel %vm850, %v876, %v877
      %v879 = vrot.slane %v771, 2
      %v880 = vsel %vm850, %v877, %v879
      %v881 = vrot.slane %v772, 2
      %v882 = vrot.slane %v773, 2
      %v883 = vsel %vm850, %v881, %v882
      %v884 = vrot.slane %v774, 2
      %v885 = vsel %vm850, %v882, %v884
      %v886 = vrot.slane %v775, 2
      %v887 = vrot.slane %v776, 2
      %v888 = vsel %vm850, %v886, %v887
      %v889 = vrot.slane %v777, 2
      %v890 = vsel %vm850, %v887, %v889
      %v891 = vrot.slane %v778, 2
      %v892 = vrot.slane %v779, 2
      %v893 = vsel %vm850, %v891, %v892
      %v894 = vrot.slane %v780, 2
      %v895 = vsel %vm850, %v892, %v894
      %v896 = vrot.slane %v781, 2
      %v897 = vrot.slane %v782, 2
      %v898 = vsel %vm850, %v896, %v897
      %v899 = vrot.slane %v783, 2
      %v900 = vsel %vm850, %v897, %v899
      %v901 = vrot.slane %v784, 2
      %v902 = vrot.slane %v785, 2
      %v903 = vsel %vm850, %v901, %v902
      %v904 = vrot.slane %v786, 2
      %v905 = vsel %vm850, %v902, %v904
      %v906 = vrot.slane %v787, 2
      %v907 = vrot.slane %v788, 2
      %v908 = vsel %vm850, %v906, %v907
      %v909 = vrot.slane %v789, 2
      %v910 = vsel %vm850, %v907, %v909
      %v911 = vrot.slane %v790, 2
      %v912 = vrot.slane %v791, 2
      %v913 = vsel %vm850, %v911, %v912
      %v914 = vrot.slane %v792, 2
      %v915 = vsel %vm850, %v912, %v914
      %v916 = vrot.slane %v793, 2
      %v917 = vrot.slane %v794, 2
      %v918 = vsel %vm850, %v916, %v917
      %v919 = vrot.slane %v795, 2
      %v920 = vsel %vm850, %v917, %v919
      %v921 = vrot.slane %v796, 2
      %v922 = vrot.slane %v797, 2
      %v923 = vsel %vm850, %v921, %v922
      %v924 = vrot.slane %v798, 2
      %v925 = vsel %vm850, %v922, %v924
      %v926 = vrot.slane %v799, 2
      %v927 = vrot.slane %v800, 2
      %v928 = vsel %vm850, %v926, %v927
      %v929 = vrot.slane %v801, 2
      %v930 = vsel %vm850, %v927, %v929
      %v963 = vadd.f32 %v721, %v853
      %v964 = vadd.f32 %v722, %v855
      %v965 = vadd.f32 %v723, %v858
      %v966 = vadd.f32 %v724, %v860
      %v967 = vadd.f32 %v725, %v863
      %v968 = vadd.f32 %v726, %v865
      %v969 = vadd.f32 %v727, %v868
      %v970 = vadd.f32 %v728, %v870
      %v971 = vadd.f32 %v729, %v873
      %v972 = vadd.f32 %v730, %v875
      %v973 = vadd.f32 %v731, %v878
      %v974 = vadd.f32 %v732, %v880
      %v975 = vadd.f32 %v733, %v883
      %v976 = vadd.f32 %v734, %v885
      %v977 = vadd.f32 %v735, %v888
      %v978 = vadd.f32 %v736, %v890
      %v979 = vadd.f32 %v737, %v893
      %v980 = vadd.f32 %v738, %v895
      %v981 = vadd.f32 %v739, %v898
      %v982 = vadd.f32 %v740, %v900
      %v983 = vadd.f32 %v741, %v903
      %v984 = vadd.f32 %v742, %v905
      %v985 = vadd.f32 %v743, %v908
      %v986 = vadd.f32 %v744, %v910
      %v987 = vadd.f32 %v745, %v913
      %v988 = vadd.f32 %v746, %v915
      %v989 = vadd.f32 %v747, %v918
      %v990 = vadd.f32 %v748, %v920
      %v991 = vadd.f32 %v749, %v923
      %v992 = vadd.f32 %v750, %v925
      %v993 = vadd.f32 %v751, %v928
      %v994 = vadd.f32 %v752, %v930
      %v995 = vperm.slane %v444, 0
      %v996 = vmul.f32 %v392, %v995
      %v997 = vmul.f32 %v393, %v995
      %v998 = vmul.f32 %v395, %v995
      %v999 = vmul.f32 %v396, %v995
      %v1000 = vmul.f32 %v398, %v995
      %v1001 = vmul.f32 %v399, %v995
      %v1002 = vmul.f32 %v401, %v995
      %v1003 = vmul.f32 %v402, %v995
      %v1004 = vmul.f32 %v404, %v995
      %v1005 = vmul.f32 %v405, %v995
      %v1006 = vmul.f32 %v407, %v995
      %v1007 = vmul.f32 %v408, %v995
      %v1008 = vmul.f32 %v410, %v995
      %v1009 = vmul.f32 %v411, %v995
      %v1010 = vmul.f32 %v413, %v995
      %v1011 = vmul.f32 %v414, %v995
      %v1012 = vmul.f32 %v416, %v995
      %v1013 = vmul.f32 %v417, %v995
      %v1014 = vmul.f32 %v419, %v995
      %v1015 = vmul.f32 %v420, %v995
      %v1016 = vmul.f32 %v422, %v995
      %v1017 = vmul.f32 %v423, %v995
      %v1018 = vmul.f32 %v425, %v995
      %v1019 = vmul.f32 %v426, %v995
      %v1020 = vmul.f32 %v428, %v995
      %v1021 = vmul.f32 %v429, %v995
      %v1022 = vmul.f32 %v431, %v995
      %v1023 = vmul.f32 %v432, %v995
      %v1024 = vmul.f32 %v434, %v995
      %v1025 = vmul.f32 %v435, %v995
      %v1026 = vmul.f32 %v437, %v995
      %v1027 = vmul.f32 %v438, %v995
      %v1028 = vadd.f32 %v963, %v996
      %v1029 = vadd.f32 %v964, %v997
      %v1030 = vadd.f32 %v965, %v998
      %v1031 = vadd.f32 %v966, %v999
      %v1032 = vadd.f32 %v967, %v1000
      %v1033 = vadd.f32 %v968, %v1001
      %v1034 = vadd.f32 %v969, %v1002
      %v1035 = vadd.f32 %v970, %v1003
      %v1036 = vadd.f32 %v971, %v1004
      %v1037 = vadd.f32 %v972, %v1005
      %v1038 = vadd.f32 %v973, %v1006
      %v1039 = vadd.f32 %v974, %v1007
      %v1040 = vadd.f32 %v975, %v1008
      %v1041 = vadd.f32 %v976, %v1009
      %v1042 = vadd.f32 %v977, %v1010
      %v1043 = vadd.f32 %v978, %v1011
      %v1044 = vadd.f32 %v979, %v1012
      %v1045 = vadd.f32 %v980, %v1013
      %v1046 = vadd.f32 %v981, %v1014
      %v1047 = vadd.f32 %v982, %v1015
      %v1048 = vadd.f32 %v983, %v1016
      %v1049 = vadd.f32 %v984, %v1017
      %v1050 = vadd.f32 %v985, %v1018
      %v1051 = vadd.f32 %v986, %v1019
      %v1052 = vadd.f32 %v987, %v1020
      %v1053 = vadd.f32 %v988, %v1021
      %v1054 = vadd.f32 %v989, %v1022
      %v1055 = vadd.f32 %v990, %v1023
      %v1056 = vadd.f32 %v991, %v1024
      %v1057 = vadd.f32 %v992, %v1025
      %v1058 = vadd.f32 %v993, %v1026
      %v1059 = vadd.f32 %v994, %v1027
      %v1060 = vperm.slane %v444, 1
      %v1061 = vmul.f32 %v392, %v1060
      %v1062 = vmul.f32 %v393, %v1060
      %v1063 = vmul.f32 %v394, %v1060
      %v1064 = vmul.f32 %v395, %v1060
      %v1065 = vmul.f32 %v396, %v1060
      %v1066 = vmul.f32 %v397, %v1060
      %v1067 = vmul.f32 %v398, %v1060
      %v1068 = vmul.f32 %v399, %v1060
      %v1069 = vmul.f32 %v400, %v1060
      %v1070 = vmul.f32 %v401, %v1060
      %v1071 = vmul.f32 %v402, %v1060
      %v1072 = vmul.f32 %v403, %v1060
      %v1073 = vmul.f32 %v404, %v1060
      %v1074 = vmul.f32 %v405, %v1060
      %v1075 = vmul.f32 %v406, %v1060
      %v1076 = vmul.f32 %v407, %v1060
      %v1077 = vmul.f32 %v408, %v1060
      %v1078 = vmul.f32 %v409, %v1060
      %v1079 = vmul.f32 %v410, %v1060
      %v1080 = vmul.f32 %v411, %v1060
      %v1081 = vmul.f32 %v412, %v1060
      %v1082 = vmul.f32 %v413, %v1060
      %v1083 = vmul.f32 %v414, %v1060
      %v1084 = vmul.f32 %v415, %v1060
      %v1085 = vmul.f32 %v416, %v1060
      %v1086 = vmul.f32 %v417, %v1060
      %v1087 = vmul.f32 %v418, %v1060
      %v1088 = vmul.f32 %v419, %v1060
      %v1089 = vmul.f32 %v420, %v1060
      %v1090 = vmul.f32 %v421, %v1060
      %v1091 = vmul.f32 %v422, %v1060
      %v1092 = vmul.f32 %v423, %v1060
      %v1093 = vmul.f32 %v424, %v1060
      %v1094 = vmul.f32 %v425, %v1060
      %v1095 = vmul.f32 %v426, %v1060
      %v1096 = vmul.f32 %v427, %v1060
      %v1097 = vmul.f32 %v428, %v1060
      %v1098 = vmul.f32 %v429, %v1060
      %v1099 = vmul.f32 %v430, %v1060
      %v1100 = vmul.f32 %v431, %v1060
      %v1101 = vmul.f32 %v432, %v1060
      %v1102 = vmul.f32 %v433, %v1060
      %v1103 = vmul.f32 %v434, %v1060
      %v1104 = vmul.f32 %v435, %v1060
      %v1105 = vmul.f32 %v436, %v1060
      %v1106 = vmul.f32 %v437, %v1060
      %v1107 = vmul.f32 %v438, %v1060
      %v1108 = vmul.f32 %v439, %v1060
      %v1157 = vrot.slane %v1061, 1
      %v1158 = vrot.slane %v1062, 1
      %v1159 = vsel %vm608, %v1157, %v1158
      %v1160 = vrot.slane %v1063, 1
      %v1161 = vsel %vm608, %v1158, %v1160
      %v1162 = vrot.slane %v1064, 1
      %v1163 = vrot.slane %v1065, 1
      %v1164 = vsel %vm608, %v1162, %v1163
      %v1165 = vrot.slane %v1066, 1
      %v1166 = vsel %vm608, %v1163, %v1165
      %v1167 = vrot.slane %v1067, 1
      %v1168 = vrot.slane %v1068, 1
      %v1169 = vsel %vm608, %v1167, %v1168
      %v1170 = vrot.slane %v1069, 1
      %v1171 = vsel %vm608, %v1168, %v1170
      %v1172 = vrot.slane %v1070, 1
      %v1173 = vrot.slane %v1071, 1
      %v1174 = vsel %vm608, %v1172, %v1173
      %v1175 = vrot.slane %v1072, 1
      %v1176 = vsel %vm608, %v1173, %v1175
      %v1177 = vrot.slane %v1073, 1
      %v1178 = vrot.slane %v1074, 1
      %v1179 = vsel %vm608, %v1177, %v1178
      %v1180 = vrot.slane %v1075, 1
      %v1181 = vsel %vm608, %v1178, %v1180
      %v1182 = vrot.slane %v1076, 1
      %v1183 = vrot.slane %v1077, 1
      %v1184 = vsel %vm608, %v1182, %v1183
      %v1185 = vrot.slane %v1078, 1
      %v1186 = vsel %vm608, %v1183, %v1185
      %v1187 = vrot.slane %v1079, 1
      %v1188 = vrot.slane %v1080, 1
      %v1189 = vsel %vm608, %v1187, %v1188
      %v1190 = vrot.slane %v1081, 1
      %v1191 = vsel %vm608, %v1188, %v1190
      %v1192 = vrot.slane %v1082, 1
      %v1193 = vrot.slane %v1083, 1
      %v1194 = vsel %vm608, %v1192, %v1193
      %v1195 = vrot.slane %v1084, 1
      %v1196 = vsel %vm608, %v1193, %v1195
      %v1197 = vrot.slane %v1085, 1
      %v1198 = vrot.slane %v1086, 1
      %v1199 = vsel %vm608, %v1197, %v1198
      %v1200 = vrot.slane %v1087, 1
      %v1201 = vsel %vm608, %v1198, %v1200
      %v1202 = vrot.slane %v1088, 1
      %v1203 = vrot.slane %v1089, 1
      %v1204 = vsel %vm608, %v1202, %v1203
      %v1205 = vrot.slane %v1090, 1
      %v1206 = vsel %vm608, %v1203, %v1205
      %v1207 = vrot.slane %v1091, 1
      %v1208 = vrot.slane %v1092, 1
      %v1209 = vsel %vm608, %v1207, %v1208
      %v1210 = vrot.slane %v1093, 1
      %v1211 = vsel %vm608, %v1208, %v1210
      %v1212 = vrot.slane %v1094, 1
      %v1213 = vrot.slane %v1095, 1
      %v1214 = vsel %vm608, %v1212, %v1213
      %v1215 = vrot.slane %v1096, 1
      %v1216 = vsel %vm608, %v1213, %v1215
      %v1217 = vrot.slane %v1097, 1
      %v1218 = vrot.slane %v1098, 1
      %v1219 = vsel %vm608, %v1217, %v1218
      %v1220 = vrot.slane %v1099, 1
      %v1221 = vsel %vm608, %v1218, %v1220
      %v1222 = vrot.slane %v1100, 1
      %v1223 = vrot.slane %v1101, 1
      %v1224 = vsel %vm608, %v1222, %v1223
      %v1225 = vrot.slane %v1102, 1
      %v1226 = vsel %vm608, %v1223, %v1225
      %v1227 = vrot.slane %v1103, 1
      %v1228 = vrot.slane %v1104, 1
      %v1229 = vsel %vm608, %v1227, %v1228
      %v1230 = vrot.slane %v1105, 1
      %v1231 = vsel %vm608, %v1228, %v1230
      %v1232 = vrot.slane %v1106, 1
      %v1233 = vrot.slane %v1107, 1
      %v1234 = vsel %vm608, %v1232, %v1233
      %v1235 = vrot.slane %v1108, 1
      %v1236 = vsel %vm608, %v1233, %v1235
      %v1269 = vadd.f32 %v1028, %v1159
      %v1270 = vadd.f32 %v1029, %v1161
      %v1271 = vadd.f32 %v1030, %v1164
      %v1272 = vadd.f32 %v1031, %v1166
      %v1273 = vadd.f32 %v1032, %v1169
      %v1274 = vadd.f32 %v1033, %v1171
      %v1275 = vadd.f32 %v1034, %v1174
      %v1276 = vadd.f32 %v1035, %v1176
      %v1277 = vadd.f32 %v1036, %v1179
      %v1278 = vadd.f32 %v1037, %v1181
      %v1279 = vadd.f32 %v1038, %v1184
      %v1280 = vadd.f32 %v1039, %v1186
      %v1281 = vadd.f32 %v1040, %v1189
      %v1282 = vadd.f32 %v1041, %v1191
      %v1283 = vadd.f32 %v1042, %v1194
      %v1284 = vadd.f32 %v1043, %v1196
      %v1285 = vadd.f32 %v1044, %v1199
      %v1286 = vadd.f32 %v1045, %v1201
      %v1287 = vadd.f32 %v1046, %v1204
      %v1288 = vadd.f32 %v1047, %v1206
      %v1289 = vadd.f32 %v1048, %v1209
      %v1290 = vadd.f32 %v1049, %v1211
      %v1291 = vadd.f32 %v1050, %v1214
      %v1292 = vadd.f32 %v1051, %v1216
      %v1293 = vadd.f32 %v1052, %v1219
      %v1294 = vadd.f32 %v1053, %v1221
      %v1295 = vadd.f32 %v1054, %v1224
      %v1296 = vadd.f32 %v1055, %v1226
      %v1297 = vadd.f32 %v1056, %v1229
      %v1298 = vadd.f32 %v1057, %v1231
      %v1299 = vadd.f32 %v1058, %v1234
      %v1300 = vadd.f32 %v1059, %v1236
      %v1301 = vperm.slane %v444, 2
      %v1302 = vmul.f32 %v392, %v1301
      %v1303 = vmul.f32 %v393, %v1301
      %v1304 = vmul.f32 %v394, %v1301
      %v1305 = vmul.f32 %v395, %v1301
      %v1306 = vmul.f32 %v396, %v1301
      %v1307 = vmul.f32 %v397, %v1301
      %v1308 = vmul.f32 %v398, %v1301
      %v1309 = vmul.f32 %v399, %v1301
      %v1310 = vmul.f32 %v400, %v1301
      %v1311 = vmul.f32 %v401, %v1301
      %v1312 = vmul.f32 %v402, %v1301
      %v1313 = vmul.f32 %v403, %v1301
      %v1314 = vmul.f32 %v404, %v1301
      %v1315 = vmul.f32 %v405, %v1301
      %v1316 = vmul.f32 %v406, %v1301
      %v1317 = vmul.f32 %v407, %v1301
      %v1318 = vmul.f32 %v408, %v1301
      %v1319 = vmul.f32 %v409, %v1301
      %v1320 = vmul.f32 %v410, %v1301
      %v1321 = vmul.f32 %v411, %v1301
      %v1322 = vmul.f32 %v412, %v1301
      %v1323 = vmul.f32 %v413, %v1301
      %v1324 = vmul.f32 %v414, %v1301
      %v1325 = vmul.f32 %v415, %v1301
      %v1326 = vmul.f32 %v416, %v1301
      %v1327 = vmul.f32 %v417, %v1301
      %v1328 = vmul.f32 %v418, %v1301
      %v1329 = vmul.f32 %v419, %v1301
      %v1330 = vmul.f32 %v420, %v1301
      %v1331 = vmul.f32 %v421, %v1301
      %v1332 = vmul.f32 %v422, %v1301
      %v1333 = vmul.f32 %v423, %v1301
      %v1334 = vmul.f32 %v424, %v1301
      %v1335 = vmul.f32 %v425, %v1301
      %v1336 = vmul.f32 %v426, %v1301
      %v1337 = vmul.f32 %v427, %v1301
      %v1338 = vmul.f32 %v428, %v1301
      %v1339 = vmul.f32 %v429, %v1301
      %v1340 = vmul.f32 %v430, %v1301
      %v1341 = vmul.f32 %v431, %v1301
      %v1342 = vmul.f32 %v432, %v1301
      %v1343 = vmul.f32 %v433, %v1301
      %v1344 = vmul.f32 %v434, %v1301
      %v1345 = vmul.f32 %v435, %v1301
      %v1346 = vmul.f32 %v436, %v1301
      %v1347 = vmul.f32 %v437, %v1301
      %v1348 = vmul.f32 %v438, %v1301
      %v1349 = vmul.f32 %v439, %v1301
      %v1398 = vrot.slane %v1302, 2
      %v1399 = vrot.slane %v1303, 2
      %v1400 = vsel %vm850, %v1398, %v1399
      %v1401 = vrot.slane %v1304, 2
      %v1402 = vsel %vm850, %v1399, %v1401
      %v1403 = vrot.slane %v1305, 2
      %v1404 = vrot.slane %v1306, 2
      %v1405 = vsel %vm850, %v1403, %v1404
      %v1406 = vrot.slane %v1307, 2
      %v1407 = vsel %vm850, %v1404, %v1406
      %v1408 = vrot.slane %v1308, 2
      %v1409 = vrot.slane %v1309, 2
      %v1410 = vsel %vm850, %v1408, %v1409
      %v1411 = vrot.slane %v1310, 2
      %v1412 = vsel %vm850, %v1409, %v1411
      %v1413 = vrot.slane %v1311, 2
      %v1414 = vrot.slane %v1312, 2
      %v1415 = vsel %vm850, %v1413, %v1414
      %v1416 = vrot.slane %v1313, 2
      %v1417 = vsel %vm850, %v1414, %v1416
      %v1418 = vrot.slane %v1314, 2
      %v1419 = vrot.slane %v1315, 2
      %v1420 = vsel %vm850, %v1418, %v1419
      %v1421 = vrot.slane %v1316, 2
      %v1422 = vsel %vm850, %v1419, %v1421
      %v1423 = vrot.slane %v1317, 2
      %v1424 = vrot.slane %v1318, 2
      %v1425 = vsel %vm850, %v1423, %v1424
      %v1426 = vrot.slane %v1319, 2
      %v1427 = vsel %vm850, %v1424, %v1426
      %v1428 = vrot.slane %v1320, 2
      %v1429 = vrot.slane %v1321, 2
      %v1430 = vsel %vm850, %v1428, %v1429
      %v1431 = vrot.slane %v1322, 2
      %v1432 = vsel %vm850, %v1429, %v1431
      %v1433 = vrot.slane %v1323, 2
      %v1434 = vrot.slane %v1324, 2
      %v1435 = vsel %vm850, %v1433, %v1434
      %v1436 = vrot.slane %v1325, 2
      %v1437 = vsel %vm850, %v1434, %v1436
      %v1438 = vrot.slane %v1326, 2
      %v1439 = vrot.slane %v1327, 2
      %v1440 = vsel %vm850, %v1438, %v1439
      %v1441 = vrot.slane %v1328, 2
      %v1442 = vsel %vm850, %v1439, %v1441
      %v1443 = vrot.slane %v1329, 2
      %v1444 = vrot.slane %v1330, 2
      %v1445 = vsel %vm850, %v1443, %v1444
      %v1446 = vrot.slane %v1331, 2
      %v1447 = vsel %vm850, %v1444, %v1446
      %v1448 = vrot.slane %v1332, 2
      %v1449 = vrot.slane %v1333, 2
      %v1450 = vsel %vm850, %v1448, %v1449
      %v1451 = vrot.slane %v1334, 2
      %v1452 = vsel %vm850, %v1449, %v1451
      %v1453 = vrot.slane %v1335, 2
      %v1454 = vrot.slane %v1336, 2
      %v1455 = vsel %vm850, %v1453, %v1454
      %v1456 = vrot.slane %v1337, 2
      %v1457 = vsel %vm850, %v1454, %v1456
      %v1458 = vrot.slane %v1338, 2
      %v1459 = vrot.slane %v1339, 2
      %v1460 = vsel %vm850, %v1458, %v1459
      %v1461 = vrot.slane %v1340, 2
      %v1462 = vsel %vm850, %v1459, %v1461
      %v1463 = vrot.slane %v1341, 2
      %v1464 = vrot.slane %v1342, 2
      %v1465 = vsel %vm850, %v1463, %v1464
      %v1466 = vrot.slane %v1343, 2
      %v1467 = vsel %vm850, %v1464, %v1466
      %v1468 = vrot.slane %v1344, 2
      %v1469 = vrot.slane %v1345, 2
      %v1470 = vsel %vm850, %v1468, %v1469
      %v1471 = vrot.slane %v1346, 2
      %v1472 = vsel %vm850, %v1469, %v1471
      %v1473 = vrot.slane %v1347, 2
      %v1474 = vrot.slane %v1348, 2
      %v1475 = vsel %vm850, %v1473, %v1474
      %v1476 = vrot.slane %v1349, 2
      %v1477 = vsel %vm850, %v1474, %v1476
      %v1510 = vadd.f32 %v1269, %v1400
      %v1511 = vadd.f32 %v1270, %v1402
      %v1512 = vadd.f32 %v1271, %v1405
      %v1513 = vadd.f32 %v1272, %v1407
      %v1514 = vadd.f32 %v1273, %v1410
      %v1515 = vadd.f32 %v1274, %v1412
      %v1516 = vadd.f32 %v1275, %v1415
      %v1517 = vadd.f32 %v1276, %v1417
      %v1518 = vadd.f32 %v1277, %v1420
      %v1519 = vadd.f32 %v1278, %v1422
      %v1520 = vadd.f32 %v1279, %v1425
      %v1521 = vadd.f32 %v1280, %v1427
      %v1522 = vadd.f32 %v1281, %v1430
      %v1523 = vadd.f32 %v1282, %v1432
      %v1524 = vadd.f32 %v1283, %v1435
      %v1525 = vadd.f32 %v1284, %v1437
      %v1526 = vadd.f32 %v1285, %v1440
      %v1527 = vadd.f32 %v1286, %v1442
      %v1528 = vadd.f32 %v1287, %v1445
      %v1529 = vadd.f32 %v1288, %v1447
      %v1530 = vadd.f32 %v1289, %v1450
      %v1531 = vadd.f32 %v1290, %v1452
      %v1532 = vadd.f32 %v1291, %v1455
      %v1533 = vadd.f32 %v1292, %v1457
      %v1534 = vadd.f32 %v1293, %v1460
      %v1535 = vadd.f32 %v1294, %v1462
      %v1536 = vadd.f32 %v1295, %v1465
      %v1537 = vadd.f32 %v1296, %v1467
      %v1538 = vadd.f32 %v1297, %v1470
      %v1539 = vadd.f32 %v1298, %v1472
      %v1540 = vadd.f32 %v1299, %v1475
      %v1541 = vadd.f32 %v1300, %v1477
      %v1542 = vperm.slane %v445, 0
      %v1543 = vmul.f32 %v395, %v1542
      %v1544 = vmul.f32 %v396, %v1542
      %v1545 = vmul.f32 %v398, %v1542
      %v1546 = vmul.f32 %v399, %v1542
      %v1547 = vmul.f32 %v401, %v1542
      %v1548 = vmul.f32 %v402, %v1542
      %v1549 = vmul.f32 %v404, %v1542
      %v1550 = vmul.f32 %v405, %v1542
      %v1551 = vmul.f32 %v407, %v1542
      %v1552 = vmul.f32 %v408, %v1542
      %v1553 = vmul.f32 %v410, %v1542
      %v1554 = vmul.f32 %v411, %v1542
      %v1555 = vmul.f32 %v413, %v1542
      %v1556 = vmul.f32 %v414, %v1542
      %v1557 = vmul.f32 %v416, %v1542
      %v1558 = vmul.f32 %v417, %v1542
      %v1559 = vmul.f32 %v419, %v1542
      %v1560 = vmul.f32 %v420, %v1542
      %v1561 = vmul.f32 %v422, %v1542
      %v1562 = vmul.f32 %v423, %v1542
      %v1563 = vmul.f32 %v425, %v1542
      %v1564 = vmul.f32 %v426, %v1542
      %v1565 = vmul.f32 %v428, %v1542
      %v1566 = vmul.f32 %v429, %v1542
      %v1567 = vmul.f32 %v431, %v1542
      %v1568 = vmul.f32 %v432, %v1542
      %v1569 = vmul.f32 %v434, %v1542
      %v1570 = vmul.f32 %v435, %v1542
      %v1571 = vmul.f32 %v437, %v1542
      %v1572 = vmul.f32 %v438, %v1542
      %v1573 = vmul.f32 %v440, %v1542
      %v1574 = vmul.f32 %v441, %v1542
      %v1575 = vadd.f32 %v1510, %v1543
      %v1576 = vadd.f32 %v1511, %v1544
      %v1577 = vadd.f32 %v1512, %v1545
      %v1578 = vadd.f32 %v1513, %v1546
      %v1579 = vadd.f32 %v1514, %v1547
      %v1580 = vadd.f32 %v1515, %v1548
      %v1581 = vadd.f32 %v1516, %v1549
      %v1582 = vadd.f32 %v1517, %v1550
      %v1583 = vadd.f32 %v1518, %v1551
      %v1584 = vadd.f32 %v1519, %v1552
      %v1585 = vadd.f32 %v1520, %v1553
      %v1586 = vadd.f32 %v1521, %v1554
      %v1587 = vadd.f32 %v1522, %v1555
      %v1588 = vadd.f32 %v1523, %v1556
      %v1589 = vadd.f32 %v1524, %v1557
      %v1590 = vadd.f32 %v1525, %v1558
      %v1591 = vadd.f32 %v1526, %v1559
      %v1592 = vadd.f32 %v1527, %v1560
      %v1593 = vadd.f32 %v1528, %v1561
      %v1594 = vadd.f32 %v1529, %v1562
      %v1595 = vadd.f32 %v1530, %v1563
      %v1596 = vadd.f32 %v1531, %v1564
      %v1597 = vadd.f32 %v1532, %v1565
      %v1598 = vadd.f32 %v1533, %v1566
      %v1599 = vadd.f32 %v1534, %v1567
      %v1600 = vadd.f32 %v1535, %v1568
      %v1601 = vadd.f32 %v1536, %v1569
      %v1602 = vadd.f32 %v1537, %v1570
      %v1603 = vadd.f32 %v1538, %v1571
      %v1604 = vadd.f32 %v1539, %v1572
      %v1605 = vadd.f32 %v1540, %v1573
      %v1606 = vadd.f32 %v1541, %v1574
      %v1607 = vperm.slane %v445, 1
      %v1608 = vmul.f32 %v395, %v1607
      %v1609 = vmul.f32 %v396, %v1607
      %v1610 = vmul.f32 %v397, %v1607
      %v1611 = vmul.f32 %v398, %v1607
      %v1612 = vmul.f32 %v399, %v1607
      %v1613 = vmul.f32 %v400, %v1607
      %v1614 = vmul.f32 %v401, %v1607
      %v1615 = vmul.f32 %v402, %v1607
      %v1616 = vmul.f32 %v403, %v1607
      %v1617 = vmul.f32 %v404, %v1607
      %v1618 = vmul.f32 %v405, %v1607
      %v1619 = vmul.f32 %v406, %v1607
      %v1620 = vmul.f32 %v407, %v1607
      %v1621 = vmul.f32 %v408, %v1607
      %v1622 = vmul.f32 %v409, %v1607
      %v1623 = vmul.f32 %v410, %v1607
      %v1624 = vmul.f32 %v411, %v1607
      %v1625 = vmul.f32 %v412, %v1607
      %v1626 = vmul.f32 %v413, %v1607
      %v1627 = vmul.f32 %v414, %v1607
      %v1628 = vmul.f32 %v415, %v1607
      %v1629 = vmul.f32 %v416, %v1607
      %v1630 = vmul.f32 %v417, %v1607
      %v1631 = vmul.f32 %v418, %v1607
      %v1632 = vmul.f32 %v419, %v1607
      %v1633 = vmul.f32 %v420, %v1607
      %v1634 = vmul.f32 %v421, %v1607
      %v1635 = vmul.f32 %v422, %v1607
      %v1636 = vmul.f32 %v423, %v1607
      %v1637 = vmul.f32 %v424, %v1607
      %v1638 = vmul.f32 %v425, %v1607
      %v1639 = vmul.f32 %v426, %v1607
      %v1640 = vmul.f32 %v427, %v1607
      %v1641 = vmul.f32 %v428, %v1607
      %v1642 = vmul.f32 %v429, %v1607
      %v1643 = vmul.f32 %v430, %v1607
      %v1644 = vmul.f32 %v431, %v1607
      %v1645 = vmul.f32 %v432, %v1607
      %v1646 = vmul.f32 %v433, %v1607
      %v1647 = vmul.f32 %v434, %v1607
      %v1648 = vmul.f32 %v435, %v1607
      %v1649 = vmul.f32 %v436, %v1607
      %v1650 = vmul.f32 %v437, %v1607
      %v1651 = vmul.f32 %v438, %v1607
      %v1652 = vmul.f32 %v439, %v1607
      %v1653 = vmul.f32 %v440, %v1607
      %v1654 = vmul.f32 %v441, %v1607
      %v1655 = vmul.f32 %v442, %v1607
      %v1704 = vrot.slane %v1608, 1
      %v1705 = vrot.slane %v1609, 1
      %v1706 = vsel %vm608, %v1704, %v1705
      %v1707 = vrot.slane %v1610, 1
      %v1708 = vsel %vm608, %v1705, %v1707
      %v1709 = vrot.slane %v1611, 1
      %v1710 = vrot.slane %v1612, 1
      %v1711 = vsel %vm608, %v1709, %v1710
      %v1712 = vrot.slane %v1613, 1
      %v1713 = vsel %vm608, %v1710, %v1712
      %v1714 = vrot.slane %v1614, 1
      %v1715 = vrot.slane %v1615, 1
      %v1716 = vsel %vm608, %v1714, %v1715
      %v1717 = vrot.slane %v1616, 1
      %v1718 = vsel %vm608, %v1715, %v1717
      %v1719 = vrot.slane %v1617, 1
      %v1720 = vrot.slane %v1618, 1
      %v1721 = vsel %vm608, %v1719, %v1720
      %v1722 = vrot.slane %v1619, 1
      %v1723 = vsel %vm608, %v1720, %v1722
      %v1724 = vrot.slane %v1620, 1
      %v1725 = vrot.slane %v1621, 1
      %v1726 = vsel %vm608, %v1724, %v1725
      %v1727 = vrot.slane %v1622, 1
      %v1728 = vsel %vm608, %v1725, %v1727
      %v1729 = vrot.slane %v1623, 1
      %v1730 = vrot.slane %v1624, 1
      %v1731 = vsel %vm608, %v1729, %v1730
      %v1732 = vrot.slane %v1625, 1
      %v1733 = vsel %vm608, %v1730, %v1732
      %v1734 = vrot.slane %v1626, 1
      %v1735 = vrot.slane %v1627, 1
      %v1736 = vsel %vm608, %v1734, %v1735
      %v1737 = vrot.slane %v1628, 1
      %v1738 = vsel %vm608, %v1735, %v1737
      %v1739 = vrot.slane %v1629, 1
      %v1740 = vrot.slane %v1630, 1
      %v1741 = vsel %vm608, %v1739, %v1740
      %v1742 = vrot.slane %v1631, 1
      %v1743 = vsel %vm608, %v1740, %v1742
      %v1744 = vrot.slane %v1632, 1
      %v1745 = vrot.slane %v1633, 1
      %v1746 = vsel %vm608, %v1744, %v1745
      %v1747 = vrot.slane %v1634, 1
      %v1748 = vsel %vm608, %v1745, %v1747
      %v1749 = vrot.slane %v1635, 1
      %v1750 = vrot.slane %v1636, 1
      %v1751 = vsel %vm608, %v1749, %v1750
      %v1752 = vrot.slane %v1637, 1
      %v1753 = vsel %vm608, %v1750, %v1752
      %v1754 = vrot.slane %v1638, 1
      %v1755 = vrot.slane %v1639, 1
      %v1756 = vsel %vm608, %v1754, %v1755
      %v1757 = vrot.slane %v1640, 1
      %v1758 = vsel %vm608, %v1755, %v1757
      %v1759 = vrot.slane %v1641, 1
      %v1760 = vrot.slane %v1642, 1
      %v1761 = vsel %vm608, %v1759, %v1760
      %v1762 = vrot.slane %v1643, 1
      %v1763 = vsel %vm608, %v1760, %v1762
      %v1764 = vrot.slane %v1644, 1
      %v1765 = vrot.slane %v1645, 1
      %v1766 = vsel %vm608, %v1764, %v1765
      %v1767 = vrot.slane %v1646, 1
      %v1768 = vsel %vm608, %v1765, %v1767
      %v1769 = vrot.slane %v1647, 1
      %v1770 = vrot.slane %v1648, 1
      %v1771 = vsel %vm608, %v1769, %v1770
      %v1772 = vrot.slane %v1649, 1
      %v1773 = vsel %vm608, %v1770, %v1772
      %v1774 = vrot.slane %v1650, 1
      %v1775 = vrot.slane %v1651, 1
      %v1776 = vsel %vm608, %v1774, %v1775
      %v1777 = vrot.slane %v1652, 1
      %v1778 = vsel %vm608, %v1775, %v1777
      %v1779 = vrot.slane %v1653, 1
      %v1780 = vrot.slane %v1654, 1
      %v1781 = vsel %vm608, %v1779, %v1780
      %v1782 = vrot.slane %v1655, 1
      %v1783 = vsel %vm608, %v1780, %v1782
      %v1816 = vadd.f32 %v1575, %v1706
      %v1817 = vadd.f32 %v1576, %v1708
      %v1818 = vadd.f32 %v1577, %v1711
      %v1819 = vadd.f32 %v1578, %v1713
      %v1820 = vadd.f32 %v1579, %v1716
      %v1821 = vadd.f32 %v1580, %v1718
      %v1822 = vadd.f32 %v1581, %v1721
      %v1823 = vadd.f32 %v1582, %v1723
      %v1824 = vadd.f32 %v1583, %v1726
      %v1825 = vadd.f32 %v1584, %v1728
      %v1826 = vadd.f32 %v1585, %v1731
      %v1827 = vadd.f32 %v1586, %v1733
      %v1828 = vadd.f32 %v1587, %v1736
      %v1829 = vadd.f32 %v1588, %v1738
      %v1830 = vadd.f32 %v1589, %v1741
      %v1831 = vadd.f32 %v1590, %v1743
      %v1832 = vadd.f32 %v1591, %v1746
      %v1833 = vadd.f32 %v1592, %v1748
      %v1834 = vadd.f32 %v1593, %v1751
      %v1835 = vadd.f32 %v1594, %v1753
      %v1836 = vadd.f32 %v1595, %v1756
      %v1837 = vadd.f32 %v1596, %v1758
      %v1838 = vadd.f32 %v1597, %v1761
      %v1839 = vadd.f32 %v1598, %v1763
      %v1840 = vadd.f32 %v1599, %v1766
      %v1841 = vadd.f32 %v1600, %v1768
      %v1842 = vadd.f32 %v1601, %v1771
      %v1843 = vadd.f32 %v1602, %v1773
      %v1844 = vadd.f32 %v1603, %v1776
      %v1845 = vadd.f32 %v1604, %v1778
      %v1846 = vadd.f32 %v1605, %v1781
      %v1847 = vadd.f32 %v1606, %v1783
      %v1848 = vperm.slane %v445, 2
      %v1849 = vmul.f32 %v395, %v1848
      %v1850 = vmul.f32 %v396, %v1848
      %v1851 = vmul.f32 %v397, %v1848
      %v1852 = vmul.f32 %v398, %v1848
      %v1853 = vmul.f32 %v399, %v1848
      %v1854 = vmul.f32 %v400, %v1848
      %v1855 = vmul.f32 %v401, %v1848
      %v1856 = vmul.f32 %v402, %v1848
      %v1857 = vmul.f32 %v403, %v1848
      %v1858 = vmul.f32 %v404, %v1848
      %v1859 = vmul.f32 %v405, %v1848
      %v1860 = vmul.f32 %v406, %v1848
      %v1861 = vmul.f32 %v407, %v1848
      %v1862 = vmul.f32 %v408, %v1848
      %v1863 = vmul.f32 %v409, %v1848
      %v1864 = vmul.f32 %v410, %v1848
      %v1865 = vmul.f32 %v411, %v1848
      %v1866 = vmul.f32 %v412, %v1848
      %v1867 = vmul.f32 %v413, %v1848
      %v1868 = vmul.f32 %v414, %v1848
      %v1869 = vmul.f32 %v415, %v1848
      %v1870 = vmul.f32 %v416, %v1848
      %v1871 = vmul.f32 %v417, %v1848
      %v1872 = vmul.f32 %v418, %v1848
      %v1873 = vmul.f32 %v419, %v1848
      %v1874 = vmul.f32 %v420, %v1848
      %v1875 = vmul.f32 %v421, %v1848
      %v1876 = vmul.f32 %v422, %v1848
      %v1877 = vmul.f32 %v423, %v1848
      %v1878 = vmul.f32 %v424, %v1848
      %v1879 = vmul.f32 %v425, %v1848
      %v1880 = vmul.f32 %v426, %v1848
      %v1881 = vmul.f32 %v427, %v1848
      %v1882 = vmul.f32 %v428, %v1848
      %v1883 = vmul.f32 %v429, %v1848
      %v1884 = vmul.f32 %v430, %v1848
      %v1885 = vmul.f32 %v431, %v1848
      %v1886 = vmul.f32 %v432, %v1848
      %v1887 = vmul.f32 %v433, %v1848
      %v1888 = vmul.f32 %v434, %v1848
      %v1889 = vmul.f32 %v435, %v1848
      %v1890 = vmul.f32 %v436, %v1848
      %v1891 = vmul.f32 %v437, %v1848
      %v1892 = vmul.f32 %v438, %v1848
      %v1893 = vmul.f32 %v439, %v1848
      %v1894 = vmul.f32 %v440, %v1848
      %v1895 = vmul.f32 %v441, %v1848
      %v1896 = vmul.f32 %v442, %v1848
      %v1945 = vrot.slane %v1849, 2
      %v1946 = vrot.slane %v1850, 2
      %v1947 = vsel %vm850, %v1945, %v1946
      %v1948 = vrot.slane %v1851, 2
      %v1949 = vsel %vm850, %v1946, %v1948
      %v1950 = vrot.slane %v1852, 2
      %v1951 = vrot.slane %v1853, 2
      %v1952 = vsel %vm850, %v1950, %v1951
      %v1953 = vrot.slane %v1854, 2
      %v1954 = vsel %vm850, %v1951, %v1953
      %v1955 = vrot.slane %v1855, 2
      %v1956 = vrot.slane %v1856, 2
      %v1957 = vsel %vm850, %v1955, %v1956
      %v1958 = vrot.slane %v1857, 2
      %v1959 = vsel %vm850, %v1956, %v1958
      %v1960 = vrot.slane %v1858, 2
      %v1961 = vrot.slane %v1859, 2
      %v1962 = vsel %vm850, %v1960, %v1961
      %v1963 = vrot.slane %v1860, 2
      %v1964 = vsel %vm850, %v1961, %v1963
      %v1965 = vrot.slane %v1861, 2
      %v1966 = vrot.slane %v1862, 2
      %v1967 = vsel %vm850, %v1965, %v1966
      %v1968 = vrot.slane %v1863, 2
      %v1969 = vsel %vm850, %v1966, %v1968
      %v1970 = vrot.slane %v1864, 2
      %v1971 = vrot.slane %v1865, 2
      %v1972 = vsel %vm850, %v1970, %v1971
      %v1973 = vrot.slane %v1866, 2
      %v1974 = vsel %vm850, %v1971, %v1973
      %v1975 = vrot.slane %v1867, 2
      %v1976 = vrot.slane %v1868, 2
      %v1977 = vsel %vm850, %v1975, %v1976
      %v1978 = vrot.slane %v1869, 2
      %v1979 = vsel %vm850, %v1976, %v1978
      %v1980 = vrot.slane %v1870, 2
      %v1981 = vrot.slane %v1871, 2
      %v1982 = vsel %vm850, %v1980, %v1981
      %v1983 = vrot.slane %v1872, 2
      %v1984 = vsel %vm850, %v1981, %v1983
      %v1985 = vrot.slane %v1873, 2
      %v1986 = vrot.slane %v1874, 2
      %v1987 = vsel %vm850, %v1985, %v1986
      %v1988 = vrot.slane %v1875, 2
      %v1989 = vsel %vm850, %v1986, %v1988
      %v1990 = vrot.slane %v1876, 2
      %v1991 = vrot.slane %v1877, 2
      %v1992 = vsel %vm850, %v1990, %v1991
      %v1993 = vrot.slane %v1878, 2
      %v1994 = vsel %vm850, %v1991, %v1993
      %v1995 = vrot.slane %v1879, 2
      %v1996 = vrot.slane %v1880, 2
      %v1997 = vsel %vm850, %v1995, %v1996
      %v1998 = vrot.slane %v1881, 2
      %v1999 = vsel %vm850, %v1996, %v1998
      %v2000 = vrot.slane %v1882, 2
      %v2001 = vrot.slane %v1883, 2
      %v2002 = vsel %vm850, %v2000, %v2001
      %v2003 = vrot.slane %v1884, 2
      %v2004 = vsel %vm850, %v2001, %v2003
      %v2005 = vrot.slane %v1885, 2
      %v2006 = vrot.slane %v1886, 2
      %v2007 = vsel %vm850, %v2005, %v2006
      %v2008 = vrot.slane %v1887, 2
      %v2009 = vsel %vm850, %v2006, %v2008
      %v2010 = vrot.slane %v1888, 2
      %v2011 = vrot.slane %v1889, 2
      %v2012 = vsel %vm850, %v2010, %v2011
      %v2013 = vrot.slane %v1890, 2
      %v2014 = vsel %vm850, %v2011, %v2013
      %v2015 = vrot.slane %v1891, 2
      %v2016 = vrot.slane %v1892, 2
      %v2017 = vsel %vm850, %v2015, %v2016
      %v2018 = vrot.slane %v1893, 2
      %v2019 = vsel %vm850, %v2016, %v2018
      %v2020 = vrot.slane %v1894, 2
      %v2021 = vrot.slane %v1895, 2
      %v2022 = vsel %vm850, %v2020, %v2021
      %v2023 = vrot.slane %v1896, 2
      %v2024 = vsel %vm850, %v2021, %v2023
      %v2057 = vadd.f32 %v1816, %v1947
      %v2058 = vadd.f32 %v1817, %v1949
      %v2059 = vadd.f32 %v1818, %v1952
      %v2060 = vadd.f32 %v1819, %v1954
      %v2061 = vadd.f32 %v1820, %v1957
      %v2062 = vadd.f32 %v1821, %v1959
      %v2063 = vadd.f32 %v1822, %v1962
      %v2064 = vadd.f32 %v1823, %v1964
      %v2065 = vadd.f32 %v1824, %v1967
      %v2066 = vadd.f32 %v1825, %v1969
      %v2067 = vadd.f32 %v1826, %v1972
      %v2068 = vadd.f32 %v1827, %v1974
      %v2069 = vadd.f32 %v1828, %v1977
      %v2070 = vadd.f32 %v1829, %v1979
      %v2071 = vadd.f32 %v1830, %v1982
      %v2072 = vadd.f32 %v1831, %v1984
      %v2073 = vadd.f32 %v1832, %v1987
      %v2074 = vadd.f32 %v1833, %v1989
      %v2075 = vadd.f32 %v1834, %v1992
      %v2076 = vadd.f32 %v1835, %v1994
      %v2077 = vadd.f32 %v1836, %v1997
      %v2078 = vadd.f32 %v1837, %v1999
      %v2079 = vadd.f32 %v1838, %v2002
      %v2080 = vadd.f32 %v1839, %v2004
      %v2081 = vadd.f32 %v1840, %v2007
      %v2082 = vadd.f32 %v1841, %v2009
      %v2083 = vadd.f32 %v1842, %v2012
      %v2084 = vadd.f32 %v1843, %v2014
      %v2085 = vadd.f32 %v1844, %v2017
      %v2086 = vadd.f32 %v1845, %v2019
      %v2087 = vadd.f32 %v1846, %v2022
      %v2088 = vadd.f32 %v1847, %v2024
      %v2089 = vld [vmem:[%s2] sm:$0xff]
      %v2091 = vsel %vm300, %v2057, 0
      %v2094 = vsel %vm300, %v2058, 0
      %v2097 = vsel %vm300, %v2059, 0
      %v2100 = vsel %vm300, %v2060, 0
      %v2103 = vsel %vm300, %v2061, 0
      %v2106 = vsel %vm300, %v2062, 0
      %v2109 = vsel %vm300, %v2063, 0
      %v2112 = vsel %vm300, %v2064, 0
      %v2115 = vsel %vm300, %v2065, 0
      %v2118 = vsel %vm300, %v2066, 0
      %v2121 = vsel %vm300, %v2067, 0
      %v2124 = vsel %vm300, %v2068, 0
      %v2127 = vsel %vm300, %v2069, 0
      %v2130 = vsel %vm300, %v2070, 0
      %v2133 = vsel %vm300, %v2071, 0
      %v2136 = vsel %vm300, %v2072, 0
      %v2139 = vsel %vm300, %v2073, 0
      %v2142 = vsel %vm300, %v2074, 0
      %v2145 = vsel %vm300, %v2075, 0
      %v2148 = vsel %vm300, %v2076, 0
      %v2151 = vsel %vm300, %v2077, 0
      %v2154 = vsel %vm300, %v2078, 0
      %v2157 = vsel %vm300, %v2079, 0
      %v2160 = vsel %vm300, %v2080, 0
      %v2163 = vsel %vm300, %v2081, 0
      %v2166 = vsel %vm300, %v2082, 0
      %v2169 = vsel %vm300, %v2083, 0
      %v2172 = vsel %vm300, %v2084, 0
      %v2175 = vsel %vm300, %v2085, 0
      %v2178 = vsel %vm300, %v2086, 0
      %v2181 = vsel %vm300, %v2087, 0
      %v2184 = vsel %vm300, %v2088, 0
      %2186 = vmatpush.msra.mxu0 0.0
      %2187 = vmatpush.msra.mxu0 0.0
      %2188 = vmatpush.msra.mxu0 0.0
      %2189 = vmatpush.msra.mxu0 0.0
      %2190 = vmatpush.msra.mxu0 0.0
      %2191 = vmatpush.msra.mxu0 0.0
      %2192 = vmatpush.msra.mxu0 0.0
      %2193 = vmatpush.msra.mxu0 0.0
      %2194 = vmatpush.msra.mxu0 0.0
      %2195 = vmatpush.msra.mxu0 0.0
      %2196 = vmatpush.msra.mxu0 0.0
      %2197 = vmatpush.msra.mxu0 0.0
      %2198 = vmatpush.msra.mxu0 0.0
      %2199 = vmatpush.msra.mxu0 0.0
      %2200 = vmatpush.msra.mxu0 0.0
      %2201 = vmatpush.msra.mxu0 %v2089
      %2202 = vmatmul.f32.gmra.mxu0 %v2091
      %v2203 = vpop.f32.mrf.mxu0
      %v2204 = vadd.f32 0.0, %v2203
      %2205 = vmatmul.f32.gmra.mxu0 %v2094
      %v2206 = vpop.f32.mrf.mxu0
      %v2207 = vadd.f32 0.0, %v2206
      %2208 = vmatmul.f32.gmra.mxu0 %v2097
      %v2209 = vpop.f32.mrf.mxu0
      %v2210 = vadd.f32 0.0, %v2209
      %2211 = vmatmul.f32.gmra.mxu0 %v2100
      %v2212 = vpop.f32.mrf.mxu0
      %v2213 = vadd.f32 0.0, %v2212
      %2214 = vmatmul.f32.gmra.mxu0 %v2103
      %v2215 = vpop.f32.mrf.mxu0
      %v2216 = vadd.f32 0.0, %v2215
      %2217 = vmatmul.f32.gmra.mxu0 %v2106
      %v2218 = vpop.f32.mrf.mxu0
      %v2219 = vadd.f32 0.0, %v2218
      %2220 = vmatmul.f32.gmra.mxu0 %v2109
      %v2221 = vpop.f32.mrf.mxu0
      %v2222 = vadd.f32 0.0, %v2221
      %2223 = vmatmul.f32.gmra.mxu0 %v2112
      %v2224 = vpop.f32.mrf.mxu0
      %v2225 = vadd.f32 0.0, %v2224
      %2226 = vmatmul.f32.gmra.mxu0 %v2115
      %v2227 = vpop.f32.mrf.mxu0
      %v2228 = vadd.f32 0.0, %v2227
      %2229 = vmatmul.f32.gmra.mxu0 %v2118
      %v2230 = vpop.f32.mrf.mxu0
      %v2231 = vadd.f32 0.0, %v2230
      %2232 = vmatmul.f32.gmra.mxu0 %v2121
      %v2233 = vpop.f32.mrf.mxu0
      %v2234 = vadd.f32 0.0, %v2233
      %2235 = vmatmul.f32.gmra.mxu0 %v2124
      %v2236 = vpop.f32.mrf.mxu0
      %v2237 = vadd.f32 0.0, %v2236
      %2238 = vmatmul.f32.gmra.mxu0 %v2127
      %v2239 = vpop.f32.mrf.mxu0
      %v2240 = vadd.f32 0.0, %v2239
      %2241 = vmatmul.f32.gmra.mxu0 %v2130
      %v2242 = vpop.f32.mrf.mxu0
      %v2243 = vadd.f32 0.0, %v2242
      %2244 = vmatmul.f32.gmra.mxu0 %v2133
      %v2245 = vpop.f32.mrf.mxu0
      %v2246 = vadd.f32 0.0, %v2245
      %2247 = vmatmul.f32.gmra.mxu0 %v2136
      %v2248 = vpop.f32.mrf.mxu0
      %v2249 = vadd.f32 0.0, %v2248
      %2250 = vmatmul.f32.gmra.mxu0 %v2139
      %v2251 = vpop.f32.mrf.mxu0
      %v2252 = vadd.f32 0.0, %v2251
      %2253 = vmatmul.f32.gmra.mxu0 %v2142
      %v2254 = vpop.f32.mrf.mxu0
      %v2255 = vadd.f32 0.0, %v2254
      %2256 = vmatmul.f32.gmra.mxu0 %v2145
      %v2257 = vpop.f32.mrf.mxu0
      %v2258 = vadd.f32 0.0, %v2257
      %2259 = vmatmul.f32.gmra.mxu0 %v2148
      %v2260 = vpop.f32.mrf.mxu0
      %v2261 = vadd.f32 0.0, %v2260
      %2262 = vmatmul.f32.gmra.mxu0 %v2151
      %v2263 = vpop.f32.mrf.mxu0
      %v2264 = vadd.f32 0.0, %v2263
      %2265 = vmatmul.f32.gmra.mxu0 %v2154
      %v2266 = vpop.f32.mrf.mxu0
      %v2267 = vadd.f32 0.0, %v2266
      %2268 = vmatmul.f32.gmra.mxu0 %v2157
      %v2269 = vpop.f32.mrf.mxu0
      %v2270 = vadd.f32 0.0, %v2269
      %2271 = vmatmul.f32.gmra.mxu0 %v2160
      %v2272 = vpop.f32.mrf.mxu0
      %v2273 = vadd.f32 0.0, %v2272
      %2274 = vmatmul.f32.gmra.mxu0 %v2163
      %v2275 = vpop.f32.mrf.mxu0
      %v2276 = vadd.f32 0.0, %v2275
      %2277 = vmatmul.f32.gmra.mxu0 %v2166
      %v2278 = vpop.f32.mrf.mxu0
      %v2279 = vadd.f32 0.0, %v2278
      %2280 = vmatmul.f32.gmra.mxu0 %v2169
      %v2281 = vpop.f32.mrf.mxu0
      %v2282 = vadd.f32 0.0, %v2281
      %2283 = vmatmul.f32.gmra.mxu0 %v2172
      %v2284 = vpop.f32.mrf.mxu0
      %v2285 = vadd.f32 0.0, %v2284
      %2286 = vmatmul.f32.gmra.mxu0 %v2175
      %v2287 = vpop.f32.mrf.mxu0
      %v2288 = vadd.f32 0.0, %v2287
      %2289 = vmatmul.f32.gmra.mxu0 %v2178
      %v2290 = vpop.f32.mrf.mxu0
      %v2291 = vadd.f32 0.0, %v2290
      %2292 = vmatmul.f32.gmra.mxu0 %v2181
      %v2293 = vpop.f32.mrf.mxu0
      %v2294 = vadd.f32 0.0, %v2293
      %2295 = vmatmul.f32.gmra.mxu0 %v2184
      %v2296 = vpop.f32.mrf.mxu0
      %v2297 = vadd.f32 0.0, %v2296
      %2298 = vdwg.mxu0
      %2299 = vst.msk [vmem:[%s231] sm:$0xff] %vm300, %v2204
      %2300 = vst.msk [vmem:[%s231 + $0x8] sm:$0xff] %vm300, %v2207
      %2301 = vst.msk [vmem:[%s231 + $0x10] sm:$0xff] %vm300, %v2210
      %2302 = vst.msk [vmem:[%s231 + $0x18] sm:$0xff] %vm300, %v2213
      %2303 = vst.msk [vmem:[%s231 + $0x20] sm:$0xff] %vm300, %v2216
      %2304 = vst.msk [vmem:[%s231 + $0x28] sm:$0xff] %vm300, %v2219
      %2305 = vst.msk [vmem:[%s231 + $0x30] sm:$0xff] %vm300, %v2222
      %2306 = vst.msk [vmem:[%s231 + $0x38] sm:$0xff] %vm300, %v2225
      %2307 = vst.msk [vmem:[%s231 + $0x40] sm:$0xff] %vm300, %v2228
      %2308 = vst.msk [vmem:[%s231 + $0x48] sm:$0xff] %vm300, %v2231
      %2309 = vst.msk [vmem:[%s231 + $0x50] sm:$0xff] %vm300, %v2234
      %2310 = vst.msk [vmem:[%s231 + $0x58] sm:$0xff] %vm300, %v2237
      %2311 = vst.msk [vmem:[%s231 + $0x60] sm:$0xff] %vm300, %v2240
      %2312 = vst.msk [vmem:[%s231 + $0x68] sm:$0xff] %vm300, %v2243
      %2313 = vst.msk [vmem:[%s231 + $0x70] sm:$0xff] %vm300, %v2246
      %2314 = vst.msk [vmem:[%s231 + $0x78] sm:$0xff] %vm300, %v2249
      %2315 = vst.msk [vmem:[%s231 + $0x80] sm:$0xff] %vm300, %v2252
      %2316 = vst.msk [vmem:[%s231 + $0x88] sm:$0xff] %vm300, %v2255
      %2317 = vst.msk [vmem:[%s231 + $0x90] sm:$0xff] %vm300, %v2258
      %2318 = vst.msk [vmem:[%s231 + $0x98] sm:$0xff] %vm300, %v2261
      %2319 = vst.msk [vmem:[%s231 + $0xa0] sm:$0xff] %vm300, %v2264
      %2320 = vst.msk [vmem:[%s231 + $0xa8] sm:$0xff] %vm300, %v2267
      %2321 = vst.msk [vmem:[%s231 + $0xb0] sm:$0xff] %vm300, %v2270
      %2322 = vst.msk [vmem:[%s231 + $0xb8] sm:$0xff] %vm300, %v2273
      %2323 = vst.msk [vmem:[%s231 + $0xc0] sm:$0xff] %vm300, %v2276
      %2324 = vst.msk [vmem:[%s231 + $0xc8] sm:$0xff] %vm300, %v2279
      %2325 = vst.msk [vmem:[%s231 + $0xd0] sm:$0xff] %vm300, %v2282
      %2326 = vst.msk [vmem:[%s231 + $0xd8] sm:$0xff] %vm300, %v2285
      %2327 = vst.msk [vmem:[%s231 + $0xe0] sm:$0xff] %vm300, %v2288
      %2328 = vst.msk [vmem:[%s231 + $0xe8] sm:$0xff] %vm300, %v2291
      %2329 = vst.msk [vmem:[%s231 + $0xf0] sm:$0xff] %vm300, %v2294
      %2330 = vst.msk [vmem:[%s231 + $0xf8] sm:$0xff] %vm300, %v2297
      %v2331 = vsel %vm300, %v2204, 0.0
      %v2332 = vsel %vm300, %v2207, 0.0
      %v2333 = vadd.f32 %v2331, %v2332
      %v2334 = vsel %vm300, %v2210, 0.0
      %v2335 = vadd.f32 %v2333, %v2334
      %v2336 = vsel %vm300, %v2213, 0.0
      %v2337 = vadd.f32 %v2335, %v2336
      %v2338 = vsel %vm300, %v2216, 0.0
      %v2339 = vadd.f32 %v2337, %v2338
      %v2340 = vsel %vm300, %v2219, 0.0
      %v2341 = vadd.f32 %v2339, %v2340
      %v2342 = vsel %vm300, %v2222, 0.0
      %v2343 = vadd.f32 %v2341, %v2342
      %v2344 = vsel %vm300, %v2225, 0.0
      %v2345 = vadd.f32 %v2343, %v2344
      %v2346 = vsel %vm300, %v2228, 0.0
      %v2347 = vadd.f32 %v2345, %v2346
      %v2348 = vsel %vm300, %v2231, 0.0
      %v2349 = vadd.f32 %v2347, %v2348
      %v2350 = vsel %vm300, %v2234, 0.0
      %v2351 = vadd.f32 %v2349, %v2350
      %v2352 = vsel %vm300, %v2237, 0.0
      %v2353 = vadd.f32 %v2351, %v2352
      %v2354 = vsel %vm300, %v2240, 0.0
      %v2355 = vadd.f32 %v2353, %v2354
      %v2356 = vsel %vm300, %v2243, 0.0
      %v2357 = vadd.f32 %v2355, %v2356
      %v2358 = vsel %vm300, %v2246, 0.0
      %v2359 = vadd.f32 %v2357, %v2358
      %v2360 = vsel %vm300, %v2249, 0.0
      %v2361 = vadd.f32 %v2359, %v2360
      %v2362 = vsel %vm300, %v2252, 0.0
      %v2363 = vadd.f32 %v2361, %v2362
      %v2364 = vsel %vm300, %v2255, 0.0
      %v2365 = vadd.f32 %v2363, %v2364
      %v2366 = vsel %vm300, %v2258, 0.0
      %v2367 = vadd.f32 %v2365, %v2366
      %v2368 = vsel %vm300, %v2261, 0.0
      %v2369 = vadd.f32 %v2367, %v2368
      %v2370 = vsel %vm300, %v2264, 0.0
      %v2371 = vadd.f32 %v2369, %v2370
      %v2372 = vsel %vm300, %v2267, 0.0
      %v2373 = vadd.f32 %v2371, %v2372
      %v2374 = vsel %vm300, %v2270, 0.0
      %v2375 = vadd.f32 %v2373, %v2374
      %v2376 = vsel %vm300, %v2273, 0.0
      %v2377 = vadd.f32 %v2375, %v2376
      %v2378 = vsel %vm300, %v2276, 0.0
      %v2379 = vadd.f32 %v2377, %v2378
      %v2380 = vsel %vm300, %v2279, 0.0
      %v2381 = vadd.f32 %v2379, %v2380
      %v2382 = vsel %vm300, %v2282, 0.0
      %v2383 = vadd.f32 %v2381, %v2382
      %v2384 = vsel %vm300, %v2285, 0.0
      %v2385 = vadd.f32 %v2383, %v2384
      %v2386 = vsel %vm300, %v2288, 0.0
      %v2387 = vadd.f32 %v2385, %v2386
      %v2388 = vsel %vm300, %v2291, 0.0
      %v2389 = vadd.f32 %v2387, %v2388
      %v2390 = vsel %vm300, %v2294, 0.0
      %v2391 = vadd.f32 %v2389, %v2390
      %v2392 = vsel %vm300, %v2297, 0.0
      %v2393 = vadd.f32 %v2391, %v2392
      %v2394 = vrot.slane %v2393, 4
      %v2395 = vadd.f32 %v2393, %v2394
      %v2396 = vrot.slane %v2395, 2
      %v2397 = vadd.f32 %v2395, %v2396
      %v2398 = vrot.slane %v2397, 1
      %v2399 = vadd.f32 %v2397, %v2398
      %vm2400 = vcmask 57344
      %2401 = vst.msk [vmem:[%s235] sm:$0x1] %vm2400, %v2399
      %v2402 = vmul.f32 %v2204, %v2204
      %v2403 = vmul.f32 %v2207, %v2207
      %v2404 = vmul.f32 %v2210, %v2210
      %v2405 = vmul.f32 %v2213, %v2213
      %v2406 = vmul.f32 %v2216, %v2216
      %v2407 = vmul.f32 %v2219, %v2219
      %v2408 = vmul.f32 %v2222, %v2222
      %v2409 = vmul.f32 %v2225, %v2225
      %v2410 = vmul.f32 %v2228, %v2228
      %v2411 = vmul.f32 %v2231, %v2231
      %v2412 = vmul.f32 %v2234, %v2234
      %v2413 = vmul.f32 %v2237, %v2237
      %v2414 = vmul.f32 %v2240, %v2240
      %v2415 = vmul.f32 %v2243, %v2243
      %v2416 = vmul.f32 %v2246, %v2246
      %v2417 = vmul.f32 %v2249, %v2249
      %v2418 = vmul.f32 %v2252, %v2252
      %v2419 = vmul.f32 %v2255, %v2255
      %v2420 = vmul.f32 %v2258, %v2258
      %v2421 = vmul.f32 %v2261, %v2261
      %v2422 = vmul.f32 %v2264, %v2264
      %v2423 = vmul.f32 %v2267, %v2267
      %v2424 = vmul.f32 %v2270, %v2270
      %v2425 = vmul.f32 %v2273, %v2273
      %v2426 = vmul.f32 %v2276, %v2276
      %v2427 = vmul.f32 %v2279, %v2279
      %v2428 = vmul.f32 %v2282, %v2282
      %v2429 = vmul.f32 %v2285, %v2285
      %v2430 = vmul.f32 %v2288, %v2288
      %v2431 = vmul.f32 %v2291, %v2291
      %v2432 = vmul.f32 %v2294, %v2294
      %v2433 = vmul.f32 %v2297, %v2297
      %v2434 = vsel %vm300, %v2402, 0.0
      %v2435 = vsel %vm300, %v2403, 0.0
      %v2436 = vadd.f32 %v2434, %v2435
      %v2437 = vsel %vm300, %v2404, 0.0
      %v2438 = vadd.f32 %v2436, %v2437
      %v2439 = vsel %vm300, %v2405, 0.0
      %v2440 = vadd.f32 %v2438, %v2439
      %v2441 = vsel %vm300, %v2406, 0.0
      %v2442 = vadd.f32 %v2440, %v2441
      %v2443 = vsel %vm300, %v2407, 0.0
      %v2444 = vadd.f32 %v2442, %v2443
      %v2445 = vsel %vm300, %v2408, 0.0
      %v2446 = vadd.f32 %v2444, %v2445
      %v2447 = vsel %vm300, %v2409, 0.0
      %v2448 = vadd.f32 %v2446, %v2447
      %v2449 = vsel %vm300, %v2410, 0.0
      %v2450 = vadd.f32 %v2448, %v2449
      %v2451 = vsel %vm300, %v2411, 0.0
      %v2452 = vadd.f32 %v2450, %v2451
      %v2453 = vsel %vm300, %v2412, 0.0
      %v2454 = vadd.f32 %v2452, %v2453
      %v2455 = vsel %vm300, %v2413, 0.0
      %v2456 = vadd.f32 %v2454, %v2455
      %v2457 = vsel %vm300, %v2414, 0.0
      %v2458 = vadd.f32 %v2456, %v2457
      %v2459 = vsel %vm300, %v2415, 0.0
      %v2460 = vadd.f32 %v2458, %v2459
      %v2461 = vsel %vm300, %v2416, 0.0
      %v2462 = vadd.f32 %v2460, %v2461
      %v2463 = vsel %vm300, %v2417, 0.0
      %v2464 = vadd.f32 %v2462, %v2463
      %v2465 = vsel %vm300, %v2418, 0.0
      %v2466 = vadd.f32 %v2464, %v2465
      %v2467 = vsel %vm300, %v2419, 0.0
      %v2468 = vadd.f32 %v2466, %v2467
      %v2469 = vsel %vm300, %v2420, 0.0
      %v2470 = vadd.f32 %v2468, %v2469
      %v2471 = vsel %vm300, %v2421, 0.0
      %v2472 = vadd.f32 %v2470, %v2471
      %v2473 = vsel %vm300, %v2422, 0.0
      %v2474 = vadd.f32 %v2472, %v2473
      %v2475 = vsel %vm300, %v2423, 0.0
      %v2476 = vadd.f32 %v2474, %v2475
      %v2477 = vsel %vm300, %v2424, 0.0
      %v2478 = vadd.f32 %v2476, %v2477
      %v2479 = vsel %vm300, %v2425, 0.0
      %v2480 = vadd.f32 %v2478, %v2479
      %v2481 = vsel %vm300, %v2426, 0.0
      %v2482 = vadd.f32 %v2480, %v2481
      %v2483 = vsel %vm300, %v2427, 0.0
      %v2484 = vadd.f32 %v2482, %v2483
      %v2485 = vsel %vm300, %v2428, 0.0
      %v2486 = vadd.f32 %v2484, %v2485
      %v2487 = vsel %vm300, %v2429, 0.0
      %v2488 = vadd.f32 %v2486, %v2487
      %v2489 = vsel %vm300, %v2430, 0.0
      %v2490 = vadd.f32 %v2488, %v2489
      %v2491 = vsel %vm300, %v2431, 0.0
      %v2492 = vadd.f32 %v2490, %v2491
      %v2493 = vsel %vm300, %v2432, 0.0
      %v2494 = vadd.f32 %v2492, %v2493
      %v2495 = vsel %vm300, %v2433, 0.0
      %v2496 = vadd.f32 %v2494, %v2495
      %v2497 = vrot.slane %v2496, 4
      %v2498 = vadd.f32 %v2496, %v2497
      %v2499 = vrot.slane %v2498, 2
      %v2500 = vadd.f32 %v2498, %v2499
      %v2501 = vrot.slane %v2500, 1
      %v2502 = vadd.f32 %v2500, %v2501
      %2503 = vst.msk [vmem:[%s235 + $0x1] sm:$0x1] %vm2400, %v2502
      %p2504 = scmp.lt.s32.totalorder %s17, 1
      %s2505 = scalar_select %p2504, %s17, 1
      %s2506 = smul.addr %s2505, 32
      %s2507 = smul.addr %s2506, 8
      %s2508 = scalar_lea.vmem %s4, %s2507
      %p2509 = scmp.lt.s32.totalorder %s17, 1
      %s2510 = scalar_select %p2509, %s17, 1
      %s2511 = smul.addr %s2510, 2
      %s2512 = scalar_lea.vmem %s5, %s2511
      // Predicated region
      $region37: #{sep_conv_forward.3} parent=35 // pred_check
        %p2513 = pneg %p124
      $region38: #{sep_conv_forward.3} parent=35 // pred_check_branch
        %2515 = sbr.rel (%p2513) target = $region40
      $region39: #{sep_conv_forward.3} parent=35 // pred_region
        _
      $region40: #{sep_conv_forward.3} parent=35 // pred_fallthru
        _
      // Predicated region
      $region41: #{sep_conv_forward.3} parent=35 // pred_check
        %p2516 = pneg %p150
      $region42: #{sep_conv_forward.3} parent=35 // pred_check_branch
        %2518 = sbr.rel (%p2516) target = $region44
      $region43: #{sep_conv_forward.3} parent=35 // pred_region
        _
      $region44: #{sep_conv_forward.3} parent=35 // pred_fallthru
        _
    $region36: #{sep_conv_forward.3} parent=5 // pred_fallthru
      _
    %p2519 = scmp.le.s32.totalorder 2, %s12
    // Predicated region
    $region45: #{sep_conv_forward.3} parent=5 // pred_check
      %p2520 = pneg %p2519
    $region46: #{sep_conv_forward.3} parent=5 // pred_check_branch
      %2522 = sbr.rel (%p2520) target = $region48
    $region47: #{sep_conv_forward.3} parent=5 // pred_region
      %s2523 = ssub.s32 %s12, 2
      // Predicated region
      $region49: #{sep_conv_forward.3} parent=47 // pred_check
        %p2524 = pneg %p130
      $region50: #{sep_conv_forward.3} parent=47 // pred_check_branch
        %2526 = sbr.rel (%p2524) target = $region52
      $region51: #{sep_conv_forward.3} parent=47 // pred_region
        %p2527 = scmp.lt.s32.totalorder %s18, 1
        %s2528 = scalar_select %p2527, %s18, 1
        %s2529 = smul.addr %s2528, 32
        %s2530 = smul.addr %s2529, 8
        %s2531 = scalar_lea.vmem %s4, %s2530
      $region52: #{sep_conv_forward.3} parent=47 // pred_fallthru
        _
      // Predicated region
      $region53: #{sep_conv_forward.3} parent=47 // pred_check
        %p2532 = pneg %p156
      $region54: #{sep_conv_forward.3} parent=47 // pred_check_branch
        %2534 = sbr.rel (%p2532) target = $region56
      $region55: #{sep_conv_forward.3} parent=47 // pred_region
        %p2535 = scmp.lt.s32.totalorder %s18, 1
        %s2536 = scalar_select %p2535, %s18, 1
        %s2537 = smul.addr %s2536, 2
        %s2538 = scalar_lea.vmem %s5, %s2537
      $region56: #{sep_conv_forward.3} parent=47 // pred_fallthru
        _
    $region48: #{sep_conv_forward.3} parent=5 // pred_fallthru
      _
  $region6: #{sep_conv_forward.3} parent=0 // loop_footer
    %s16 = sadd.s32 1, %s12
  $region7: #{sep_conv_forward.3} parent=0 // loop_footer_branch
    %11 = sbr.rel target = $region3
  $region8: #{sep_conv_forward.3} parent=0 // loop_exit
    _

// kernel: sep_conv_forward.4
$region0: #{sep_conv_forward.4}
  #allocation0 [shape = 'u32[]', space=smem, size = 0x4, offset = 0x4, fixed_abs, tag = 'smem constant byte address 0x4 - core index']
  #allocation1 [shape = 'u32[72,128]{1,0:T(1,128)}', space=vmem, size = 0x9000, scoped, tag = 'internal scratch']
  #allocation2 [shape = 'f32[18,18,8]{2,1,0:T(8,128)}', space=vmem, size = 0x36000, scoped, tag = 'scratch operand']
  %s0 = inlined_call_operand.vmem [shape: f32[2,16,16,8], index: 0, kind: input, shape index: {}]
  %s1 = inlined_call_operand.vmem [shape: f32[3,3,8], index: 1, kind: input, shape index: {}]
  %s2 = inlined_call_operand.vmem [shape: f32[8,8], index: 2, kind: input, shape index: {}]
  %s3 = inlined_call_operand.vmem [shape: f32[2,8], index: 3, kind: input, shape index: {}]
  %s4 = inlined_call_operand.vmem [shape: f32[2,16,16,8], index: 4, kind: output, shape index: {0}]
  %s5 = inlined_call_operand.vmem [shape: f32[2,2,8], index: 5, kind: output, shape index: {1}]
  %6 = xla_tuple %s4, %s5
  %s7 = sld [smem:[#allocation0]]
  $region57: #{sep_conv_forward.4} parent=0
    _
  %s9 = ssub.s32 1, %s7
  %s10 = scalar_select 0, %s9, %s7
  loop: start=0, step=1, limit=4
  $region2: #{sep_conv_forward.4} parent=0 // loop_pre_header
    _
  $region3: #{sep_conv_forward.4} parent=0 // loop_header
    %s12 = sphi 0, %s16
    %p13 = scmp.ge.s32.totalorder %s12, 4
    %s22 = sphi 0, %s24
    %s25 = sphi 0, %s22
    %s26 = sphi 0, %s25
    %s42 = sphi 0, %s26
    %s46 = sphi 0, %s46
    %s48 = sphi 0, %s46
    %s49 = sphi 0, %s48
    %s63 = sphi 0, %s49
    %s67 = sphi 0, %s67
    %s69 = sphi 0, %s67
    %s70 = sphi 0, %s69
    %s84 = sphi 0, %s70
    %s88 = sphi 0, %s88
    %s90 = sphi 0, %s88
    %s91 = sphi 0, %s90
    %s105 = sphi 0, %s91
    %s111 = sphi 0, %s113
    %s114 = sphi 0, %s111
    %s115 = sphi 0, %s114
    %s131 = sphi 0, %s115
    %s137 = sphi 0, %s139
    %s140 = sphi 0, %s137
    %s141 = sphi 0, %s140
    %s157 = sphi 0, %s141
  $region4: #{sep_conv_forward.4} parent=0 // loop_header_branch
    %15 = sbr.rel (%p13) target = $region8
  $region5: #{sep_conv_forward.4} parent=0 // loop_body
    %s17 = ssub.s32 %s12, 1
    %s18 = ssub.s32 %s12, 2
    %s19 = sadd.s32 %s12, 1
    %s20 = ssub.s32 %s12, %s19
    %p21 = scmp.eq.s32.totalorder %s20, 0
    %s23 = sadd.s32 %s22, 1
    %s24 = scalar_select %p21, %s22, %s23
    %p27 = pneg %p21
    %p28 = scmp.eq.s32.totalorder %s12, 1
    %p29 = por %p27, %p28
    %p30 = scmp.ne.s32.totalorder %s22, %s25
    %p31 = scmp.eq.s32.totalorder %s12, 0
    %p32 = por %p30, %p31
    %p33 = scmp.ne.s32.totalorder %s22, %s25
    %p34 = scmp.eq.s32.totalorder %s17, 1
    %p35 = por %p33, %p34
    %p36 = scmp.ne.s32.totalorder %s25, %s26
    %p37 = scmp.eq.s32.totalorder %s17, 0
    %p38 = por %p36, %p37
    %p39 = scmp.ne.s32.totalorder %s25, %s26
    %p40 = scmp.eq.s32.totalorder %s18, 1
    %p41 = por %p39, %p40
    %p43 = scmp.ne.s32.totalorder %s26, %s42
    %p44 = scmp.eq.s32.totalorder %s18, 0
    %p45 = por %p43, %p44
    %s47 = sadd.s32 %s46, 1
    %p50 = scmp.eq.s32.totalorder %s12, 1
    %p51 = scmp.ne.s32.totalorder %s46, %s48
    %p52 = scmp.eq.s32.totalorder %s12, 0
    %p53 = por %p51, %p52
    %p54 = scmp.ne.s32.totalorder %s46, %s48
    %p55 = scmp.eq.s32.totalorder %s17, 1
    %p56 = por %p54, %p55
    %p57 = scmp.ne.s32.totalorder %s48, %s49
    %p58 = scmp.eq.s32.totalorder %s17, 0
    %p59 = por %p57, %p58
    %p60 = scmp.ne.s32.totalorder %s48, %s49
    %p61 = scmp.eq.s32.totalorder %s18, 1
    %p62 = por %p60, %p61
    %p64 = scmp.ne.s32.totalorder %s49, %s63
    %p65 = scmp.eq.s32.totalorder %s18, 0
    %p66 = por %p64, %p65
    %s68 = sadd.s32 %s67, 1
    %p71 = scmp.eq.s32.totalorder %s12, 1
    %p72 = scmp.ne.s32.totalorder %s67, %s69
    %p73 = scmp.eq.s32.totalorder %s12, 0
    %p74 = por %p72, %p73
    %p75 = scmp.ne.s32.totalorder %s67, %s69
    %p76 = scmp.eq.s32.totalorder %s17, 1
    %p77 = por %p75, %p76
    %p78 = scmp.ne.s32.totalorder %s69, %s70
    %p79 = scmp.eq.s32.totalorder %s17, 0
    %p80 = por %p78, %p79
    %p81 = scmp.ne.s32.totalorder %s69, %s70
    %p82 = scmp.eq.s32.totalorder %s18, 1
    %p83 = por %p81, %p82
    %p85 = scmp.ne.s32.totalorder %s70, %s84
    %p86 = scmp.eq.s32.totalorder %s18, 0
    %p87 = por %p85, %p86
    %s89 = sadd.s32 %s88, 1
    %p92 = scmp.eq.s32.totalorder %s12, 1
    %p93 = scmp.ne.s32.totalorder %s88, %s90
    %p94 = scmp.eq.s32.totalorder %s12, 0
    %p95 = por %p93, %p94
    %p96 = scmp.ne.s32.totalorder %s88, %s90
    %p97 = scmp.eq.s32.totalorder %s17, 1
    %p98 = por %p96, %p97
    %p99 = scmp.ne.s32.totalorder %s90, %s91
    %p100 = scmp.eq.s32.totalorder %s17, 0
    %p101 = por %p99, %p100
    %p102 = scmp.ne.s32.totalorder %s90, %s91
    %p103 = scmp.eq.s32.totalorder %s18, 1
    %p104 = por %p102, %p103
    %p106 = scmp.ne.s32.totalorder %s91, %s105
    %p107 = scmp.eq.s32.totalorder %s18, 0
    %p108 = por %p106, %p107
    %s109 = ssub.s32 %s12, %s19
    %p110 = scmp.eq.s32.totalorder %s109, 0
    %s112 = sadd.s32 %s111, 1
    %s113 = scalar_select %p110, %s111, %s112
    %p116 = pneg %p110
    %p117 = scmp.eq.s32.totalorder %s12, 1
    %p118 = por %p116, %p117
    %p119 = scmp.ne.s32.totalorder %s111, %s114
    %p120 = scmp.eq.s32.totalorder %s12, 0
    %p121 = por %p119, %p120
    %p122 = scmp.ne.s32.totalorder %s111, %s114
    %p123 = scmp.eq.s32.totalorder %s17, 1
    %p124 = por %p122, %p123
    %p125 = scmp.ne.s32.totalorder %s114, %s115
    %p126 = scmp.eq.s32.totalorder %s17, 0
    %p127 = por %p125, %p126
    %p128 = scmp.ne.s32.totalorder %s114, %s115
    %p129 = scmp.eq.s32.totalorder %s18, 1
    %p130 = por %p128, %p129
    %p132 = scmp.ne.s32.totalorder %s115, %s131
    %p133 = scmp.eq.s32.totalorder %s18, 0
    %p134 = por %p132, %p133
    %s135 = ssub.s32 %s12, %s19
    %p136 = scmp.eq.s32.totalorder %s135, 0
    %s138 = sadd.s32 %s137, 1
    %s139 = scalar_select %p136, %s137, %s138
    %p142 = pneg %p136
    %p143 = scmp.eq.s32.totalorder %s12, 1
    %p144 = por %p142, %p143
    %p145 = scmp.ne.s32.totalorder %s137, %s140
    %p146 = scmp.eq.s32.totalorder %s12, 0
    %p147 = por %p145, %p146
    %p148 = scmp.ne.s32.totalorder %s137, %s140
    %p149 = scmp.eq.s32.totalorder %s17, 1
    %p150 = por %p148, %p149
    %p151 = scmp.ne.s32.totalorder %s140, %s141
    %p152 = scmp.eq.s32.totalorder %s17, 0
    %p153 = por %p151, %p152
    %p154 = scmp.ne.s32.totalorder %s140, %s141
    %p155 = scmp.eq.s32.totalorder %s18, 1
    %p156 = por %p154, %p155
    %p158 = scmp.ne.s32.totalorder %s141, %s157
    %p159 = scmp.eq.s32.totalorder %s18, 0
    %p160 = por %p158, %p159
    %p161 = scmp.le.s32.totalorder 1, %s12
    %p162 = scmp.lt.s32.totalorder %s12, 3
    %p163 = pnand %p161, %p162
    %p164 = pneg %p163
    // Predicated region
    $region9: #{sep_conv_forward.4} parent=5 // pred_check
      _
    $region10: #{sep_conv_forward.4} parent=5 // pred_check_branch
      %166 = sbr.rel (%p163) target = $region12
    $region11: #{sep_conv_forward.4} parent=5 // pred_region
      %s167 = ssub.s32 %s12, 1
      // Predicated region
      $region13: #{sep_conv_forward.4} parent=11 // pred_check
        %p168 = pneg %p59
      $region14: #{sep_conv_forward.4} parent=11 // pred_check_branch
        %170 = sbr.rel (%p168) target = $region16
      $region15: #{sep_conv_forward.4} parent=11 // pred_region
        _
      $region16: #{sep_conv_forward.4} parent=11 // pred_fallthru
        _
      // Predicated region
      $region17: #{sep_conv_forward.4} parent=11 // pred_check
        %p171 = pneg %p80
      $region18: #{sep_conv_forward.4} parent=11 // pred_check_branch
        %173 = sbr.rel (%p171) target = $region20
      $region19: #{sep_conv_forward.4} parent=11 // pred_region
        _
      $region20: #{sep_conv_forward.4} parent=11 // pred_fallthru
        _
      // Predicated region
      $region21: #{sep_conv_forward.4} parent=11 // pred_check
        %p174 = pneg %p101
      $region22: #{sep_conv_forward.4} parent=11 // pred_check_branch
        %176 = sbr.rel (%p174) target = $region24
      $region23: #{sep_conv_forward.4} parent=11 // pred_region
        _
      $region24: #{sep_conv_forward.4} parent=11 // pred_fallthru
        _
    $region12: #{sep_conv_forward.4} parent=5 // pred_fallthru
      _
    %p177 = scmp.lt.s32.totalorder %s12, 2
    // Predicated region
    $region25: #{sep_conv_forward.4} parent=5 // pred_check
      %p178 = pneg %p177
    $region26: #{sep_conv_forward.4} parent=5 // pred_check_branch
      %180 = sbr.rel (%p178) target = $region28
    $region27: #{sep_conv_forward.4} parent=5 // pred_region
      // Predicated region
      $region29: #{sep_conv_forward.4} parent=27 // pred_check
        %p181 = pneg %p32
      $region30: #{sep_conv_forward.4} parent=27 // pred_check_branch
        %183 = sbr.rel (%p181) target = $region32
      $region31: #{sep_conv_forward.4} parent=27 // pred_region
        %p184 = scmp.lt.s32.totalorder %s12, 1
        %s185 = scalar_select %p184, %s12, 1
        %s186 = smul.addr %s185, 32
        %s187 = smul.addr %s186, 8
        %s188 = scalar_lea.vmem %s0, %s187
      $region32: #{sep_conv_forward.4} parent=27 // pred_fallthru
        _
    $region28: #{sep_conv_forward.4} parent=5 // pred_fallthru
      _
    %p189 = scmp.le.s32.totalorder 1, %s12
    %p190 = scmp.lt.s32.totalorder %s12, 3
    %p191 = pnand %p189, %p190
    %p192 = pneg %p191
    // Predicated region
    $region33: #{sep_conv_forward.4} parent=5 // pred_check
      _
    $region34: #{sep_conv_forward.4} parent=5 // pred_check_branch
      %194 = sbr.rel (%p191) target = $region36
    $region35: #{sep_conv_forward.4} parent=5 // pred_region
      %s195 = ssub.s32 %s12, 1
      %p196 = scmp.lt.s32.totalorder %s17, 1
      %s197 = scalar_select %p196, %s17, 1
      %s198 = smul.addr %s197, 32
      %s199 = smul.addr %s198, 8
      %s200 = scalar_lea.vmem %s0, %s199
      %p201 = pneg %p38
      %p202 = pneg %p35
      %p203 = pneg %p59
      %p204 = pneg %p56
      %p205 = pneg %p80
      %p206 = pneg %p77
      %p207 = pneg %p101
      %p208 = pneg %p98
      %p209 = pneg %p127
      %p210 = pneg %p124
      %p211 = scmp.lt.s32.totalorder %s17, 1
      %s212 = scalar_select %p211, %s17, 1
      %s213 = smul.addr %s212, 32
      %s214 = smul.addr %s213, 8
      %s215 = scalar_lea.vmem %s4, %s214
      %p216 = pneg %p153
      %p217 = pneg %p150
      %p218 = scmp.lt.s32.totalorder %s17, 1
      %s219 = scalar_select %p218, %s17, 1
      %s220 = smul.addr %s219, 2
      %s221 = scalar_lea.vmem %s5, %s220
      %p222 = scmp.lt.s32.totalorder %s17, 1
      %s223 = scalar_select %p222, %s17, 1
      %s224 = smul.addr %s223, 32
      %s225 = smul.addr %s224, 8
      %s226 = scalar_lea.vmem %s0, %s225
      %p227 = scmp.lt.s32.totalorder %s17, 1
      %s228 = scalar_select %p227, %s17, 1
      %s229 = smul.addr %s228, 32
      %s230 = smul.addr %s229, 8
      %s231 = scalar_lea.vmem %s4, %s230
      %p232 = scmp.lt.s32.totalorder %s17, 1
      %s233 = scalar_select %p232, %s17, 1
      %s234 = smul.addr %s233, 2
      %s235 = scalar_lea.vmem %s5, %s234
      %v236 = vld [vmem:[%s226] sm:$0xff]
      %v237 = vld [vmem:[%s226 + $0x8] sm:$0xff]
      %v238 = vld [vmem:[%s226 + $0x10] sm:$0xff]
      %v239 = vld [vmem:[%s226 + $0x18] sm:$0xff]
      %v240 = vld [vmem:[%s226 + $0x20] sm:$0xff]
      %v241 = vld [vmem:[%s226 + $0x28] sm:$0xff]
      %v242 = vld [vmem:[%s226 + $0x30] sm:$0xff]
      %v243 = vld [vmem:[%s226 + $0x38] sm:$0xff]
      %v244 = vld [vmem:[%s226 + $0x40] sm:$0xff]
      %v245 = vld [vmem:[%s226 + $0x48] sm:$0xff]
      %v246 = vld [vmem:[%s226 + $0x50] sm:$0xff]
      %v247 = vld [vmem:[%s226 + $0x58] sm:$0xff]
      %v248 = vld [vmem:[%s226 + $0x60] sm:$0xff]
      %v249 = vld [vmem:[%s226 + $0x68] sm:$0xff]
      %v250 = vld [vmem:[%s226 + $0x70] sm:$0xff]
      %v251 = vld [vmem:[%s226 + $0x78] sm:$0xff]
      %v252 = vld [vmem:[%s226 + $0x80] sm:$0xff]
      %v253 = vld [vmem:[%s226 + $0x88] sm:$0xff]
      %v254 = vld [vmem:[%s226 + $0x90] sm:$0xff]
      %v255 = vld [vmem:[%s226 + $0x98] sm:$0xff]
      %v256 = vld [vmem:[%s226 + $0xa0] sm:$0xff]
      %v257 = vld [vmem:[%s226 + $0xa8] sm:$0xff]
      %v258 = vld [vmem:[%s226 + $0xb0] sm:$0xff]
      %v259 = vld [vmem:[%s226 + $0xb8] sm:$0xff]
      %v260 = vld [vmem:[%s226 + $0xc0] sm:$0xff]
      %v261 = vld [vmem:[%s226 + $0xc8] sm:$0xff]
      %v262 = vld [vmem:[%s226 + $0xd0] sm:$0xff]
      %v263 = vld [vmem:[%s226 + $0xd8] sm:$0xff]
      %v264 = vld [vmem:[%s226 + $0xe0] sm:$0xff]
      %v265 = vld [vmem:[%s226 + $0xe8] sm:$0xff]
      %v266 = vld [vmem:[%s226 + $0xf0] sm:$0xff]
      %v267 = vld [vmem:[%s226 + $0xf8] sm:$0xff]
      %v268 = vld [vmem:[%s3] sm:$0x1]
      %v269 = vld [vmem:[%s3 + $0x1] sm:$0x1]
      %v270 = vperm.slane %v268, 0
      %v271 = vsub.f32 %v236, %v270
      %v272 = vsub.f32 %v237, %v270
      %v273 = vsub.f32 %v238, %v270
      %v274 = vsub.f32 %v239, %v270
      %v275 = vsub.f32 %v240, %v270
      %v276 = vsub.f32 %v241, %v270
      %v277 = vsub.f32 %v242, %v270
      %v278 = vsub.f32 %v243, %v270
      %v279 = vsub.f32 %v244, %v270
      %v280 = vsub.f32 %v245, %v270
      %v281 = vsub.f32 %v246, %v270
      %v282 = vsub.f32 %v247, %v270
      %v283 = vsub.f32 %v248, %v270
      %v284 = vsub.f32 %v249, %v270
      %v285 = vsub.f32 %v250, %v270
      %v286 = vsub.f32 %v251, %v270
      %v287 = vsub.f32 %v252, %v270
      %v288 = vsub.f32 %v253, %v270
      %v289 = vsub.f32 %v254, %v270
      %v290 = vsub.f32 %v255, %v270
      %v291 = vsub.f32 %v256, %v270
      %v292 = vsub.f32 %v257, %v270
      %v293 = vsub.f32 %v258, %v270
      %v294 = vsub.f32 %v259, %v270
      %v295 = vsub.f32 %v260, %v270
      %v296 = vsub.f32 %v261, %v270
      %v297 = vsub.f32 %v262, %v270
      %v298 = vsub.f32 %v263, %v270
      %v299 = vsub.f32 %v264, %v270
      %v300 = vsub.f32 %v265, %v270
      %v301 = vsub.f32 %v266, %v270
      %v302 = vsub.f32 %v267, %v270
      %v303 = vperm.slane %v269, 0
      %v304 = vmul.f32 %v271, %v303
      %v305 = vmul.f32 %v272, %v303
      %v306 = vmul.f32 %v273, %v303
      %v307 = vmul.f32 %v274, %v303
      %v308 = vmul.f32 %v275, %v303
      %v309 = vmul.f32 %v276, %v303
      %v310 = vmul.f32 %v277, %v303
      %v311 = vmul.f32 %v278, %v303
      %v312 = vmul.f32 %v279, %v303
      %v313 = vmul.f32 %v280, %v303
      %v314 = vmul.f32 %v281, %v303
      %v315 = vmul.f32 %v282, %v303
      %v316 = vmul.f32 %v283, %v303
      %v317 = vmul.f32 %v284, %v303
      %v318 = vmul.f32 %v285, %v303
      %v319 = vmul.f32 %v286, %v303
      %v320 = vmul.f32 %v287, %v303
      %v321 = vmul.f32 %v288, %v303
      %v322 = vmul.f32 %v289, %v303
      %v323 = vmul.f32 %v290, %v303
      %v324 = vmul.f32 %v291, %v303
      %v325 = vmul.f32 %v292, %v303
      %v326 = vmul.f32 %v293, %v303
      %v327 = vmul.f32 %v294, %v303
      %v328 = vmul.f32 %v295, %v303
      %v329 = vmul.f32 %v296, %v303
      %v330 = vmul.f32 %v297, %v303
      %v331 = vmul.f32 %v298, %v303
      %v332 = vmul.f32 %v299, %v303
      %v333 = vmul.f32 %v300, %v303
      %v334 = vmul.f32 %v301, %v303
      %v335 = vmul.f32 %v302, %v303
      %v336 = vmax.f32 %v304, 0.0
      %v337 = vmax.f32 %v305, 0.0
      %v338 = vmax.f32 %v306, 0.0
      %v339 = vmax.f32 %v307, 0.0
      %v340 = vmax.f32 %v308, 0.0
      %v341 = vmax.f32 %v309, 0.0
      %v342 = vmax.f32 %v310, 0.0
      %v343 = vmax.f32 %v311, 0.0
      %v344 = vmax.f32 %v312, 0.0
      %v345 = vmax.f32 %v313, 0.0
      %v346 = vmax.f32 %v314, 0.0
      %v347 = vmax.f32 %v315, 0.0
      %v348 = vmax.f32 %v316, 0.0
      %v349 = vmax.f32 %v317, 0.0
      %v350 = vmax.f32 %v318, 0.0
      %v351 = vmax.f32 %v319, 0.0
      %v352 = vmax.f32 %v320, 0.0
      %v353 = vmax.f32 %v321, 0.0
      %v354 = vmax.f32 %v322, 0.0
      %v355 = vmax.f32 %v323, 0.0
      %v356 = vmax.f32 %v324, 0.0
      %v357 = vmax.f32 %v325, 0.0
      %v358 = vmax.f32 %v326, 0.0
      %v359 = vmax.f32 %v327, 0.0
      %v360 = vmax.f32 %v328, 0.0
      %v361 = vmax.f32 %v329, 0.0
      %v362 = vmax.f32 %v330, 0.0
      %v363 = vmax.f32 %v331, 0.0
      %v364 = vmax.f32 %v332, 0.0
      %v365 = vmax.f32 %v333, 0.0
      %v366 = vmax.f32 %v334, 0.0
      %v367 = vmax.f32 %v335, 0.0
      %vm368 = vcmask 64512
      %369 = vst.msk [vmem:[#allocation2] sm:$0xff] %vm368, 0.0
      %370 = vst.msk [vmem:[#allocation2 + $0x8] sm:$0xff] %vm368, 0.0
      %vm371 = vcmask 58368
      %372 = vst.msk [vmem:[#allocation2 + $0x10] sm:$0x3] %vm371, 0.0
      %373 = vst.msk [vmem:[#allocation2 + $0x18] sm:$0xff] %vm368, 0.0
      %374 = vst.msk [vmem:[#allocation2 + $0x20] sm:$0xff] %vm368, 0.0
      %375 = vst.msk [vmem:[#allocation2 + $0x28] sm:$0x3] %vm371, 0.0
      %376 = vst.msk [vmem:[#allocation2 + $0x30] sm:$0xff] %vm368, 0.0
      %377 = vst.msk [vmem:[#allocation2 + $0x38] sm:$0xff] %vm368, 0.0
      %378 = vst.msk [vmem:[#allocation2 + $0x40] sm:$0x3] %vm371, 0.0
      %379 = vst.msk [vmem:[#allocation2 + $0x48] sm:$0xff] %vm368, 0.0
      %380 = vst.msk [vmem:[#allocation2 + $0x50] sm:$0xff] %vm368, 0.0
      %381 = vst.msk [vmem:[#allocation2 + $0x58] sm:$0x3] %vm371, 0.0
      %382 = vst.msk [vmem:[#allocation2 + $0x60] sm:$0xff] %vm368, 0.0
      %383 = vst.msk [vmem:[#allocation2 + $0x68] sm:$0xff] %vm368, 0.0
      %384 = vst.msk [vmem:[#allocation2 + $0x70] sm:$0x3] %vm371, 0.0
      %385 = vst.msk [vmem:[#allocation2 + $0x78] sm:$0xff] %vm368, 0.0
      %386 = vst.msk [vmem:[#allocation2 + $0x80] sm:$0xff] %vm368, 0.0
      %387 = vst.msk [vmem:[#allocation2 + $0x88] sm:$0x3] %vm371, 0.0
      %388 = vst.msk [vmem:[#allocation2 + $0x90] sm:$0xff] %vm368, 0.0
      %389 = vst.msk [vmem:[#allocation2 + $0x98] sm:$0xff] %vm368, 0.0
      %390 = vst.msk [vmem:[#allocation2 + $0xa0] sm:$0x3] %vm371, 0.0
      %391 = vst.msk [vmem:[#allocation2 + $0xa8] sm:$0xff] %vm368, 0.0
      %392 = vst.msk [vmem:[#allocation2 + $0xb0] sm:$0xff] %vm368, 0.0
      %393 = vst.msk [vmem:[#allocation2 + $0xb8] sm:$0x3] %vm371, 0.0
      %394 = vst.msk [vmem:[#allocation2 + $0xc0] sm:$0xff] %vm368, 0.0
      %395 = vst.msk [vmem:[#allocation2 + $0xc8] sm:$0xff] %vm368, 0.0
      %396 = vst.msk [vmem:[#allocation2 + $0xd0] sm:$0x3] %vm371, 0.0
      %397 = vst.msk [vmem:[#allocation2 + $0xd8] sm:$0xff] %vm368, 0.0
      %398 = vst.msk [vmem:[#allocation2 + $0xe0] sm:$0xff] %vm368, 0.0
      %399 = vst.msk [vmem:[#allocation2 + $0xe8] sm:$0x3] %vm371, 0.0
      %400 = vst.msk [vmem:[#allocation2 + $0xf0] sm:$0xff] %vm368, 0.0
      %401 = vst.msk [vmem:[#allocation2 + $0xf8] sm:$0xff] %vm368, 0.0
      %402 = vst.msk [vmem:[#allocation2 + $0x100] sm:$0x3] %vm371, 0.0
      %403 = vst.msk [vmem:[#allocation2 + $0x108] sm:$0xff] %vm368, 0.0
      %404 = vst.msk [vmem:[#allocation2 + $0x110] sm:$0xff] %vm368, 0.0
      %405 = vst.msk [vmem:[#allocation2 + $0x118] sm:$0x3] %vm371, 0.0
      %406 = vst.msk [vmem:[#allocation2 + $0x120] sm:$0xff] %vm368, 0.0
      %407 = vst.msk [vmem:[#allocation2 + $0x128] sm:$0xff] %vm368, 0.0
      %408 = vst.msk [vmem:[#allocation2 + $0x130] sm:$0x3] %vm371, 0.0
      %409 = vst.msk [vmem:[#allocation2 + $0x138] sm:$0xff] %vm368, 0.0
      %410 = vst.msk [vmem:[#allocation2 + $0x140] sm:$0xff] %vm368, 0.0
      %411 = vst.msk [vmem:[#allocation2 + $0x148] sm:$0x3] %vm371, 0.0
      %412 = vst.msk [vmem:[#allocation2 + $0x150] sm:$0xff] %vm368, 0.0
      %413 = vst.msk [vmem:[#allocation2 + $0x158] sm:$0xff] %vm368, 0.0
      %414 = vst.msk [vmem:[#allocation2 + $0x160] sm:$0x3] %vm371, 0.0
      %415 = vst.msk [vmem:[#allocation2 + $0x168] sm:$0xff] %vm368, 0.0
      %416 = vst.msk [vmem:[#allocation2 + $0x170] sm:$0xff] %vm368, 0.0
      %417 = vst.msk [vmem:[#allocation2 + $0x178] sm:$0x3] %vm371, 0.0
      %418 = vst.msk [vmem:[#allocation2 + $0x180] sm:$0xff] %vm368, 0.0
      %419 = vst.msk [vmem:[#allocation2 + $0x188] sm:$0xff] %vm368, 0.0
      %420 = vst.msk [vmem:[#allocation2 + $0x190] sm:$0x3] %vm371, 0.0
      %421 = vst.msk [vmem:[#allocation2 + $0x198] sm:$0xff] %vm368, 0.0
      %422 = vst.msk [vmem:[#allocation2 + $0x1a0] sm:$0xff] %vm368, 0.0
      %423 = vst.msk [vmem:[#allocation2 + $0x1a8] sm:$0x3] %vm371, 0.0
      %s424 = scalar_lea.vmem [#allocation2], 24
      %425 = vst.msk [vmem:[%s424 + $0x1] sm:$0xff] %vm368, %v336
      %426 = vst.msk [vmem:[%s424 + $0x9] sm:$0xff] %vm368, %v337
      %427 = vst.msk [vmem:[%s424 + $0x19] sm:$0xff] %vm368, %v338
      %428 = vst.msk [vmem:[%s424 + $0x21] sm:$0xff] %vm368, %v339
      %429 = vst.msk [vmem:[%s424 + $0x31] sm:$0xff] %vm368, %v340
      %430 = vst.msk [vmem:[%s424 + $0x39] sm:$0xff] %vm368, %v341
      %431 = vst.msk [vmem:[%s424 + $0x49] sm:$0xff] %vm368, %v342
      %432 = vst.msk [vmem:[%s424 + $0x51] sm:$0xff] %vm368, %v343
      %433 = vst.msk [vmem:[%s424 + $0x61] sm:$0xff] %vm368, %v344
      %434 = vst.msk [vmem:[%s424 + $0x69] sm:$0xff] %vm368, %v345
      %435 = vst.msk [vmem:[%s424 + $0x79] sm:$0xff] %vm368, %v346
      %436 = vst.msk [vmem:[%s424 + $0x81] sm:$0xff] %vm368, %v347
      %437 = vst.msk [vmem:[%s424 + $0x91] sm:$0xff] %vm368, %v348
      %438 = vst.msk [vmem:[%s424 + $0x99] sm:$0xff] %vm368, %v349
      %439 = vst.msk [vmem:[%s424 + $0xa9] sm:$0xff] %vm368, %v350
      %440 = vst.msk [vmem:[%s424 + $0xb1] sm:$0xff] %vm368, %v351
      %441 = vst.msk [vmem:[%s424 + $0xc1] sm:$0xff] %vm368, %v352
      %442 = vst.msk [vmem:[%s424 + $0xc9] sm:$0xff] %vm368, %v353
      %443 = vst.msk [vmem:[%s424 + $0xd9] sm:$0xff] %vm368, %v354
      %444 = vst.msk [vmem:[%s424 + $0xe1] sm:$0xff] %vm368, %v355
      %445 = vst.msk [vmem:[%s424 + $0xf1] sm:$0xff] %vm368, %v356
      %446 = vst.msk [vmem:[%s424 + $0xf9] sm:$0xff] %vm368, %v357
      %447 = vst.msk [vmem:[%s424 + $0x109] sm:$0xff] %vm368, %v358
      %448 = vst.msk [vmem:[%s424 + $0x111] sm:$0xff] %vm368, %v359
      %449 = vst.msk [vmem:[%s424 + $0x121] sm:$0xff] %vm368, %v360
      %450 = vst.msk [vmem:[%s424 + $0x129] sm:$0xff] %vm368, %v361
      %451 = vst.msk [vmem:[%s424 + $0x139] sm:$0xff] %vm368, %v362
      %452 = vst.msk [vmem:[%s424 + $0x141] sm:$0xff] %vm368, %v363
      %453 = vst.msk [vmem:[%s424 + $0x151] sm:$0xff] %vm368, %v364
      %454 = vst.msk [vmem:[%s424 + $0x159] sm:$0xff] %vm368, %v365
      %455 = vst.msk [vmem:[%s424 + $0x169] sm:$0xff] %vm368, %v366
      %456 = vst.msk [vmem:[%s424 + $0x171] sm:$0xff] %vm368, %v367
      %v457 = vld [vmem:[#allocation2] sm:$0xff]
      %v458 = vld [vmem:[#allocation2 + $0x8] sm:$0xff]
      %v459 = vld [vmem:[#allocation2 + $0x10] sm:$0x3]
      %v460 = vld [vmem:[#allocation2 + $0x18] sm:$0xff]
      %v461 = vld [vmem:[#allocation2 + $0x20] sm:$0xff]
      %v462 = vld [vmem:[#allocation2 + $0x28] sm:$0x3]
      %v463 = vld [vmem:[#allocation2 + $0x30] sm:$0xff]
      %v464 = vld [vmem:[#allocation2 + $0x38] sm:$0xff]
      %v465 = vld [vmem:[#allocation2 + $0x40] sm:$0x3]
      %v466 = vld [vmem:[#allocation2 + $0x48] sm:$0xff]
      %v467 = vld [vmem:[#allocation2 + $0x50] sm:$0xff]
      %v468 = vld [vmem:[#allocation2 + $0x58] sm:$0x3]
      %v469 = vld [vmem:[#allocation2 + $0x60] sm:$0xff]
      %v470 = vld [vmem:[#allocation2 + $0x68] sm:$0xff]
      %v471 = vld [vmem:[#allocation2 + $0x70] sm:$0x3]
      %v472 = vld [vmem:[#allocation2 + $0x78] sm:$0xff]
      %v473 = vld [vmem:[#allocation2 + $0x80] sm:$0xff]
      %v474 = vld [vmem:[#allocation2 + $0x88] sm:$0x3]
      %v475 = vld [vmem:[#allocation2 + $0x90] sm:$0xff]
      %v476 = vld [vmem:[#allocation2 + $0x98] sm:$0xff]
      %v477 = vld [vmem:[#allocation2 + $0xa0] sm:$0x3]
      %v478 = vld [vmem:[#allocation2 + $0xa8] sm:$0xff]
      %v479 = vld [vmem:[#allocation2 + $0xb0] sm:$0xff]
      %v480 = vld [vmem:[#allocation2 + $0xb8] sm:$0x3]
      %v481 = vld [vmem:[#allocation2 + $0xc0] sm:$0xff]
      %v482 = vld [vmem:[#allocation2 + $0xc8] sm:$0xff]
      %v483 = vld [vmem:[#allocation2 + $0xd0] sm:$0x3]
      %v484 = vld [vmem:[#allocation2 + $0xd8] sm:$0xff]
      %v485 = vld [vmem:[#allocation2 + $0xe0] sm:$0xff]
      %v486 = vld [vmem:[#allocation2 + $0xe8] sm:$0x3]
      %v487 = vld [vmem:[#allocation2 + $0xf0] sm:$0xff]
      %v488 = vld [vmem:[#allocation2 + $0xf8] sm:$0xff]
      %v489 = vld [vmem:[#allocation2 + $0x100] sm:$0x3]
      %v490 = vld [vmem:[#allocation2 + $0x108] sm:$0xff]
      %v491 = vld [vmem:[#allocation2 + $0x110] sm:$0xff]
      %v492 = vld [vmem:[#allocation2 + $0x118] sm:$0x3]
      %v493 = vld [vmem:[#allocation2 + $0x120] sm:$0xff]
      %v494 = vld [vmem:[#allocation2 + $0x128] sm:$0xff]
      %v495 = vld [vmem:[#allocation2 + $0x130] sm:$0x3]
      %v496 = vld [vmem:[#allocation2 + $0x138] sm:$0xff]
      %v497 = vld [vmem:[#allocation2 + $0x140] sm:$0xff]
      %v498 = vld [vmem:[#allocation2 + $0x148] sm:$0x3]
      %v499 = vld [vmem:[#allocation2 + $0x150] sm:$0xff]
      %v500 = vld [vmem:[#allocation2 + $0x158] sm:$0xff]
      %v501 = vld [vmem:[#allocation2 + $0x160] sm:$0x3]
      %v502 = vld [vmem:[#allocation2 + $0x168] sm:$0xff]
      %v503 = vld [vmem:[#allocation2 + $0x170] sm:$0xff]
      %v504 = vld [vmem:[#allocation2 + $0x178] sm:$0x3]
      %v505 = vld [vmem:[#allocation2 + $0x180] sm:$0xff]
      %v506 = vld [vmem:[#allocation2 + $0x188] sm:$0xff]
      %v507 = vld [vmem:[#allocation2 + $0x190] sm:$0x3]
      %v508 = vld [vmem:[#allocation2 + $0x198] sm:$0xff]
      %v509 = vld [vmem:[#allocation2 + $0x1a0] sm:$0xff]
      %v510 = vld [vmem:[#allocation2 + $0x1a8] sm:$0x3]
      %v511 = vld [vmem:[%s1] sm:$0x7]
      %v512 = vld [vmem:[%s1 + $0x4] sm:$0x7]
      %v513 = vld [vmem:[%s1 + $0x8] sm:$0x7]
      %v514 = vperm.slane %v511, 0
      %v515 = vmul.f32 %v457, %v514
      %v516 = vmul.f32 %v458, %v514
      %v517 = vmul.f32 %v460, %v514
      %v518 = vmul.f32 %v461, %v514
      %v519 = vmul.f32 %v463, %v514
      %v520 = vmul.f32 %v464, %v514
      %v521 = vmul.f32 %v466, %v514
      %v522 = vmul.f32 %v467, %v514
      %v523 = vmul.f32 %v469, %v514
      %v524 = vmul.f32 %v470, %v514
      %v525 = vmul.f32 %v472, %v514
      %v526 = vmul.f32 %v473, %v514
      %v527 = vmul.f32 %v475, %v514
      %v528 = vmul.f32 %v476, %v514
      %v529 = vmul.f32 %v478, %v514
      %v530 = vmul.f32 %v479, %v514
      %v531 = vmul.f32 %v481, %v514
      %v532 = vmul.f32 %v482, %v514
      %v533 = vmul.f32 %v484, %v514
      %v534 = vmul.f32 %v485, %v514
      %v535 = vmul.f32 %v487, %v514
      %v536 = vmul.f32 %v488, %v514
      %v537 = vmul.f32 %v490, %v514
      %v538 = vmul.f32 %v491, %v514
      %v539 = vmul.f32 %v493, %v514
      %v540 = vmul.f32 %v494, %v514
      %v541 = vmul.f32 %v496, %v514
      %v542 = vmul.f32 %v497, %v514
      %v543 = vmul.f32 %v499, %v514
      %v544 = vmul.f32 %v500, %v514
      %v545 = vmul.f32 %v502, %v514
      %v546 = vmul.f32 %v503, %v514
      %v547 = vadd.f32 %v515, 0.0
      %v548 = vadd.f32 %v516, 0.0
      %v549 = vadd.f32 %v517, 0.0
      %v550 = vadd.f32 %v518, 0.0
      %v551 = vadd.f32 %v519, 0.0
      %v552 = vadd.f32 %v520, 0.0
      %v553 = vadd.f32 %v521, 0.0
      %v554 = vadd.f32 %v522, 0.0
      %v555 = vadd.f32 %v523, 0.0
      %v556 = vadd.f32 %v524, 0.0
      %v557 = vadd.f32 %v525, 0.0
      %v558 = vadd.f32 %v526, 0.0
      %v559 = vadd.f32 %v527, 0.0
      %v560 = vadd.f32 %v528, 0.0
      %v561 = vadd.f32 %v529, 0.0
      %v562 = vadd.f32 %v530, 0.0
      %v563 = vadd.f32 %v531, 0.0
      %v564 = vadd.f32 %v532, 0.0
      %v565 = vadd.f32 %v533, 0.0
      %v566 = vadd.f32 %v534, 0.0
      %v567 = vadd.f32 %v535, 0.0
      %v568 = vadd.f32 %v536, 0.0
      %v569 = vadd.f32 %v537, 0.0
      %v570 = vadd.f32 %v538, 0.0
      %v571 = vadd.f32 %v539, 0.0
      %v572 = vadd.f32 %v540, 0.0
      %v573 = vadd.f32 %v541, 0.0
      %v574 = vadd.f32 %v542, 0.0
      %v575 = vadd.f32 %v543, 0.0
      %v576 = vadd.f32 %v544, 0.0
      %v577 = vadd.f32 %v545, 0.0
      %v578 = vadd.f32 %v546, 0.0
      %v579 = vperm.slane %v511, 1
      %v580 = vmul.f32 %v457, %v579
      %v581 = vmul.f32 %v458, %v579
      %v582 = vmul.f32 %v459, %v579
      %v583 = vmul.f32 %v460, %v579
      %v584 = vmul.f32 %v461, %v579
      %v585 = vmul.f32 %v462, %v579
      %v586 = vmul.f32 %v463, %v579
      %v587 = vmul.f32 %v464, %v579
      %v588 = vmul.f32 %v465, %v579
      %v589 = vmul.f32 %v466, %v579
      %v590 = vmul.f32 %v467, %v579
      %v591 = vmul.f32 %v468, %v579
      %v592 = vmul.f32 %v469, %v579
      %v593 = vmul.f32 %v470, %v579
      %v594 = vmul.f32 %v471, %v579
      %v595 = vmul.f32 %v472, %v579
      %v596 = vmul.f32 %v473, %v579
      %v597 = vmul.f32 %v474, %v579
      %v598 = vmul.f32 %v475, %v579
      %v599 = vmul.f32 %v476, %v579
      %v600 = vmul.f32 %v477, %v579
      %v601 = vmul.f32 %v478, %v579
      %v602 = vmul.f32 %v479, %v579
      %v603 = vmul.f32 %v480, %v579
      %v604 = vmul.f32 %v481, %v579
      %v605 = vmul.f32 %v482, %v579
      %v606 = vmul.f32 %v483, %v579
      %v607 = vmul.f32 %v484, %v579
      %v608 = vmul.f32 %v485, %v579
      %v609 = vmul.f32 %v486, %v579
      %v610 = vmul.f32 %v487, %v579
      %v611 = vmul.f32 %v488, %v579
      %v612 = vmul.f32 %v489, %v579
      %v613 = vmul.f32 %v490, %v579
      %v614 = vmul.f32 %v491, %v579
      %v615 = vmul.f32 %v492, %v579
      %v616 = vmul.f32 %v493, %v579
      %v617 = vmul.f32 %v494, %v579
      %v618 = vmul.f32 %v495, %v579
      %v619 = vmul.f32 %v496, %v579
      %v620 = vmul.f32 %v497, %v579
      %v621 = vmul.f32 %v498, %v579
      %v622 = vmul.f32 %v499, %v579
      %v623 = vmul.f32 %v500, %v579
      %v624 = vmul.f32 %v501, %v579
      %v625 = vmul.f32 %v502, %v579
      %v626 = vmul.f32 %v503, %v579
      %v627 = vmul.f32 %v504, %v579
      %vm676 = vcmask 1046528
      %v677 = vrot.slane %v580, 1
      %v678 = vrot.slane %v581, 1
      %v679 = vsel %vm676, %v677, %v678
      %v680 = vrot.slane %v582, 1
      %v681 = vsel %vm676, %v678, %v680
      %v682 = vrot.slane %v583, 1
      %v683 = vrot.slane %v584, 1
      %v684 = vsel %vm676, %v682, %v683
      %v685 = vrot.slane %v585, 1
      %v686 = vsel %vm676, %v683, %v685
      %v687 = vrot.slane %v586, 1
      %v688 = vrot.slane %v587, 1
      %v689 = vsel %vm676, %v687, %v688
      %v690 = vrot.slane %v588, 1
      %v691 = vsel %vm676, %v688, %v690
      %v692 = vrot.slane %v589, 1
      %v693 = vrot.slane %v590, 1
      %v694 = vsel %vm676, %v692, %v693
      %v695 = vrot.slane %v591, 1
      %v696 = vsel %vm676, %v693, %v695
      %v697 = vrot.slane %v592, 1
      %v698 = vrot.slane %v593, 1
      %v699 = vsel %vm676, %v697, %v698
      %v700 = vrot.slane %v594, 1
      %v701 = vsel %vm676, %v698, %v700
      %v702 = vrot.slane %v595, 1
      %v703 = vrot.slane %v596, 1
      %v704 = vsel %vm676, %v702, %v703
      %v705 = vrot.slane %v597, 1
      %v706 = vsel %vm676, %v703, %v705
      %v707 = vrot.slane %v598, 1
      %v708 = vrot.slane %v599, 1
      %v709 = vsel %vm676, %v707, %v708
      %v710 = vrot.slane %v600, 1
      %v711 = vsel %vm676, %v708, %v710
      %v712 = vrot.slane %v601, 1
      %v713 = vrot.slane %v602, 1
      %v714 = vsel %vm676, %v712, %v713
      %v715 = vrot.slane %v603, 1
      %v716 = vsel %vm676, %v713, %v715
      %v717 = vrot.slane %v604, 1
      %v718 = vrot.slane %v605, 1
      %v719 = vsel %vm676, %v717, %v718
      %v720 = vrot.slane %v606, 1
      %v721 = vsel %vm676, %v718, %v720
      %v722 = vrot.slane %v607, 1
      %v723 = vrot.slane %v608, 1
      %v724 = vsel %vm676, %v722, %v723
      %v725 = vrot.slane %v609, 1
      %v726 = vsel %vm676, %v723, %v725
      %v727 = vrot.slane %v610, 1
      %v728 = vrot.slane %v611, 1
      %v729 = vsel %vm676, %v727, %v728
      %v730 = vrot.slane %v612, 1
      %v731 = vsel %vm676, %v728, %v730
      %v732 = vrot.slane %v613, 1
      %v733 = vrot.slane %v614, 1
      %v734 = vsel %vm676, %v732, %v733
      %v735 = vrot.slane %v615, 1
      %v736 = vsel %vm676, %v733, %v735
      %v737 = vrot.slane %v616, 1
      %v738 = vrot.slane %v617, 1
      %v739 = vsel %vm676, %v737, %v738
      %v740 = vrot.slane %v618, 1
      %v741 = vsel %vm676, %v738, %v740
      %v742 = vrot.slane %v619, 1
      %v743 = vrot.slane %v620, 1
      %v744 = vsel %vm676, %v742, %v743
      %v745 = vrot.slane %v621, 1
      %v746 = vsel %vm676, %v743, %v745
      %v747 = vrot.slane %v622, 1
      %v748 = vrot.slane %v623, 1
      %v749 = vsel %vm676, %v747, %v748
      %v750 = vrot.slane %v624, 1
      %v751 = vsel %vm676, %v748, %v750
      %v752 = vrot.slane %v625, 1
      %v753 = vrot.slane %v626, 1
      %v754 = vsel %vm676, %v752, %v753
      %v755 = vrot.slane %v627, 1
      %v756 = vsel %vm676, %v753, %v755
      %v789 = vadd.f32 %v547, %v679
      %v790 = vadd.f32 %v548, %v681
      %v791 = vadd.f32 %v549, %v684
      %v792 = vadd.f32 %v550, %v686
      %v793 = vadd.f32 %v551, %v689
      %v794 = vadd.f32 %v552, %v691
      %v795 = vadd.f32 %v553, %v694
      %v796 = vadd.f32 %v554, %v696
      %v797 = vadd.f32 %v555, %v699
      %v798 = vadd.f32 %v556, %v701
      %v799 = vadd.f32 %v557, %v704
      %v800 = vadd.f32 %v558, %v706
      %v801 = vadd.f32 %v559, %v709
      %v802 = vadd.f32 %v560, %v711
      %v803 = vadd.f32 %v561, %v714
      %v804 = vadd.f32 %v562, %v716
      %v805 = vadd.f32 %v563, %v719
      %v806 = vadd.f32 %v564, %v721
      %v807 = vadd.f32 %v565, %v724
      %v808 = vadd.f32 %v566, %v726
      %v809 = vadd.f32 %v567, %v729
      %v810 = vadd.f32 %v568, %v731
      %v811 = vadd.f32 %v569, %v734
      %v812 = vadd.f32 %v570, %v736
      %v813 = vadd.f32 %v571, %v739
      %v814 = vadd.f32 %v572, %v741
      %v815 = vadd.f32 %v573, %v744
      %v816 = vadd.f32 %v574, %v746
      %v817 = vadd.f32 %v575, %v749
      %v818 = vadd.f32 %v576, %v751
      %v819 = vadd.f32 %v577, %v754
      %v820 = vadd.f32 %v578, %v756
      %v821 = vperm.slane %v511, 2
      %v822 = vmul.f32 %v457, %v821
      %v823 = vmul.f32 %v458, %v821
      %v824 = vmul.f32 %v459, %v821
      %v825 = vmul.f32 %v460, %v821
      %v826 = vmul.f32 %v461, %v821
      %v827 = vmul.f32 %v462, %v821
      %v828 = vmul.f32 %v463, %v821
      %v829 = vmul.f32 %v464, %v821
      %v830 = vmul.f32 %v465, %v821
      %v831 = vmul.f32 %v466, %v821
      %v832 = vmul.f32 %v467, %v821
      %v833 = vmul.f32 %v468, %v821
      %v834 = vmul.f32 %v469, %v821
      %v835 = vmul.f32 %v470, %v821
      %v836 = vmul.f32 %v471, %v821
      %v837 = vmul.f32 %v472, %v821
      %v838 = vmul.f32 %v473, %v821
      %v839 = vmul.f32 %v474, %v821
      %v840 = vmul.f32 %v475, %v821
      %v841 = vmul.f32 %v476, %v821
      %v842 = vmul.f32 %v477, %v821
      %v843 = vmul.f32 %v478, %v821
      %v844 = vmul.f32 %v479, %v821
      %v845 = vmul.f32 %v480, %v821
      %v846 = vmul.f32 %v481, %v821
      %v847 = vmul.f32 %v482, %v821
      %v848 = vmul.f32 %v483, %v821
      %v849 = vmul.f32 %v484, %v821
      %v850 = vmul.f32 %v485, %v821
      %v851 = vmul.f32 %v486, %v821
      %v852 = vmul.f32 %v487, %v821
      %v853 = vmul.f32 %v488, %v821
      %v854 = vmul.f32 %v489, %v821
      %v855 = vmul.f32 %v490, %v821
      %v856 = vmul.f32 %v491, %v821
      %v857 = vmul.f32 %v492, %v821
      %v858 = vmul.f32 %v493, %v821
      %v859 = vmul.f32 %v494, %v821
      %v860 = vmul.f32 %v495, %v821
      %v861 = vmul.f32 %v496, %v821
      %v862 = vmul.f32 %v497, %v821
      %v863 = vmul.f32 %v498, %v821
      %v864 = vmul.f32 %v499, %v821
      %v865 = vmul.f32 %v500, %v821
      %v866 = vmul.f32 %v501, %v821
      %v867 = vmul.f32 %v502, %v821
      %v868 = vmul.f32 %v503, %v821
      %v869 = vmul.f32 %v504, %v821
      %vm918 = vcmask 1045504
      %v919 = vrot.slane %v822, 2
      %v920 = vrot.slane %v823, 2
      %v921 = vsel %vm918, %v919, %v920
      %v922 = vrot.slane %v824, 2
      %v923 = vsel %vm918, %v920, %v922
      %v924 = vrot.slane %v825, 2
      %v925 = vrot.slane %v826, 2
      %v926 = vsel %vm918, %v924, %v925
      %v927 = vrot.slane %v827, 2
      %v928 = vsel %vm918, %v925, %v927
      %v929 = vrot.slane %v828, 2
      %v930 = vrot.slane %v829, 2
      %v931 = vsel %vm918, %v929, %v930
      %v932 = vrot.slane %v830, 2
      %v933 = vsel %vm918, %v930, %v932
      %v934 = vrot.slane %v831, 2
      %v935 = vrot.slane %v832, 2
      %v936 = vsel %vm918, %v934, %v935
      %v937 = vrot.slane %v833, 2
      %v938 = vsel %vm918, %v935, %v937
      %v939 = vrot.slane %v834, 2
      %v940 = vrot.slane %v835, 2
      %v941 = vsel %vm918, %v939, %v940
      %v942 = vrot.slane %v836, 2
      %v943 = vsel %vm918, %v940, %v942
      %v944 = vrot.slane %v837, 2
      %v945 = vrot.slane %v838, 2
      %v946 = vsel %vm918, %v944, %v945
      %v947 = vrot.slane %v839, 2
      %v948 = vsel %vm918, %v945, %v947
      %v949 = vrot.slane %v840, 2
      %v950 = vrot.slane %v841, 2
      %v951 = vsel %vm918, %v949, %v950
      %v952 = vrot.slane %v842, 2
      %v953 = vsel %vm918, %v950, %v952
      %v954 = vrot.slane %v843, 2
      %v955 = vrot.slane %v844, 2
      %v956 = vsel %vm918, %v954, %v955
      %v957 = vrot.slane %v845, 2
      %v958 = vsel %vm918, %v955, %v957
      %v959 = vrot.slane %v846, 2
      %v960 = vrot.slane %v847, 2
      %v961 = vsel %vm918, %v959, %v960
      %v962 = vrot.slane %v848, 2
      %v963 = vsel %vm918, %v960, %v962
      %v964 = vrot.slane %v849, 2
      %v965 = vrot.slane %v850, 2
      %v966 = vsel %vm918, %v964, %v965
      %v967 = vrot.slane %v851, 2
      %v968 = vsel %vm918, %v965, %v967
      %v969 = vrot.slane %v852, 2
      %v970 = vrot.slane %v853, 2
      %v971 = vsel %vm918, %v969, %v970
      %v972 = vrot.slane %v854, 2
      %v973 = vsel %vm918, %v970, %v972
      %v974 = vrot.slane %v855, 2
      %v975 = vrot.slane %v856, 2
      %v976 = vsel %vm918, %v974, %v975
      %v977 = vrot.slane %v857, 2
      %v978 = vsel %vm918, %v975, %v977
      %v979 = vrot.slane %v858, 2
      %v980 = vrot.slane %v859, 2
      %v981 = vsel %vm918, %v979, %v980
      %v982 = vrot.slane %v860, 2
      %v983 = vsel %vm918, %v980, %v982
      %v984 = vrot.slane %v861, 2
      %v985 = vrot.slane %v862, 2
      %v986 = vsel %vm918, %v984, %v985
      %v987 = vrot.slane %v863, 2
      %v988 = vsel %vm918, %v985, %v987
      %v989 = vrot.slane %v864, 2
      %v990 = vrot.slane %v865, 2
      %v991 = vsel %vm918, %v989, %v990
      %v992 = vrot.slane %v866, 2
      %v993 = vsel %vm918, %v990, %v992
      %v994 = vrot.slane %v867, 2
      %v995 = vrot.slane %v868, 2
      %v996 = vsel %vm918, %v994, %v995
      %v997 = vrot.slane %v869, 2
      %v998 = vsel %vm918, %v995, %v997
      %v1031 = vadd.f32 %v789, %v921
      %v1032 = vadd.f32 %v790, %v923
      %v1033 = vadd.f32 %v791, %v926
      %v1034 = vadd.f32 %v792, %v928
      %v1035 = vadd.f32 %v793, %v931
      %v1036 = vadd.f32 %v794, %v933
      %v1037 = vadd.f32 %v795, %v936
      %v1038 = vadd.f32 %v796, %v938
      %v1039 = vadd.f32 %v797, %v941
      %v1040 = vadd.f32 %v798, %v943
      %v1041 = vadd.f32 %v799, %v946
      %v1042 = vadd.f32 %v800, %v948
      %v1043 = vadd.f32 %v801, %v951
      %v1044 = vadd.f32 %v802, %v953
      %v1045 = vadd.f32 %v803, %v956
      %v1046 = vadd.f32 %v804, %v958
      %v1047 = vadd.f32 %v805, %v961
      %v1048 = vadd.f32 %v806, %v963
      %v1049 = vadd.f32 %v807, %v966
      %v1050 = vadd.f32 %v808, %v968
      %v1051 = vadd.f32 %v809, %v971
      %v1052 = vadd.f32 %v810, %v973
      %v1053 = vadd.f32 %v811, %v976
      %v1054 = vadd.f32 %v812, %v978
      %v1055 = vadd.f32 %v813, %v981
      %v1056 = vadd.f32 %v814, %v983
      %v1057 = vadd.f32 %v815, %v986
      %v1058 = vadd.f32 %v816, %v988
      %v1059 = vadd.f32 %v817, %v991
      %v1060 = vadd.f32 %v818, %v993
      %v1061 = vadd.f32 %v819, %v996
      %v1062 = vadd.f32 %v820, %v998
      %v1063 = vperm.slane %v512, 0
      %v1064 = vmul.f32 %v460, %v1063
      %v1065 = vmul.f32 %v461, %v1063
      %v1066 = vmul.f32 %v463, %v1063
      %v1067 = vmul.f32 %v464, %v1063
      %v1068 = vmul.f32 %v466, %v1063
      %v1069 = vmul.f32 %v467, %v1063
      %v1070 = vmul.f32 %v469, %v1063
      %v1071 = vmul.f32 %v470, %v1063
      %v1072 = vmul.f32 %v472, %v1063
      %v1073 = vmul.f32 %v473, %v1063
      %v1074 = vmul.f32 %v475, %v1063
      %v1075 = vmul.f32 %v476, %v1063
      %v1076 = vmul.f32 %v478, %v1063
      %v1077 = vmul.f32 %v479, %v1063
      %v1078 = vmul.f32 %v481, %v1063
      %v1079 = vmul.f32 %v482, %v1063
      %v1080 = vmul.f32 %v484, %v1063
      %v1081 = vmul.f32 %v485, %v1063
      %v1082 = vmul.f32 %v487, %v1063
      %v1083 = vmul.f32 %v488, %v1063
      %v1084 = vmul.f32 %v490, %v1063
      %v1085 = vmul.f32 %v491, %v1063
      %v1086 = vmul.f32 %v493, %v1063
      %v1087 = vmul.f32 %v494, %v1063
      %v1088 = vmul.f32 %v496, %v1063
      %v1089 = vmul.f32 %v497, %v1063
      %v1090 = vmul.f32 %v499, %v1063
      %v1091 = vmul.f32 %v500, %v1063
      %v1092 = vmul.f32 %v502, %v1063
      %v1093 = vmul.f32 %v503, %v1063
      %v1094 = vmul.f32 %v505, %v1063
      %v1095 = vmul.f32 %v506, %v1063
      %v1096 = vadd.f32 %v1031, %v1064
      %v1097 = vadd.f32 %v1032, %v1065
      %v1098 = vadd.f32 %v1033, %v1066
      %v1099 = vadd.f32 %v1034, %v1067
      %v1100 = vadd.f32 %v1035, %v1068
      %v1101 = vadd.f32 %v1036, %v1069
      %v1102 = vadd.f32 %v1037, %v1070
      %v1103 = vadd.f32 %v1038, %v1071
      %v1104 = vadd.f32 %v1039, %v1072
      %v1105 = vadd.f32 %v1040, %v1073
      %v1106 = vadd.f32 %v1041, %v1074
      %v1107 = vadd.f32 %v1042, %v1075
      %v1108 = vadd.f32 %v1043, %v1076
      %v1109 = vadd.f32 %v1044, %v1077
      %v1110 = vadd.f32 %v1045, %v1078
      %v1111 = vadd.f32 %v1046, %v1079
      %v1112 = vadd.f32 %v1047, %v1080
      %v1113 = vadd.f32 %v1048, %v1081
      %v1114 = vadd.f32 %v1049, %v1082
      %v1115 = vadd.f32 %v1050, %v1083
      %v1116 = vadd.f32 %v1051, %v1084
      %v1117 = vadd.f32 %v1052, %v1085
      %v1118 = vadd.f32 %v1053, %v1086
      %v1119 = vadd.f32 %v1054, %v1087
      %v1120 = vadd.f32 %v1055, %v1088
      %v1121 = vadd.f32 %v1056, %v1089
      %v1122 = vadd.f32 %v1057, %v1090
      %v1123 = vadd.f32 %v1058, %v1091
      %v1124 = vadd.f32 %v1059, %v1092
      %v1125 = vadd.f32 %v1060, %v1093
      %v1126 = vadd.f32 %v1061, %v1094
      %v1127 = vadd.f32 %v1062, %v1095
      %v1128 = vperm.slane %v512, 1
      %v1129 = vmul.f32 %v460, %v1128
      %v1130 = vmul.f32 %v461, %v1128
      %v1131 = vmul.f32 %v462, %v1128
      %v1132 = vmul.f32 %v463, %v1128
      %v1133 = vmul.f32 %v464, %v1128
      %v1134 = vmul.f32 %v465, %v1128
      %v1135 = vmul.f32 %v466, %v1128
      %v1136 = vmul.f32 %v467, %v1128
      %v1137 = vmul.f32 %v468, %v1128
      %v1138 = vmul.f32 %v469, %v1128
      %v1139 = vmul.f32 %v470, %v1128
      %v1140 = vmul.f32 %v471, %v1128
      %v1141 = vmul.f32 %v472, %v1128
      %v1142 = vmul.f32 %v473, %v1128
      %v1143 = vmul.f32 %v474, %v1128
      %v1144 = vmul.f32 %v475, %v1128
      %v1145 = vmul.f32 %v476, %v1128
      %v1146 = vmul.f32 %v477, %v1128
      %v1147 = vmul.f32 %v478, %v1128
      %v1148 = vmul.f32 %v479, %v1128
      %v1149 = vmul.f32 %v480, %v1128
      %v1150 = vmul.f32 %v481, %v1128
      %v1151 = vmul.f32 %v482, %v1128
      %v1152 = vmul.f32 %v483, %v1128
      %v1153 = vmul.f32 %v484, %v1128
      %v1154 = vmul.f32 %v485, %v1128
      %v1155 = vmul.f32 %v486, %v1128
      %v1156 = vmul.f32 %v487, %v1128
      %v1157 = vmul.f32 %v488, %v1128
      %v1158 = vmul.f32 %v489, %v1128
      %v1159 = vmul.f32 %v490, %v1128
      %v1160 = vmul.f32 %v491, %v1128
      %v1161 = vmul.f32 %v492, %v1128
      %v1162 = vmul.f32 %v493, %v1128
      %v1163 = vmul.f32 %v494, %v1128
      %v1164 = vmul.f32 %v495, %v1128
      %v1165 = vmul.f32 %v496, %v1128
      %v1166 = vmul.f32 %v497, %v1128
      %v1167 = vmul.f32 %v498, %v1128
      %v1168 = vmul.f32 %v499, %v1128
      %v1169 = vmul.f32 %v500, %v1128
      %v1170 = vmul.f32 %v501, %v1128
      %v1171 = vmul.f32 %v502, %v1128
      %v1172 = vmul.f32 %v503, %v1128
      %v1173 = vmul.f32 %v504, %v1128
      %v1174 = vmul.f32 %v505, %v1128
      %v1175 = vmul.f32 %v506, %v1128
      %v1176 = vmul.f32 %v507, %v1128
      %v1225 = vrot.slane %v1129, 1
      %v1226 = vrot.slane %v1130, 1
      %v1227 = vsel %vm676, %v1225, %v1226
      %v1228 = vrot.slane %v1131, 1
      %v1229 = vsel %vm676, %v1226, %v1228
      %v1230 = vrot.slane %v1132, 1
      %v1231 = vrot.slane %v1133, 1
      %v1232 = vsel %vm676, %v1230, %v1231
      %v1233 = vrot.slane %v1134, 1
      %v1234 = vsel %vm676, %v1231, %v1233
      %v1235 = vrot.slane %v1135, 1
      %v1236 = vrot.slane %v1136, 1
      %v1237 = vsel %vm676, %v1235, %v1236
      %v1238 = vrot.slane %v1137, 1
      %v1239 = vsel %vm676, %v1236, %v1238
      %v1240 = vrot.slane %v1138, 1
      %v1241 = vrot.slane %v1139, 1
      %v1242 = vsel %vm676, %v1240, %v1241
      %v1243 = vrot.slane %v1140, 1
      %v1244 = vsel %vm676, %v1241, %v1243
      %v1245 = vrot.slane %v1141, 1
      %v1246 = vrot.slane %v1142, 1
      %v1247 = vsel %vm676, %v1245, %v1246
      %v1248 = vrot.slane %v1143, 1
      %v1249 = vsel %vm676, %v1246, %v1248
      %v1250 = vrot.slane %v1144, 1
      %v1251 = vrot.slane %v1145, 1
      %v1252 = vsel %vm676, %v1250, %v1251
      %v1253 = vrot.slane %v1146, 1
      %v1254 = vsel %vm676, %v1251, %v1253
      %v1255 = vrot.slane %v1147, 1
      %v1256 = vrot.slane %v1148, 1
      %v1257 = vsel %vm676, %v1255, %v1256
      %v1258 = vrot.slane %v1149, 1
      %v1259 = vsel %vm676, %v1256, %v1258
      %v1260 = vrot.slane %v1150, 1
      %v1261 = vrot.slane %v1151, 1
      %v1262 = vsel %vm676, %v1260, %v1261
      %v1263 = vrot.slane %v1152, 1
      %v1264 = vsel %vm676, %v1261, %v1263
      %v1265 = vrot.slane %v1153, 1
      %v1266 = vrot.slane %v1154, 1
      %v1267 = vsel %vm676, %v1265, %v1266
      %v1268 = vrot.slane %v1155, 1
      %v1269 = vsel %vm676, %v1266, %v1268
      %v1270 = vrot.slane %v1156, 1
      %v1271 = vrot.slane %v1157, 1
      %v1272 = vsel %vm676, %v1270, %v1271
      %v1273 = vrot.slane %v1158, 1
      %v1274 = vsel %vm676, %v1271, %v1273
      %v1275 = vrot.slane %v1159, 1
      %v1276 = vrot.slane %v1160, 1
      %v1277 = vsel %vm676, %v1275, %v1276
      %v1278 = vrot.slane %v1161, 1
      %v1279 = vsel %vm676, %v1276, %v1278
      %v1280 = vrot.slane %v1162, 1
      %v1281 = vrot.slane %v1163, 1
      %v1282 = vsel %vm676, %v1280, %v1281
      %v1283 = vrot.slane %v1164, 1
      %v1284 = vsel %vm676, %v1281, %v1283
      %v1285 = vrot.slane %v1165, 1
      %v1286 = vrot.slane %v1166, 1
      %v1287 = vsel %vm676, %v1285, %v1286
      %v1288 = vrot.slane %v1167, 1
      %v1289 = vsel %vm676, %v1286, %v1288
      %v1290 = vrot.slane %v1168, 1
      %v1291 = vrot.slane %v1169, 1
      %v1292 = vsel %vm676, %v1290, %v1291
      %v1293 = vrot.slane %v1170, 1
      %v1294 = vsel %vm676, %v1291, %v1293
      %v1295 = vrot.slane %v1171, 1
      %v1296 = vrot.slane %v1172, 1
      %v1297 = vsel %vm676, %v1295, %v1296
      %v1298 = vrot.slane %v1173, 1
      %v1299 = vsel %vm676, %v1296, %v1298
      %v1300 = vrot.slane %v1174, 1
      %v1301 = vrot.slane %v1175, 1
      %v1302 = vsel %vm676, %v1300, %v1301
      %v1303 = vrot.slane %v1176, 1
      %v1304 = vsel %vm676, %v1301, %v1303
      %v1337 = vadd.f32 %v1096, %v1227
      %v1338 = vadd.f32 %v1097, %v1229
      %v1339 = vadd.f32 %v1098, %v1232
      %v1340 = vadd.f32 %v1099, %v1234
      %v1341 = vadd.f32 %v1100, %v1237
      %v1342 = vadd.f32 %v1101, %v1239
      %v1343 = vadd.f32 %v1102, %v1242
      %v1344 = vadd.f32 %v1103, %v1244
      %v1345 = vadd.f32 %v1104, %v1247
      %v1346 = vadd.f32 %v1105, %v1249
      %v1347 = vadd.f32 %v1106, %v1252
      %v1348 = vadd.f32 %v1107, %v1254
      %v1349 = vadd.f32 %v1108, %v1257
      %v1350 = vadd.f32 %v1109, %v1259
      %v1351 = vadd.f32 %v1110, %v1262
      %v1352 = vadd.f32 %v1111, %v1264
      %v1353 = vadd.f32 %v1112, %v1267
      %v1354 = vadd.f32 %v1113, %v1269
      %v1355 = vadd.f32 %v1114, %v1272
      %v1356 = vadd.f32 %v1115, %v1274
      %v1357 = vadd.f32 %v1116, %v1277
      %v1358 = vadd.f32 %v1117, %v1279
      %v1359 = vadd.f32 %v1118, %v1282
      %v1360 = vadd.f32 %v1119, %v1284
      %v1361 = vadd.f32 %v1120, %v1287
      %v1362 = vadd.f32 %v1121, %v1289
      %v1363 = vadd.f32 %v1122, %v1292
      %v1364 = vadd.f32 %v1123, %v1294
      %v1365 = vadd.f32 %v1124, %v1297
      %v1366 = vadd.f32 %v1125, %v1299
      %v1367 = vadd.f32 %v1126, %v1302
      %v1368 = vadd.f32 %v1127, %v1304
      %v1369 = vperm.slane %v512, 2
      %v1370 = vmul.f32 %v460, %v1369
      %v1371 = vmul.f32 %v461, %v1369
      %v1372 = vmul.f32 %v462, %v1369
      %v1373 = vmul.f32 %v463, %v1369
      %v1374 = vmul.f32 %v464, %v1369
      %v1375 = vmul.f32 %v465, %v1369
      %v1376 = vmul.f32 %v466, %v1369
      %v1377 = vmul.f32 %v467, %v1369
      %v1378 = vmul.f32 %v468, %v1369
      %v1379 = vmul.f32 %v469, %v1369
      %v1380 = vmul.f32 %v470, %v1369
      %v1381 = vmul.f32 %v471, %v1369
      %v1382 = vmul.f32 %v472, %v1369
      %v1383 = vmul.f32 %v473, %v1369
      %v1384 = vmul.f32 %v474, %v1369
      %v1385 = vmul.f32 %v475, %v1369
      %v1386 = vmul.f32 %v476, %v1369
      %v1387 = vmul.f32 %v477, %v1369
      %v1388 = vmul.f32 %v478, %v1369
      %v1389 = vmul.f32 %v479, %v1369
      %v1390 = vmul.f32 %v480, %v1369
      %v1391 = vmul.f32 %v481, %v1369
      %v1392 = vmul.f32 %v482, %v1369
      %v1393 = vmul.f32 %v483, %v1369
      %v1394 = vmul.f32 %v484, %v1369
      %v1395 = vmul.f32 %v485, %v1369
      %v1396 = vmul.f32 %v486, %v1369
      %v1397 = vmul.f32 %v487, %v1369
      %v1398 = vmul.f32 %v488, %v1369
      %v1399 = vmul.f32 %v489, %v1369
      %v1400 = vmul.f32 %v490, %v1369
      %v1401 = vmul.f32 %v491, %v1369
      %v1402 = vmul.f32 %v492, %v1369
      %v1403 = vmul.f32 %v493, %v1369
      %v1404 = vmul.f32 %v494, %v1369
      %v1405 = vmul.f32 %v495, %v1369
      %v1406 = vmul.f32 %v496, %v1369
      %v1407 = vmul.f32 %v497, %v1369
      %v1408 = vmul.f32 %v498, %v1369
      %v1409 = vmul.f32 %v499, %v1369
      %v1410 = vmul.f32 %v500, %v1369
      %v1411 = vmul.f32 %v501, %v1369
      %v1412 = vmul.f32 %v502, %v1369
      %v1413 = vmul.f32 %v503, %v1369
      %v1414 = vmul.f32 %v504, %v1369
      %v1415 = vmul.f32 %v505, %v1369
      %v1416 = vmul.f32 %v506, %v1369
      %v1417 = vmul.f32 %v507, %v1369
      %v1466 = vrot.slane %v1370, 2
      %v1467 = vrot.slane %v1371, 2
      %v1468 = vsel %vm918, %v1466, %v1467
      %v1469 = vrot.slane %v1372, 2
      %v1470 = vsel %vm918, %v1467, %v1469
      %v1471 = vrot.slane %v1373, 2
      %v1472 = vrot.slane %v1374, 2
      %v1473 = vsel %vm918, %v1471, %v1472
      %v1474 = vrot.slane %v1375, 2
      %v1475 = vsel %vm918, %v1472, %v1474
      %v1476 = vrot.slane %v1376, 2
      %v1477 = vrot.slane %v1377, 2
      %v1478 = vsel %vm918, %v1476, %v1477
      %v1479 = vrot.slane %v1378, 2
      %v1480 = vsel %vm918, %v1477, %v1479
      %v1481 = vrot.slane %v1379, 2
      %v1482 = vrot.slane %v1380, 2
      %v1483 = vsel %vm918, %v1481, %v1482
      %v1484 = vrot.slane %v1381, 2
      %v1485 = vsel %vm918, %v1482, %v1484
      %v1486 = vrot.slane %v1382, 2
      %v1487 = vrot.slane %v1383, 2
      %v1488 = vsel %vm918, %v1486, %v1487
      %v1489 = vrot.slane %v1384, 2
      %v1490 = vsel %vm918, %v1487, %v1489
      %v1491 = vrot.slane %v1385, 2
      %v1492 = vrot.slane %v1386, 2
      %v1493 = vsel %vm918, %v1491, %v1492
      %v1494 = vrot.slane %v1387, 2
      %v1495 = vsel %vm918, %v1492, %v1494
      %v1496 = vrot.slane %v1388, 2
      %v1497 = vrot.slane %v1389, 2
      %v1498 = vsel %vm918, %v1496, %v1497
      %v1499 = vrot.slane %v1390, 2
      %v1500 = vsel %vm918, %v1497, %v1499
      %v1501 = vrot.slane %v1391, 2
      %v1502 = vrot.slane %v1392, 2
      %v1503 = vsel %vm918, %v1501, %v1502
      %v1504 = vrot.slane %v1393, 2
      %v1505 = vsel %vm918, %v1502, %v1504
      %v1506 = vrot.slane %v1394, 2
      %v1507 = vrot.slane %v1395, 2
      %v1508 = vsel %vm918, %v1506, %v1507
      %v1509 = vrot.slane %v1396, 2
      %v1510 = vsel %vm918, %v1507, %v1509
      %v1511 = vrot.slane %v1397, 2
      %v1512 = vrot.slane %v1398, 2
      %v1513 = vsel %vm918, %v1511, %v1512
      %v1514 = vrot.slane %v1399, 2
      %v1515 = vsel %vm918, %v1512, %v1514
      %v1516 = vrot.slane %v1400, 2
      %v1517 = vrot.slane %v1401, 2
      %v1518 = vsel %vm918, %v1516, %v1517
      %v1519 = vrot.slane %v1402, 2
      %v1520 = vsel %vm918, %v1517, %v1519
      %v1521 = vrot.slane %v1403, 2
      %v1522 = vrot.slane %v1404, 2
      %v1523 = vsel %vm918, %v1521, %v1522
      %v1524 = vrot.slane %v1405, 2
      %v1525 = vsel %vm918, %v1522, %v1524
      %v1526 = vrot.slane %v1406, 2
      %v1527 = vrot.slane %v1407, 2
      %v1528 = vsel %vm918, %v1526, %v1527
      %v1529 = vrot.slane %v1408, 2
      %v1530 = vsel %vm918, %v1527, %v1529
      %v1531 = vrot.slane %v1409, 2
      %v1532 = vrot.slane %v1410, 2
      %v1533 = vsel %vm918, %v1531, %v1532
      %v1534 = vrot.slane %v1411, 2
      %v1535 = vsel %vm918, %v1532, %v1534
      %v1536 = vrot.slane %v1412, 2
      %v1537 = vrot.slane %v1413, 2
      %v1538 = vsel %vm918, %v1536, %v1537
      %v1539 = vrot.slane %v1414, 2
      %v1540 = vsel %vm918, %v1537, %v1539
      %v1541 = vrot.slane %v1415, 2
      %v1542 = vrot.slane %v1416, 2
      %v1543 = vsel %vm918, %v1541, %v1542
      %v1544 = vrot.slane %v1417, 2
      %v1545 = vsel %vm918, %v1542, %v1544
      %v1578 = vadd.f32 %v1337, %v1468
      %v1579 = vadd.f32 %v1338, %v1470
      %v1580 = vadd.f32 %v1339, %v1473
      %v1581 = vadd.f32 %v1340, %v1475
      %v1582 = vadd.f32 %v1341, %v1478
      %v1583 = vadd.f32 %v1342, %v1480
      %v1584 = vadd.f32 %v1343, %v1483
      %v1585 = vadd.f32 %v1344, %v1485
      %v1586 = vadd.f32 %v1345, %v1488
      %v1587 = vadd.f32 %v1346, %v1490
      %v1588 = vadd.f32 %v1347, %v1493
      %v1589 = vadd.f32 %v1348, %v1495
      %v1590 = vadd.f32 %v1349, %v1498
      %v1591 = vadd.f32 %v1350, %v1500
      %v1592 = vadd.f32 %v1351, %v1503
      %v1593 = vadd.f32 %v1352, %v1505
      %v1594 = vadd.f32 %v1353, %v1508
      %v1595 = vadd.f32 %v1354, %v1510
      %v1596 = vadd.f32 %v1355, %v1513
      %v1597 = vadd.f32 %v1356, %v1515
      %v1598 = vadd.f32 %v1357, %v1518
      %v1599 = vadd.f32 %v1358, %v1520
      %v1600 = vadd.f32 %v1359, %v1523
      %v1601 = vadd.f32 %v1360, %v1525
      %v1602 = vadd.f32 %v1361, %v1528
      %v1603 = vadd.f32 %v1362, %v1530
      %v1604 = vadd.f32 %v1363, %v1533
      %v1605 = vadd.f32 %v1364, %v1535
      %v1606 = vadd.f32 %v1365, %v1538
      %v1607 = vadd.f32 %v1366, %v1540
      %v1608 = vadd.f32 %v1367, %v1543
      %v1609 = vadd.f32 %v1368, %v1545
      %v1610 = vperm.slane %v513, 0
      %v1611 = vmul.f32 %v463, %v1610
      %v1612 = vmul.f32 %v464, %v1610
      %v1613 = vmul.f32 %v466, %v1610
      %v1614 = vmul.f32 %v467, %v1610
      %v1615 = vmul.f32 %v469, %v1610
      %v1616 = vmul.f32 %v470, %v1610
      %v1617 = vmul.f32 %v472, %v1610
      %v1618 = vmul.f32 %v473, %v1610
      %v1619 = vmul.f32 %v475, %v1610
      %v1620 = vmul.f32 %v476, %v1610
      %v1621 = vmul.f32 %v478, %v1610
      %v1622 = vmul.f32 %v479, %v1610
      %v1623 = vmul.f32 %v481, %v1610
      %v1624 = vmul.f32 %v482, %v1610
      %v1625 = vmul.f32 %v484, %v1610
      %v1626 = vmul.f32 %v485, %v1610
      %v1627 = vmul.f32 %v487, %v1610
      %v1628 = vmul.f32 %v488, %v1610
      %v1629 = vmul.f32 %v490, %v1610
      %v1630 = vmul.f32 %v491, %v1610
      %v1631 = vmul.f32 %v493, %v1610
      %v1632 = vmul.f32 %v494, %v1610
      %v1633 = vmul.f32 %v496, %v1610
      %v1634 = vmul.f32 %v497, %v1610
      %v1635 = vmul.f32 %v499, %v1610
      %v1636 = vmul.f32 %v500, %v1610
      %v1637 = vmul.f32 %v502, %v1610
      %v1638 = vmul.f32 %v503, %v1610
      %v1639 = vmul.f32 %v505, %v1610
      %v1640 = vmul.f32 %v506, %v1610
      %v1641 = vmul.f32 %v508, %v1610
      %v1642 = vmul.f32 %v509, %v1610
      %v1643 = vadd.f32 %v1578, %v1611
      %v1644 = vadd.f32 %v1579, %v1612
      %v1645 = vadd.f32 %v1580, %v1613
      %v1646 = vadd.f32 %v1581, %v1614
      %v1647 = vadd.f32 %v1582, %v1615
      %v1648 = vadd.f32 %v1583, %v1616
      %v1649 = vadd.f32 %v1584, %v1617
      %v1650 = vadd.f32 %v1585, %v1618
      %v1651 = vadd.f32 %v1586, %v1619
      %v1652 = vadd.f32 %v1587, %v1620
      %v1653 = vadd.f32 %v1588, %v1621
      %v1654 = vadd.f32 %v1589, %v1622
      %v1655 = vadd.f32 %v1590, %v1623
      %v1656 = vadd.f32 %v1591, %v1624
      %v1657 = vadd.f32 %v1592, %v1625
      %v1658 = vadd.f32 %v1593, %v1626
      %v1659 = vadd.f32 %v1594, %v1627
      %v1660 = vadd.f32 %v1595, %v1628
      %v1661 = vadd.f32 %v1596, %v1629
      %v1662 = vadd.f32 %v1597, %v1630
      %v1663 = vadd.f32 %v1598, %v1631
      %v1664 = vadd.f32 %v1599, %v1632
      %v1665 = vadd.f32 %v1600, %v1633
      %v1666 = vadd.f32 %v1601, %v1634
      %v1667 = vadd.f32 %v1602, %v1635
      %v1668 = vadd.f32 %v1603, %v1636
      %v1669 = vadd.f32 %v1604, %v1637
      %v1670 = vadd.f32 %v1605, %v1638
      %v1671 = vadd.f32 %v1606, %v1639
      %v1672 = vadd.f32 %v1607, %v1640
      %v1673 = vadd.f32 %v1608, %v1641
      %v1674 = vadd.f32 %v1609, %v1642
      %v1675 = vperm.slane %v513, 1
      %v1676 = vmul.f32 %v463, %v1675
      %v1677 = vmul.f32 %v464, %v1675
      %v1678 = vmul.f32 %v465, %v1675
      %v1679 = vmul.f32 %v466, %v1675
      %v1680 = vmul.f32 %v467, %v1675
      %v1681 = vmul.f32 %v468, %v1675
      %v1682 = vmul.f32 %v469, %v1675
      %v1683 = vmul.f32 %v470, %v1675
      %v1684 = vmul.f32 %v471, %v1675
      %v1685 = vmul.f32 %v472, %v1675
      %v1686 = vmul.f32 %v473, %v1675
      %v1687 = vmul.f32 %v474, %v1675
      %v1688 = vmul.f32 %v475, %v1675
      %v1689 = vmul.f32 %v476, %v1675
      %v1690 = vmul.f32 %v477, %v1675
      %v1691 = vmul.f32 %v478, %v1675
      %v1692 = vmul.f32 %v479, %v1675
      %v1693 = vmul.f32 %v480, %v1675
      %v1694 = vmul.f32 %v481, %v1675
      %v1695 = vmul.f32 %v482, %v1675
      %v1696 = vmul.f32 %v483, %v1675
      %v1697 = vmul.f32 %v484, %v1675
      %v1698 = vmul.f32 %v485, %v1675
      %v1699 = vmul.f32 %v486, %v1675
      %v1700 = vmul.f32 %v487, %v1675
      %v1701 = vmul.f32 %v488, %v1675
      %v1702 = vmul.f32 %v489, %v1675
      %v1703 = vmul.f32 %v490, %v1675
      %v1704 = vmul.f32 %v491, %v1675
      %v1705 = vmul.f32 %v492, %v1675
      %v1706 = vmul.f32 %v493, %v1675
      %v1707 = vmul.f32 %v494, %v1675
      %v1708 = vmul.f32 %v495, %v1675
      %v1709 = vmul.f32 %v496, %v1675
      %v1710 = vmul.f32 %v497, %v1675
      %v1711 = vmul.f32 %v498, %v1675
      %v1712 = vmul.f32 %v499, %v1675
      %v1713 = vmul.f32 %v500, %v1675
      %v1714 = vmul.f32 %v501, %v1675
      %v1715 = vmul.f32 %v502, %v1675
      %v1716 = vmul.f32 %v503, %v1675
      %v1717 = vmul.f32 %v504, %v1675
      %v1718 = vmul.f32 %v505, %v1675
      %v1719 = vmul.f32 %v506, %v1675
      %v1720 = vmul.f32 %v507, %v1675
      %v1721 = vmul.f32 %v508, %v1675
      %v1722 = vmul.f32 %v509, %v1675
      %v1723 = vmul.f32 %v510, %v1675
      %v1772 = vrot.slane %v1676, 1
      %v1773 = vrot.slane %v1677, 1
      %v1774 = vsel %vm676, %v1772, %v1773
      %v1775 = vrot.slane %v1678, 1
      %v1776 = vsel %vm676, %v1773, %v1775
      %v1777 = vrot.slane %v1679, 1
      %v1778 = vrot.slane %v1680, 1
      %v1779 = vsel %vm676, %v1777, %v1778
      %v1780 = vrot.slane %v1681, 1
      %v1781 = vsel %vm676, %v1778, %v1780
      %v1782 = vrot.slane %v1682, 1
      %v1783 = vrot.slane %v1683, 1
      %v1784 = vsel %vm676, %v1782, %v1783
      %v1785 = vrot.slane %v1684, 1
      %v1786 = vsel %vm676, %v1783, %v1785
      %v1787 = vrot.slane %v1685, 1
      %v1788 = vrot.slane %v1686, 1
      %v1789 = vsel %vm676, %v1787, %v1788
      %v1790 = vrot.slane %v1687, 1
      %v1791 = vsel %vm676, %v1788, %v1790
      %v1792 = vrot.slane %v1688, 1
      %v1793 = vrot.slane %v1689, 1
      %v1794 = vsel %vm676, %v1792, %v1793
      %v1795 = vrot.slane %v1690, 1
      %v1796 = vsel %vm676, %v1793, %v1795
      %v1797 = vrot.slane %v1691, 1
      %v1798 = vrot.slane %v1692, 1
      %v1799 = vsel %vm676, %v1797, %v1798
      %v1800 = vrot.slane %v1693, 1
      %v1801 = vsel %vm676, %v1798, %v1800
      %v1802 = vrot.slane %v1694, 1
      %v1803 = vrot.slane %v1695, 1
      %v1804 = vsel %vm676, %v1802, %v1803
      %v1805 = vrot.slane %v1696, 1
      %v1806 = vsel %vm676, %v1803, %v1805
      %v1807 = vrot.slane %v1697, 1
      %v1808 = vrot.slane %v1698, 1
      %v1809 = vsel %vm676, %v1807, %v1808
      %v1810 = vrot.slane %v1699, 1
      %v1811 = vsel %vm676, %v1808, %v1810
      %v1812 = vrot.slane %v1700, 1
      %v1813 = vrot.slane %v1701, 1
      %v1814 = vsel %vm676, %v1812, %v1813
      %v1815 = vrot.slane %v1702, 1
      %v1816 = vsel %vm676, %v1813, %v1815
      %v1817 = vrot.slane %v1703, 1
      %v1818 = vrot.slane %v1704, 1
      %v1819 = vsel %vm676, %v1817, %v1818
      %v1820 = vrot.slane %v1705, 1
      %v1821 = vsel %vm676, %v1818, %v1820
      %v1822 = vrot.slane %v1706, 1
      %v1823 = vrot.slane %v1707, 1
      %v1824 = vsel %vm676, %v1822, %v1823
      %v1825 = vrot.slane %v1708, 1
      %v1826 = vsel %vm676, %v1823, %v1825
      %v1827 = vrot.slane %v1709, 1
      %v1828 = vrot.slane %v1710, 1
      %v1829 = vsel %vm676, %v1827, %v1828
      %v1830 = vrot.slane %v1711, 1
      %v1831 = vsel %vm676, %v1828, %v1830
      %v1832 = vrot.slane %v1712, 1
      %v1833 = vrot.slane %v1713, 1
      %v1834 = vsel %vm676, %v1832, %v1833
      %v1835 = vrot.slane %v1714, 1
      %v1836 = vsel %vm676, %v1833, %v1835
      %v1837 = vrot.slane %v1715, 1
      %v1838 = vrot.slane %v1716, 1
      %v1839 = vsel %vm676, %v1837, %v1838
      %v1840 = vrot.slane %v1717, 1
      %v1841 = vsel %vm676, %v1838, %v1840
      %v1842 = vrot.slane %v1718, 1
      %v1843 = vrot.slane %v1719, 1
      %v1844 = vsel %vm676, %v1842, %v1843
      %v1845 = vrot.slane %v1720, 1
      %v1846 = vsel %vm676, %v1843, %v1845
      %v1847 = vrot.slane %v1721, 1
      %v1848 = vrot.slane %v1722, 1
      %v1849 = vsel %vm676, %v1847, %v1848
      %v1850 = vrot.slane %v1723, 1
      %v1851 = vsel %vm676, %v1848, %v1850
      %v1884 = vadd.f32 %v1643, %v1774
      %v1885 = vadd.f32 %v1644, %v1776
      %v1886 = vadd.f32 %v1645, %v1779
      %v1887 = vadd.f32 %v1646, %v1781
      %v1888 = vadd.f32 %v1647, %v1784
      %v1889 = vadd.f32 %v1648, %v1786
      %v1890 = vadd.f32 %v1649, %v1789
      %v1891 = vadd.f32 %v1650, %v1791
      %v1892 = vadd.f32 %v1651, %v1794
      %v1893 = vadd.f32 %v1652, %v1796
      %v1894 = vadd.f32 %v1653, %v1799
      %v1895 = vadd.f32 %v1654, %v1801
      %v1896 = vadd.f32 %v1655, %v1804
      %v1897 = vadd.f32 %v1656, %v1806
      %v1898 = vadd.f32 %v1657, %v1809
      %v1899 = vadd.f32 %v1658, %v1811
      %v1900 = vadd.f32 %v1659, %v1814
      %v1901 = vadd.f32 %v1660, %v1816
      %v1902 = vadd.f32 %v1661, %v1819
      %v1903 = vadd.f32 %v1662, %v1821
      %v1904 = vadd.f32 %v1663, %v1824
      %v1905 = vadd.f32 %v1664, %v1826
      %v1906 = vadd.f32 %v1665, %v1829
      %v1907 = vadd.f32 %v1666, %v1831
      %v1908 = vadd.f32 %v1667, %v1834
      %v1909 = vadd.f32 %v1668, %v1836
      %v1910 = vadd.f32 %v1669, %v1839
      %v1911 = vadd.f32 %v1670, %v1841
      %v1912 = vadd.f32 %v1671, %v1844
      %v1913 = vadd.f32 %v1672, %v1846
      %v1914 = vadd.f32 %v1673, %v1849
      %v1915 = vadd.f32 %v1674, %v1851
      %v1916 = vperm.slane %v513, 2
      %v1917 = vmul.f32 %v463, %v1916
      %v1918 = vmul.f32 %v464, %v1916
      %v1919 = vmul.f32 %v465, %v1916
      %v1920 = vmul.f32 %v466, %v1916
      %v1921 = vmul.f32 %v467, %v1916
      %v1922 = vmul.f32 %v468, %v1916
      %v1923 = vmul.f32 %v469, %v1916
      %v1924 = vmul.f32 %v470, %v1916
      %v1925 = vmul.f32 %v471, %v1916
      %v1926 = vmul.f32 %v472, %v1916
      %v1927 = vmul.f32 %v473, %v1916
      %v1928 = vmul.f32 %v474, %v1916
      %v1929 = vmul.f32 %v475, %v1916
      %v1930 = vmul.f32 %v476, %v1916
      %v1931 = vmul.f32 %v477, %v1916
      %v1932 = vmul.f32 %v478, %v1916
      %v1933 = vmul.f32 %v479, %v1916
      %v1934 = vmul.f32 %v480, %v1916
      %v1935 = vmul.f32 %v481, %v1916
      %v1936 = vmul.f32 %v482, %v1916
      %v1937 = vmul.f32 %v483, %v1916
      %v1938 = vmul.f32 %v484, %v1916
      %v1939 = vmul.f32 %v485, %v1916
      %v1940 = vmul.f32 %v486, %v1916
      %v1941 = vmul.f32 %v487, %v1916
      %v1942 = vmul.f32 %v488, %v1916
      %v1943 = vmul.f32 %v489, %v1916
      %v1944 = vmul.f32 %v490, %v1916
      %v1945 = vmul.f32 %v491, %v1916
      %v1946 = vmul.f32 %v492, %v1916
      %v1947 = vmul.f32 %v493, %v1916
      %v1948 = vmul.f32 %v494, %v1916
      %v1949 = vmul.f32 %v495, %v1916
      %v1950 = vmul.f32 %v496, %v1916
      %v1951 = vmul.f32 %v497, %v1916
      %v1952 = vmul.f32 %v498, %v1916
      %v1953 = vmul.f32 %v499, %v1916
      %v1954 = vmul.f32 %v500, %v1916
      %v1955 = vmul.f32 %v501, %v1916
      %v1956 = vmul.f32 %v502, %v1916
      %v1957 = vmul.f32 %v503, %v1916
      %v1958 = vmul.f32 %v504, %v1916
      %v1959 = vmul.f32 %v505, %v1916
      %v1960 = vmul.f32 %v506, %v1916
      %v1961 = vmul.f32 %v507, %v1916
      %v1962 = vmul.f32 %v508, %v1916
      %v1963 = vmul.f32 %v509, %v1916
      %v1964 = vmul.f32 %v510, %v1916
      %v2013 = vrot.slane %v1917, 2
      %v2014 = vrot.slane %v1918, 2
      %v2015 = vsel %vm918, %v2013, %v2014
      %v2016 = vrot.slane %v1919, 2
      %v2017 = vsel %vm918, %v2014, %v2016
      %v2018 = vrot.slane %v1920, 2
      %v2019 = vrot.slane %v1921, 2
      %v2020 = vsel %vm918, %v2018, %v2019
      %v2021 = vrot.slane %v1922, 2
      %v2022 = vsel %vm918, %v2019, %v2021
      %v2023 = vrot.slane %v1923, 2
      %v2024 = vrot.slane %v1924, 2
      %v2025 = vsel %vm918, %v2023, %v2024
      %v2026 = vrot.slane %v1925, 2
      %v2027 = vsel %vm918, %v2024, %v2026
      %v2028 = vrot.slane %v1926, 2
      %v2029 = vrot.slane %v1927, 2
      %v2030 = vsel %vm918, %v2028, %v2029
      %v2031 = vrot.slane %v1928, 2
      %v2032 = vsel %vm918, %v2029, %v2031
      %v2033 = vrot.slane %v1929, 2
      %v2034 = vrot.slane %v1930, 2
      %v2035 = vsel %vm918, %v2033, %v2034
      %v2036 = vrot.slane %v1931, 2
      %v2037 = vsel %vm918, %v2034, %v2036
      %v2038 = vrot.slane %v1932, 2
      %v2039 = vrot.slane %v1933, 2
      %v2040 = vsel %vm918, %v2038, %v2039
      %v2041 = vrot.slane %v1934, 2
      %v2042 = vsel %vm918, %v2039, %v2041
      %v2043 = vrot.slane %v1935, 2
      %v2044 = vrot.slane %v1936, 2
      %v2045 = vsel %vm918, %v2043, %v2044
      %v2046 = vrot.slane %v1937, 2
      %v2047 = vsel %vm918, %v2044, %v2046
      %v2048 = vrot.slane %v1938, 2
      %v2049 = vrot.slane %v1939, 2
      %v2050 = vsel %vm918, %v2048, %v2049
      %v2051 = vrot.slane %v1940, 2
      %v2052 = vsel %vm918, %v2049, %v2051
      %v2053 = vrot.slane %v1941, 2
      %v2054 = vrot.slane %v1942, 2
      %v2055 = vsel %vm918, %v2053, %v2054
      %v2056 = vrot.slane %v1943, 2
      %v2057 = vsel %vm918, %v2054, %v2056
      %v2058 = vrot.slane %v1944, 2
      %v2059 = vrot.slane %v1945, 2
      %v2060 = vsel %vm918, %v2058, %v2059
      %v2061 = vrot.slane %v1946, 2
      %v2062 = vsel %vm918, %v2059, %v2061
      %v2063 = vrot.slane %v1947, 2
      %v2064 = vrot.slane %v1948, 2
      %v2065 = vsel %vm918, %v2063, %v2064
      %v2066 = vrot.slane %v1949, 2
      %v2067 = vsel %vm918, %v2064, %v2066
      %v2068 = vrot.slane %v1950, 2
      %v2069 = vrot.slane %v1951, 2
      %v2070 = vsel %vm918, %v2068, %v2069
      %v2071 = vrot.slane %v1952, 2
      %v2072 = vsel %vm918, %v2069, %v2071
      %v2073 = vrot.slane %v1953, 2
      %v2074 = vrot.slane %v1954, 2
      %v2075 = vsel %vm918, %v2073, %v2074
      %v2076 = vrot.slane %v1955, 2
      %v2077 = vsel %vm918, %v2074, %v2076
      %v2078 = vrot.slane %v1956, 2
      %v2079 = vrot.slane %v1957, 2
      %v2080 = vsel %vm918, %v2078, %v2079
      %v2081 = vrot.slane %v1958, 2
      %v2082 = vsel %vm918, %v2079, %v2081
      %v2083 = vrot.slane %v1959, 2
      %v2084 = vrot.slane %v1960, 2
      %v2085 = vsel %vm918, %v2083, %v2084
      %v2086 = vrot.slane %v1961, 2
      %v2087 = vsel %vm918, %v2084, %v2086
      %v2088 = vrot.slane %v1962, 2
      %v2089 = vrot.slane %v1963, 2
      %v2090 = vsel %vm918, %v2088, %v2089
      %v2091 = vrot.slane %v1964, 2
      %v2092 = vsel %vm918, %v2089, %v2091
      %v2125 = vadd.f32 %v1884, %v2015
      %v2126 = vadd.f32 %v1885, %v2017
      %v2127 = vadd.f32 %v1886, %v2020
      %v2128 = vadd.f32 %v1887, %v2022
      %v2129 = vadd.f32 %v1888, %v2025
      %v2130 = vadd.f32 %v1889, %v2027
      %v2131 = vadd.f32 %v1890, %v2030
      %v2132 = vadd.f32 %v1891, %v2032
      %v2133 = vadd.f32 %v1892, %v2035
      %v2134 = vadd.f32 %v1893, %v2037
      %v2135 = vadd.f32 %v1894, %v2040
      %v2136 = vadd.f32 %v1895, %v2042
      %v2137 = vadd.f32 %v1896, %v2045
      %v2138 = vadd.f32 %v1897, %v2047
      %v2139 = vadd.f32 %v1898, %v2050
      %v2140 = vadd.f32 %v1899, %v2052
      %v2141 = vadd.f32 %v1900, %v2055
      %v2142 = vadd.f32 %v1901, %v2057
      %v2143 = vadd.f32 %v1902, %v2060
      %v2144 = vadd.f32 %v1903, %v2062
      %v2145 = vadd.f32 %v1904, %v2065
      %v2146 = vadd.f32 %v1905, %v2067
      %v2147 = vadd.f32 %v1906, %v2070
      %v2148 = vadd.f32 %v1907, %v2072
      %v2149 = vadd.f32 %v1908, %v2075
      %v2150 = vadd.f32 %v1909, %v2077
      %v2151 = vadd.f32 %v1910, %v2080
      %v2152 = vadd.f32 %v1911, %v2082
      %v2153 = vadd.f32 %v1912, %v2085
      %v2154 = vadd.f32 %v1913, %v2087
      %v2155 = vadd.f32 %v1914, %v2090
      %v2156 = vadd.f32 %v1915, %v2092
      %v2157 = vld [vmem:[%s2] sm:$0xff]
      %v2159 = vsel %vm368, %v2125, 0
      %v2162 = vsel %vm368, %v2126, 0
      %v2165 = vsel %vm368, %v2127, 0
      %v2168 = vsel %vm368, %v2128, 0
      %v2171 = vsel %vm368, %v2129, 0
      %v2174 = vsel %vm368, %v2130, 0
      %v2177 = vsel %vm368, %v2131, 0
      %v2180 = vsel %vm368, %v2132, 0
      %v2183 = vsel %vm368, %v2133, 0
      %v2186 = vsel %vm368, %v2134, 0
      %v2189 = vsel %vm368, %v2135, 0
      %v2192 = vsel %vm368, %v2136, 0
      %v2195 = vsel %vm368, %v2137, 0
      %v2198 = vsel %vm368, %v2138, 0
      %v2201 = vsel %vm368, %v2139, 0
      %v2204 = vsel %vm368, %v2140, 0
      %v2207 = vsel %vm368, %v2141, 0
      %v2210 = vsel %vm368, %v2142, 0
      %v2213 = vsel %vm368, %v2143, 0
      %v2216 = vsel %vm368, %v2144, 0
      %v2219 = vsel %vm368, %v2145, 0
      %v2222 = vsel %vm368, %v2146, 0
      %v2225 = vsel %vm368, %v2147, 0
      %v2228 = vsel %vm368, %v2148, 0
      %v2231 = vsel %vm368, %v2149, 0
      %v2234 = vsel %vm368, %v2150, 0
      %v2237 = vsel %vm368, %v2151, 0
      %v2240 = vsel %vm368, %v2152, 0
      %v2243 = vsel %vm368, %v2153, 0
      %v2246 = vsel %vm368, %v2154, 0
      %v2249 = vsel %vm368, %v2155, 0
      %v2252 = vsel %vm368, %v2156, 0
      %2254 = vmatpush.msra.mxu0 0.0
      %2255 = vmatpush.msra.mxu0 0.0
      %2256 = vmatpush.msra.mxu0 0.0
      %2257 = vmatpush.msra.mxu0 0.0
      %2258 = vmatpush.msra.mxu0 0.0
      %2259 = vmatpush.msra.mxu0 0.0
      %2260 = vmatpush.msra.mxu0 0.0
      %2261 = vmatpush.msra.mxu0 0.0
      %2262 = vmatpush.msra.mxu0 0.0
      %2263 = vmatpush.msra.mxu0 0.0
      %2264 = vmatpush.msra.mxu0 0.0
      %2265 = vmatpush.msra.mxu0 0.0
      %2266 = vmatpush.msra.mxu0 0.0
      %2267 = vmatpush.msra.mxu0 0.0
      %2268 = vmatpush.msra.mxu0 0.0
      %2269 = vmatpush.msra.mxu0 %v2157
      %2270 = vmatmul.f32.gmra.mxu0 %v2159
      %v2271 = vpop.f32.mrf.mxu0
      %v2272 = vadd.f32 0.0, %v2271
      %2273 = vmatmul.f32.gmra.mxu0 %v2162
      %v2274 = vpop.f32.mrf.mxu0
      %v2275 = vadd.f32 0.0, %v2274
      %2276 = vmatmul.f32.gmra.mxu0 %v2165
      %v2277 = vpop.f32.mrf.mxu0
      %v2278 = vadd.f32 0.0, %v2277
      %2279 = vmatmul.f32.gmra.mxu0 %v2168
      %v2280 = vpop.f32.mrf.mxu0
      %v2281 = vadd.f32 0.0, %v2280
      %2282 = vmatmul.f32.gmra.mxu0 %v2171
      %v2283 = vpop.f32.mrf.mxu0
      %v2284 = vadd.f32 0.0, %v2283
      %2285 = vmatmul.f32.gmra.mxu0 %v2174
      %v2286 = vpop.f32.mrf.mxu0
      %v2287 = vadd.f32 0.0, %v2286
      %2288 = vmatmul.f32.gmra.mxu0 %v2177
      %v2289 = vpop.f32.mrf.mxu0
      %v2290 = vadd.f32 0.0, %v2289
      %2291 = vmatmul.f32.gmra.mxu0 %v2180
      %v2292 = vpop.f32.mrf.mxu0
      %v2293 = vadd.f32 0.0, %v2292
      %2294 = vmatmul.f32.gmra.mxu0 %v2183
      %v2295 = vpop.f32.mrf.mxu0
      %v2296 = vadd.f32 0.0, %v2295
      %2297 = vmatmul.f32.gmra.mxu0 %v2186
      %v2298 = vpop.f32.mrf.mxu0
      %v2299 = vadd.f32 0.0, %v2298
      %2300 = vmatmul.f32.gmra.mxu0 %v2189
      %v2301 = vpop.f32.mrf.mxu0
      %v2302 = vadd.f32 0.0, %v2301
      %2303 = vmatmul.f32.gmra.mxu0 %v2192
      %v2304 = vpop.f32.mrf.mxu0
      %v2305 = vadd.f32 0.0, %v2304
      %2306 = vmatmul.f32.gmra.mxu0 %v2195
      %v2307 = vpop.f32.mrf.mxu0
      %v2308 = vadd.f32 0.0, %v2307
      %2309 = vmatmul.f32.gmra.mxu0 %v2198
      %v2310 = vpop.f32.mrf.mxu0
      %v2311 = vadd.f32 0.0, %v2310
      %2312 = vmatmul.f32.gmra.mxu0 %v2201
      %v2313 = vpop.f32.mrf.mxu0
      %v2314 = vadd.f32 0.0, %v2313
      %2315 = vmatmul.f32.gmra.mxu0 %v2204
      %v2316 = vpop.f32.mrf.mxu0
      %v2317 = vadd.f32 0.0, %v2316
      %2318 = vmatmul.f32.gmra.mxu0 %v2207
      %v2319 = vpop.f32.mrf.mxu0
      %v2320 = vadd.f32 0.0, %v2319
      %2321 = vmatmul.f32.gmra.mxu0 %v2210
      %v2322 = vpop.f32.mrf.mxu0
      %v2323 = vadd.f32 0.0, %v2322
      %2324 = vmatmul.f32.gmra.mxu0 %v2213
      %v2325 = vpop.f32.mrf.mxu0
      %v2326 = vadd.f32 0.0, %v2325
      %2327 = vmatmul.f32.gmra.mxu0 %v2216
      %v2328 = vpop.f32.mrf.mxu0
      %v2329 = vadd.f32 0.0, %v2328
      %2330 = vmatmul.f32.gmra.mxu0 %v2219
      %v2331 = vpop.f32.mrf.mxu0
      %v2332 = vadd.f32 0.0, %v2331
      %2333 = vmatmul.f32.gmra.mxu0 %v2222
      %v2334 = vpop.f32.mrf.mxu0
      %v2335 = vadd.f32 0.0, %v2334
      %2336 = vmatmul.f32.gmra.mxu0 %v2225
      %v2337 = vpop.f32.mrf.mxu0
      %v2338 = vadd.f32 0.0, %v2337
      %2339 = vmatmul.f32.gmra.mxu0 %v2228
      %v2340 = vpop.f32.mrf.mxu0
      %v2341 = vadd.f32 0.0, %v2340
      %2342 = vmatmul.f32.gmra.mxu0 %v2231
      %v2343 = vpop.f32.mrf.mxu0
      %v2344 = vadd.f32 0.0, %v2343
      %2345 = vmatmul.f32.gmra.mxu0 %v2234
      %v2346 = vpop.f32.mrf.mxu0
      %v2347 = vadd.f32 0.0, %v2346
      %2348 = vmatmul.f32.gmra.mxu0 %v2237
      %v2349 = vpop.f32.mrf.mxu0
      %v2350 = vadd.f32 0.0, %v2349
      %2351 = vmatmul.f32.gmra.mxu0 %v2240
      %v2352 = vpop.f32.mrf.mxu0
      %v2353 = vadd.f32 0.0, %v2352
      %2354 = vmatmul.f32.gmra.mxu0 %v2243
      %v2355 = vpop.f32.mrf.mxu0
      %v2356 = vadd.f32 0.0, %v2355
      %2357 = vmatmul.f32.gmra.mxu0 %v2246
      %v2358 = vpop.f32.mrf.mxu0
      %v2359 = vadd.f32 0.0, %v2358
      %2360 = vmatmul.f32.gmra.mxu0 %v2249
      %v2361 = vpop.f32.mrf.mxu0
      %v2362 = vadd.f32 0.0, %v2361
      %2363 = vmatmul.f32.gmra.mxu0 %v2252
      %v2364 = vpop.f32.mrf.mxu0
      %v2365 = vadd.f32 0.0, %v2364
      %2366 = vdwg.mxu0
      %2367 = vst.msk [vmem:[%s231] sm:$0xff] %vm368, %v2272
      %2368 = vst.msk [vmem:[%s231 + $0x8] sm:$0xff] %vm368, %v2275
      %2369 = vst.msk [vmem:[%s231 + $0x10] sm:$0xff] %vm368, %v2278
      %2370 = vst.msk [vmem:[%s231 + $0x18] sm:$0xff] %vm368, %v2281
      %2371 = vst.msk [vmem:[%s231 + $0x20] sm:$0xff] %vm368, %v2284
      %2372 = vst.msk [vmem:[%s231 + $0x28] sm:$0xff] %vm368, %v2287
      %2373 = vst.msk [vmem:[%s231 + $0x30] sm:$0xff] %vm368, %v2290
      %2374 = vst.msk [vmem:[%s231 + $0x38] sm:$0xff] %vm368, %v2293
      %2375 = vst.msk [vmem:[%s231 + $0x40] sm:$0xff] %vm368, %v2296
      %2376 = vst.msk [vmem:[%s231 + $0x48] sm:$0xff] %vm368, %v2299
      %2377 = vst.msk [vmem:[%s231 + $0x50] sm:$0xff] %vm368, %v2302
      %2378 = vst.msk [vmem:[%s231 + $0x58] sm:$0xff] %vm368, %v2305
      %2379 = vst.msk [vmem:[%s231 + $0x60] sm:$0xff] %vm368, %v2308
      %2380 = vst.msk [vmem:[%s231 + $0x68] sm:$0xff] %vm368, %v2311
      %2381 = vst.msk [vmem:[%s231 + $0x70] sm:$0xff] %vm368, %v2314
      %2382 = vst.msk [vmem:[%s231 + $0x78] sm:$0xff] %vm368, %v2317
      %2383 = vst.msk [vmem:[%s231 + $0x80] sm:$0xff] %vm368, %v2320
      %2384 = vst.msk [vmem:[%s231 + $0x88] sm:$0xff] %vm368, %v2323
      %2385 = vst.msk [vmem:[%s231 + $0x90] sm:$0xff] %vm368, %v2326
      %2386 = vst.msk [vmem:[%s231 + $0x98] sm:$0xff] %vm368, %v2329
      %2387 = vst.msk [vmem:[%s231 + $0xa0] sm:$0xff] %vm368, %v2332
      %2388 = vst.msk [vmem:[%s231 + $0xa8] sm:$0xff] %vm368, %v2335
      %2389 = vst.msk [vmem:[%s231 + $0xb0] sm:$0xff] %vm368, %v2338
      %2390 = vst.msk [vmem:[%s231 + $0xb8] sm:$0xff] %vm368, %v2341
      %2391 = vst.msk [vmem:[%s231 + $0xc0] sm:$0xff] %vm368, %v2344
      %2392 = vst.msk [vmem:[%s231 + $0xc8] sm:$0xff] %vm368, %v2347
      %2393 = vst.msk [vmem:[%s231 + $0xd0] sm:$0xff] %vm368, %v2350
      %2394 = vst.msk [vmem:[%s231 + $0xd8] sm:$0xff] %vm368, %v2353
      %2395 = vst.msk [vmem:[%s231 + $0xe0] sm:$0xff] %vm368, %v2356
      %2396 = vst.msk [vmem:[%s231 + $0xe8] sm:$0xff] %vm368, %v2359
      %2397 = vst.msk [vmem:[%s231 + $0xf0] sm:$0xff] %vm368, %v2362
      %2398 = vst.msk [vmem:[%s231 + $0xf8] sm:$0xff] %vm368, %v2365
      %v2399 = vsel %vm368, %v2272, 0.0
      %v2400 = vsel %vm368, %v2275, 0.0
      %v2401 = vadd.f32 %v2399, %v2400
      %v2402 = vsel %vm368, %v2278, 0.0
      %v2403 = vadd.f32 %v2401, %v2402
      %v2404 = vsel %vm368, %v2281, 0.0
      %v2405 = vadd.f32 %v2403, %v2404
      %v2406 = vsel %vm368, %v2284, 0.0
      %v2407 = vadd.f32 %v2405, %v2406
      %v2408 = vsel %vm368, %v2287, 0.0
      %v2409 = vadd.f32 %v2407, %v2408
      %v2410 = vsel %vm368, %v2290, 0.0
      %v2411 = vadd.f32 %v2409, %v2410
      %v2412 = vsel %vm368, %v2293, 0.0
      %v2413 = vadd.f32 %v2411, %v2412
      %v2414 = vsel %vm368, %v2296, 0.0
      %v2415 = vadd.f32 %v2413, %v2414
      %v2416 = vsel %vm368, %v2299, 0.0
      %v2417 = vadd.f32 %v2415, %v2416
      %v2418 = vsel %vm368, %v2302, 0.0
      %v2419 = vadd.f32 %v2417, %v2418
      %v2420 = vsel %vm368, %v2305, 0.0
      %v2421 = vadd.f32 %v2419, %v2420
      %v2422 = vsel %vm368, %v2308, 0.0
      %v2423 = vadd.f32 %v2421, %v2422
      %v2424 = vsel %vm368, %v2311, 0.0
      %v2425 = vadd.f32 %v2423, %v2424
      %v2426 = vsel %vm368, %v2314, 0.0
      %v2427 = vadd.f32 %v2425, %v2426
      %v2428 = vsel %vm368, %v2317, 0.0
      %v2429 = vadd.f32 %v2427, %v2428
      %v2430 = vsel %vm368, %v2320, 0.0
      %v2431 = vadd.f32 %v2429, %v2430
      %v2432 = vsel %vm368, %v2323, 0.0
      %v2433 = vadd.f32 %v2431, %v2432
      %v2434 = vsel %vm368, %v2326, 0.0
      %v2435 = vadd.f32 %v2433, %v2434
      %v2436 = vsel %vm368, %v2329, 0.0
      %v2437 = vadd.f32 %v2435, %v2436
      %v2438 = vsel %vm368, %v2332, 0.0
      %v2439 = vadd.f32 %v2437, %v2438
      %v2440 = vsel %vm368, %v2335, 0.0
      %v2441 = vadd.f32 %v2439, %v2440
      %v2442 = vsel %vm368, %v2338, 0.0
      %v2443 = vadd.f32 %v2441, %v2442
      %v2444 = vsel %vm368, %v2341, 0.0
      %v2445 = vadd.f32 %v2443, %v2444
      %v2446 = vsel %vm368, %v2344, 0.0
      %v2447 = vadd.f32 %v2445, %v2446
      %v2448 = vsel %vm368, %v2347, 0.0
      %v2449 = vadd.f32 %v2447, %v2448
      %v2450 = vsel %vm368, %v2350, 0.0
      %v2451 = vadd.f32 %v2449, %v2450
      %v2452 = vsel %vm368, %v2353, 0.0
      %v2453 = vadd.f32 %v2451, %v2452
      %v2454 = vsel %vm368, %v2356, 0.0
      %v2455 = vadd.f32 %v2453, %v2454
      %v2456 = vsel %vm368, %v2359, 0.0
      %v2457 = vadd.f32 %v2455, %v2456
      %v2458 = vsel %vm368, %v2362, 0.0
      %v2459 = vadd.f32 %v2457, %v2458
      %v2460 = vsel %vm368, %v2365, 0.0
      %v2461 = vadd.f32 %v2459, %v2460
      %v2462 = vrot.slane %v2461, 4
      %v2463 = vadd.f32 %v2461, %v2462
      %v2464 = vrot.slane %v2463, 2
      %v2465 = vadd.f32 %v2463, %v2464
      %v2466 = vrot.slane %v2465, 1
      %v2467 = vadd.f32 %v2465, %v2466
      %vm2468 = vcmask 57344
      %2469 = vst.msk [vmem:[%s235] sm:$0x1] %vm2468, %v2467
      %v2470 = vmul.f32 %v2272, %v2272
      %v2471 = vmul.f32 %v2275, %v2275
      %v2472 = vmul.f32 %v2278, %v2278
      %v2473 = vmul.f32 %v2281, %v2281
      %v2474 = vmul.f32 %v2284, %v2284
      %v2475 = vmul.f32 %v2287, %v2287
      %v2476 = vmul.f32 %v2290, %v2290
      %v2477 = vmul.f32 %v2293, %v2293
      %v2478 = vmul.f32 %v2296, %v2296
      %v2479 = vmul.f32 %v2299, %v2299
      %v2480 = vmul.f32 %v2302, %v2302
      %v2481 = vmul.f32 %v2305, %v2305
      %v2482 = vmul.f32 %v2308, %v2308
      %v2483 = vmul.f32 %v2311, %v2311
      %v2484 = vmul.f32 %v2314, %v2314
      %v2485 = vmul.f32 %v2317, %v2317
      %v2486 = vmul.f32 %v2320, %v2320
      %v2487 = vmul.f32 %v2323, %v2323
      %v2488 = vmul.f32 %v2326, %v2326
      %v2489 = vmul.f32 %v2329, %v2329
      %v2490 = vmul.f32 %v2332, %v2332
      %v2491 = vmul.f32 %v2335, %v2335
      %v2492 = vmul.f32 %v2338, %v2338
      %v2493 = vmul.f32 %v2341, %v2341
      %v2494 = vmul.f32 %v2344, %v2344
      %v2495 = vmul.f32 %v2347, %v2347
      %v2496 = vmul.f32 %v2350, %v2350
      %v2497 = vmul.f32 %v2353, %v2353
      %v2498 = vmul.f32 %v2356, %v2356
      %v2499 = vmul.f32 %v2359, %v2359
      %v2500 = vmul.f32 %v2362, %v2362
      %v2501 = vmul.f32 %v2365, %v2365
      %v2502 = vsel %vm368, %v2470, 0.0
      %v2503 = vsel %vm368, %v2471, 0.0
      %v2504 = vadd.f32 %v2502, %v2503
      %v2505 = vsel %vm368, %v2472, 0.0
      %v2506 = vadd.f32 %v2504, %v2505
      %v2507 = vsel %vm368, %v2473, 0.0
      %v2508 = vadd.f32 %v2506, %v2507
      %v2509 = vsel %vm368, %v2474, 0.0
      %v2510 = vadd.f32 %v2508, %v2509
      %v2511 = vsel %vm368, %v2475, 0.0
      %v2512 = vadd.f32 %v2510, %v2511
      %v2513 = vsel %vm368, %v2476, 0.0
      %v2514 = vadd.f32 %v2512, %v2513
      %v2515 = vsel %vm368, %v2477, 0.0
      %v2516 = vadd.f32 %v2514, %v2515
      %v2517 = vsel %vm368, %v2478, 0.0
      %v2518 = vadd.f32 %v2516, %v2517
      %v2519 = vsel %vm368, %v2479, 0.0
      %v2520 = vadd.f32 %v2518, %v2519
      %v2521 = vsel %vm368, %v2480, 0.0
      %v2522 = vadd.f32 %v2520, %v2521
      %v2523 = vsel %vm368, %v2481, 0.0
      %v2524 = vadd.f32 %v2522, %v2523
      %v2525 = vsel %vm368, %v2482, 0.0
      %v2526 = vadd.f32 %v2524, %v2525
      %v2527 = vsel %vm368, %v2483, 0.0
      %v2528 = vadd.f32 %v2526, %v2527
      %v2529 = vsel %vm368, %v2484, 0.0
      %v2530 = vadd.f32 %v2528, %v2529
      %v2531 = vsel %vm368, %v2485, 0.0
      %v2532 = vadd.f32 %v2530, %v2531
      %v2533 = vsel %vm368, %v2486, 0.0
      %v2534 = vadd.f32 %v2532, %v2533
      %v2535 = vsel %vm368, %v2487, 0.0
      %v2536 = vadd.f32 %v2534, %v2535
      %v2537 = vsel %vm368, %v2488, 0.0
      %v2538 = vadd.f32 %v2536, %v2537
      %v2539 = vsel %vm368, %v2489, 0.0
      %v2540 = vadd.f32 %v2538, %v2539
      %v2541 = vsel %vm368, %v2490, 0.0
      %v2542 = vadd.f32 %v2540, %v2541
      %v2543 = vsel %vm368, %v2491, 0.0
      %v2544 = vadd.f32 %v2542, %v2543
      %v2545 = vsel %vm368, %v2492, 0.0
      %v2546 = vadd.f32 %v2544, %v2545
      %v2547 = vsel %vm368, %v2493, 0.0
      %v2548 = vadd.f32 %v2546, %v2547
      %v2549 = vsel %vm368, %v2494, 0.0
      %v2550 = vadd.f32 %v2548, %v2549
      %v2551 = vsel %vm368, %v2495, 0.0
      %v2552 = vadd.f32 %v2550, %v2551
      %v2553 = vsel %vm368, %v2496, 0.0
      %v2554 = vadd.f32 %v2552, %v2553
      %v2555 = vsel %vm368, %v2497, 0.0
      %v2556 = vadd.f32 %v2554, %v2555
      %v2557 = vsel %vm368, %v2498, 0.0
      %v2558 = vadd.f32 %v2556, %v2557
      %v2559 = vsel %vm368, %v2499, 0.0
      %v2560 = vadd.f32 %v2558, %v2559
      %v2561 = vsel %vm368, %v2500, 0.0
      %v2562 = vadd.f32 %v2560, %v2561
      %v2563 = vsel %vm368, %v2501, 0.0
      %v2564 = vadd.f32 %v2562, %v2563
      %v2565 = vrot.slane %v2564, 4
      %v2566 = vadd.f32 %v2564, %v2565
      %v2567 = vrot.slane %v2566, 2
      %v2568 = vadd.f32 %v2566, %v2567
      %v2569 = vrot.slane %v2568, 1
      %v2570 = vadd.f32 %v2568, %v2569
      %2571 = vst.msk [vmem:[%s235 + $0x1] sm:$0x1] %vm2468, %v2570
      %p2572 = scmp.lt.s32.totalorder %s17, 1
      %s2573 = scalar_select %p2572, %s17, 1
      %s2574 = smul.addr %s2573, 32
      %s2575 = smul.addr %s2574, 8
      %s2576 = scalar_lea.vmem %s4, %s2575
      %p2577 = scmp.lt.s32.totalorder %s17, 1
      %s2578 = scalar_select %p2577, %s17, 1
      %s2579 = smul.addr %s2578, 2
      %s2580 = scalar_lea.vmem %s5, %s2579
      // Predicated region
      $region37: #{sep_conv_forward.4} parent=35 // pred_check
        %p2581 = pneg %p124
      $region38: #{sep_conv_forward.4} parent=35 // pred_check_branch
        %2583 = sbr.rel (%p2581) target = $region40
      $region39: #{sep_conv_forward.4} parent=35 // pred_region
        _
      $region40: #{sep_conv_forward.4} parent=35 // pred_fallthru
        _
      // Predicated region
      $region41: #{sep_conv_forward.4} parent=35 // pred_check
        %p2584 = pneg %p150
      $region42: #{sep_conv_forward.4} parent=35 // pred_check_branch
        %2586 = sbr.rel (%p2584) target = $region44
      $region43: #{sep_conv_forward.4} parent=35 // pred_region
        _
      $region44: #{sep_conv_forward.4} parent=35 // pred_fallthru
        _
    $region36: #{sep_conv_forward.4} parent=5 // pred_fallthru
      _
    %p2587 = scmp.le.s32.totalorder 2, %s12
    // Predicated region
    $region45: #{sep_conv_forward.4} parent=5 // pred_check
      %p2588 = pneg %p2587
    $region46: #{sep_conv_forward.4} parent=5 // pred_check_branch
      %2590 = sbr.rel (%p2588) target = $region48
    $region47: #{sep_conv_forward.4} parent=5 // pred_region
      %s2591 = ssub.s32 %s12, 2
      // Predicated region
      $region49: #{sep_conv_forward.4} parent=47 // pred_check
        %p2592 = pneg %p130
      $region50: #{sep_conv_forward.4} parent=47 // pred_check_branch
        %2594 = sbr.rel (%p2592) target = $region52
      $region51: #{sep_conv_forward.4} parent=47 // pred_region
        %p2595 = scmp.lt.s32.totalorder %s18, 1
        %s2596 = scalar_select %p2595, %s18, 1
        %s2597 = smul.addr %s2596, 32
        %s2598 = smul.addr %s2597, 8
        %s2599 = scalar_lea.vmem %s4, %s2598
      $region52: #{sep_conv_forward.4} parent=47 // pred_fallthru
        _
      // Predicated region
      $region53: #{sep_conv_forward.4} parent=47 // pred_check
        %p2600 = pneg %p156
      $region54: #{sep_conv_forward.4} parent=47 // pred_check_branch
        %2602 = sbr.rel (%p2600) target = $region56
      $region55: #{sep_conv_forward.4} parent=47 // pred_region
        %p2603 = scmp.lt.s32.totalorder %s18, 1
        %s2604 = scalar_select %p2603, %s18, 1
        %s2605 = smul.addr %s2604, 2
        %s2606 = scalar_lea.vmem %s5, %s2605
      $region56: #{sep_conv_forward.4} parent=47 // pred_fallthru
        _
    $region48: #{sep_conv_forward.4} parent=5 // pred_fallthru
      _
  $region6: #{sep_conv_forward.4} parent=0 // loop_footer
    %s16 = sadd.s32 1, %s12
  $region7: #{sep_conv_forward.4} parent=0 // loop_footer_branch
    %11 = sbr.rel target = $region3
  $region8: #{sep_conv_forward.4} parent=0 // loop_exit
    _

</llo_original>
